<compile_context>
chip_gen: v5e
topology: v5e:2x2
jax: 0.10.0
libtpu: 0.0.40
codegen_flags: <defaults>
</compile_context>

<pallas_src>
import jax
import jax.numpy as jnp
from jax.experimental import pallas as pl
from jax.experimental.pallas import tpu as pltpu


def mlp_kernel(x_ref, w1_ref, b1_ref, w2_ref, b2_ref, o_ref):
    # x_ref : (N, K)        bf16      w1_ref: (K, hh)        bf16
    # b1_ref: (1, hh)       f32       w2_ref: (hh, pad_cls)  bf16
    # b2_ref: (1, pad_cls)  f32       o_ref : (N, pad_cls)   f32
    h = jnp.dot(x_ref[...], w1_ref[...], preferred_element_type=jnp.float32)
    h = jnp.maximum(h + b1_ref[...], 0.0)                      # bias + ReLU in f32 (VPU)
    y = jnp.dot(h.astype(w2_ref.dtype), w2_ref[...],
                preferred_element_type=jnp.float32)
    o_ref[...] = (y + b2_ref[...]).astype(o_ref.dtype)


def prepare_params(w1, b1, w2, b2, *, hidden_splits=1):
    """One-time weight preprocessing, hoisted out of the per-call path."""
    in_features, hidden = w1.shape
    out_classes = w2.shape[1]
    assert hidden % hidden_splits == 0

    pad_cls = ((out_classes + 127) // 128) * 128               # lane-dense output

    w1_bf = w1.astype(jnp.bfloat16)
    b1_r = b1.reshape(1, -1).astype(jnp.float32)
    w2_p = (jnp.zeros((hidden, pad_cls), jnp.float32)
            .at[:, :out_classes].set(w2)).astype(jnp.bfloat16)
    b2_p = jnp.zeros((1, pad_cls), jnp.float32).at[:, :out_classes].set(b2)
    if hidden_splits > 1:
        # Only hidden-split 0 carries b2 so the wrapper partial-sum counts it once.
        b2_p = jnp.zeros((hidden_splits, 1, pad_cls), jnp.float32).at[0].set(b2_p)

    return {
        "w1": w1_bf, "b1": b1_r, "w2": w2_p, "b2": b2_p,
        "hidden_splits": hidden_splits,
        "out_classes": out_classes, "pad_cls": pad_cls,
    }


def testnet_forward(x_nchw, params):
    n = x_nchw.shape[0]
    x_flat = x_nchw.reshape(n, -1).astype(jnp.bfloat16)        # nn.Flatten, bf16 MXU feed

    w1, b1, w2, b2 = params["w1"], params["b1"], params["w2"], params["b2"]
    hs = params["hidden_splits"]
    pad_cls = params["pad_cls"]
    out_classes = params["out_classes"]
    in_features, hidden = w1.shape
    assert x_flat.shape[1] == in_features
    hh = hidden // hs

    in_specs = [
        pl.BlockSpec((n, in_features), lambda h: (0, 0)),       # x, resident
        pl.BlockSpec((in_features, hh), lambda h: (0, h)),      # W1 (hidden split)
        pl.BlockSpec((1, hh), lambda h: (0, h)),                # b1 (hidden split)
        pl.BlockSpec((hh, pad_cls), lambda h: (h, 0)),          # W2 (hidden split)
    ]
    if hs == 1:
        in_specs.append(pl.BlockSpec((1, pad_cls), lambda h: (0, 0)))        # b2
        out_shape = jax.ShapeDtypeStruct((n, pad_cls), jnp.float32)
        out_spec = pl.BlockSpec((n, pad_cls), lambda h: (0, 0))
    else:
        in_specs.append(pl.BlockSpec((None, 1, pad_cls), lambda h: (h, 0, 0)))  # b2 per split
        out_shape = jax.ShapeDtypeStruct((hs, n, pad_cls), jnp.float32)
        out_spec = pl.BlockSpec((None, n, pad_cls), lambda h: (h, 0, 0))

    out = pl.pallas_call(
        mlp_kernel,
        out_shape=out_shape,
        grid=(hs,),
        in_specs=in_specs,
        out_specs=out_spec,
        compiler_params=pltpu.CompilerParams(
            dimension_semantics=("parallel",),                  # v7x: 2 TCs when hs=2
        ),
    )(x_flat, w1, b1, w2, b2)

    if hs > 1:
        out = out.sum(axis=0)                                   # combine hidden-split partials
    return out[:, :out_classes]                                 # drop class padding


def init_params(key, input_size=3 * 32 * 32, hidden=512, output_classes=100):
    # Deterministic init mimicking nn.Linear's U(-1/sqrt(fan_in), 1/sqrt(fan_in)).
    k1, k2, k3, k4 = jax.random.split(key, 4)
    bound1 = 1.0 / jnp.sqrt(input_size)
    bound2 = 1.0 / jnp.sqrt(hidden)
    # Stored as (in, out) — transpose of PyTorch's (out, in).
    w1 = jax.random.uniform(k1, (input_size, hidden), jnp.float32, -bound1, bound1)
    b1 = jax.random.uniform(k2, (hidden,), jnp.float32, -bound1, bound1)
    w2 = jax.random.uniform(k3, (hidden, output_classes), jnp.float32, -bound2, bound2)
    b2 = jax.random.uniform(k4, (output_classes,), jnp.float32, -bound2, bound2)
    return w1, b1, w2, b2


if __name__ == "__main__":
    key = jax.random.PRNGKey(0)
    kx, kp = jax.random.split(key)

    # Input consistent with the module default input_size = 3*32*32, small batch.
    x = jax.random.normal(kx, (2, 3, 32, 32), jnp.float32)
    w1, b1, w2, b2 = init_params(kp)

    # hidden_splits=1: best on single-TC v5e/v6e; set hidden_splits=2 on v7x.
    params = prepare_params(w1, b1, w2, b2, hidden_splits=1)

    out = jax.block_until_ready(testnet_forward(x, params))
    assert out.shape == (2, 100)

    # Reference matched to the kernel's bf16 matmul inputs / f32 accumulation.
    x_flat = x.reshape(x.shape[0], -1)
    h_ref = jnp.maximum(
        jnp.dot(x_flat.astype(jnp.bfloat16), w1.astype(jnp.bfloat16),
                preferred_element_type=jnp.float32) + b1, 0.0)
    ref_bf = jnp.dot(h_ref.astype(jnp.bfloat16), w2.astype(jnp.bfloat16),
                     preferred_element_type=jnp.float32) + b2
    assert jnp.allclose(out, ref_bf, atol=1e-2, rtol=1e-2), "mismatch vs bf16-matched reference"

    # Full-f32 PyTorch-semantics reference; loose tolerance covers the bf16 casts.
    ref_f32 = jnp.maximum(x_flat @ w1 + b1, 0.0) @ w2 + b2
    assert jnp.allclose(out, ref_f32, atol=5e-2, rtol=5e-2), "mismatch vs f32 reference"

    print("KERNEL_OK")
</pallas_src>

<mosaic_0001>
module attributes {stable_mosaic.version = 11 : i64} {
  func.func @mlp_kernel(%arg0: i32, %arg1: memref<2x3072xbf16, #tpu.memory_space<vmem>>, %arg2: memref<3072x512xbf16, #tpu.memory_space<vmem>>, %arg3: memref<1x512xf32, #tpu.memory_space<vmem>>, %arg4: memref<512x128xbf16, #tpu.memory_space<vmem>>, %arg5: memref<1x128xf32, #tpu.memory_space<vmem>>, %arg6: memref<2x128xf32, #tpu.memory_space<vmem>>) attributes {dimension_semantics = [#tpu.dimension_semantics<parallel>], iteration_bounds = array<i64: 1>, scalar_prefetch = 0 : i64, scratch_operands = 0 : i64, tpu.core_type = #tpu.core_type<tc>, window_params = [{pipeline_mode = #tpu.pipeline_mode<synchronous>, transform_indices = @transform_0, window_bounds = array<i64: 2, 3072>}, {transform_indices = @transform_1, window_bounds = array<i64: 3072, 512>}, {transform_indices = @transform_2, window_bounds = array<i64: 1, 512>}, {transform_indices = @transform_3, window_bounds = array<i64: 512, 128>}, {pipeline_mode = #tpu.pipeline_mode<synchronous>, transform_indices = @transform_4, window_bounds = array<i64: 1, 128>}, {pipeline_mode = #tpu.pipeline_mode<synchronous>, transform_indices = @transform_5, window_bounds = array<i64: 2, 128>}]} {
    %c0 = arith.constant 0 : index
    %c0_0 = arith.constant 0 : index
    %0 = vector.load %arg1[%c0, %c0_0] : memref<2x3072xbf16, #tpu.memory_space<vmem>>, vector<2x3072xbf16>
    %c0_1 = arith.constant 0 : index
    %c0_2 = arith.constant 0 : index
    %1 = vector.load %arg2[%c0_1, %c0_2] : memref<3072x512xbf16, #tpu.memory_space<vmem>>, vector<3072x512xbf16>
    %cst = arith.constant dense<0.000000e+00> : vector<2x512xf32>
    %2 = tpu.matmul %0, %1, %cst {dimension_numbers = #tpu.dot_dimension_numbers<[1], [0], [0], [1], [0, 0, 1, 1], [], []>} : vector<2x3072xbf16>, vector<3072x512xbf16>, vector<2x512xf32> -> vector<2x512xf32>
    %c0_3 = arith.constant 0 : index
    %c0_4 = arith.constant 0 : index
    %3 = vector.load %arg3[%c0_3, %c0_4] : memref<1x512xf32, #tpu.memory_space<vmem>>, vector<1x512xf32>
    %4 = vector.broadcast %3 : vector<1x512xf32> to vector<2x512xf32>
    %5 = arith.addf %2, %4 : vector<2x512xf32>
    %cst_5 = arith.constant 0.000000e+00 : f32
    %6 = vector.broadcast %cst_5 : f32 to vector<2x512xf32>
    %7 = arith.maximumf %5, %6 : vector<2x512xf32>
    %8 = arith.truncf %7 : vector<2x512xf32> to vector<2x512xbf16>
    %c0_6 = arith.constant 0 : index
    %c0_7 = arith.constant 0 : index
    %9 = vector.load %arg4[%c0_6, %c0_7] : memref<512x128xbf16, #tpu.memory_space<vmem>>, vector<512x128xbf16>
    %cst_8 = arith.constant dense<0.000000e+00> : vector<2x128xf32>
    %10 = tpu.matmul %8, %9, %cst_8 {dimension_numbers = #tpu.dot_dimension_numbers<[1], [0], [0], [1], [0, 0, 1, 1], [], []>} : vector<2x512xbf16>, vector<512x128xbf16>, vector<2x128xf32> -> vector<2x128xf32>
    %c0_9 = arith.constant 0 : index
    %c0_10 = arith.constant 0 : index
    %11 = vector.load %arg5[%c0_9, %c0_10] : memref<1x128xf32, #tpu.memory_space<vmem>>, vector<1x128xf32>
    %12 = vector.broadcast %11 : vector<1x128xf32> to vector<2x128xf32>
    %13 = arith.addf %10, %12 : vector<2x128xf32>
    %c0_11 = arith.constant 0 : index
    %c0_12 = arith.constant 0 : index
    %14 = vector.load %arg6[%c0_11, %c0_12] : memref<2x128xf32, #tpu.memory_space<vmem>>, vector<2x128xf32>
    tpu.vector_store %arg6[%c0_11, %c0_12], %13 {strides = array<i32>} : memref<2x128xf32, #tpu.memory_space<vmem>>, vector<2x128xf32>,
    return
  }
  func.func @transform_0(%arg0: i32) -> (i32, i32) {
    %c0_i32 = arith.constant 0 : i32
    %c0_i32_0 = arith.constant 0 : i32
    %c0_i32_1 = arith.constant 0 : i32
    return %c0_i32, %c0_i32_0 : i32, i32
  }
  func.func @transform_1(%arg0: i32) -> (i32, i32) {
    %c0_i32 = arith.constant 0 : i32
    %c0_i32_0 = arith.constant 0 : i32
    return %c0_i32, %arg0 : i32, i32
  }
  func.func @transform_2(%arg0: i32) -> (i32, i32) {
    %c0_i32 = arith.constant 0 : i32
    %c0_i32_0 = arith.constant 0 : i32
    return %c0_i32, %arg0 : i32, i32
  }
  func.func @transform_3(%arg0: i32) -> (i32, i32) {
    %c0_i32 = arith.constant 0 : i32
    %c0_i32_0 = arith.constant 0 : i32
    return %arg0, %c0_i32 : i32, i32
  }
  func.func @transform_4(%arg0: i32) -> (i32, i32) {
    %c0_i32 = arith.constant 0 : i32
    %c0_i32_0 = arith.constant 0 : i32
    %c0_i32_1 = arith.constant 0 : i32
    return %c0_i32, %c0_i32_0 : i32, i32
  }
  func.func @transform_5(%arg0: i32) -> (i32, i32) {
    %c0_i32 = arith.constant 0 : i32
    %c0_i32_0 = arith.constant 0 : i32
    %c0_i32_1 = arith.constant 0 : i32
    return %c0_i32, %c0_i32_0 : i32, i32
  }
}

</mosaic_0001>

<llo_original>
// kernel: tpu_custom_call.1
$region0: #{tpu_custom_call.1}
  #allocation0 [shape = 'u32[]', space=smem, size = 0x4, offset = 0x4, fixed_abs, tag = 'smem constant byte address 0x4 - core index']
  #allocation1 [shape = 'u32[72,128]{1,0:T(1,128)}', space=vmem, size = 0x9000, scoped, tag = 'internal scratch']
  %s0 = inlined_call_operand.hbm [shape: bf16[2,3072], index: 0, kind: input, shape index: {}]
  %s1 = inlined_call_operand.hbm [shape: bf16[3072,512], index: 1, kind: input, shape index: {}]
  %s2 = inlined_call_operand.hbm [shape: f32[1,512], index: 2, kind: input, shape index: {}]
  %s3 = inlined_call_operand.hbm [shape: bf16[512,128], index: 3, kind: input, shape index: {}]
  %s4 = inlined_call_operand.hbm [shape: f32[1,128], index: 4, kind: input, shape index: {}]
  %s5 = inlined_call_operand.hbm [shape: f32[2,128], index: 5, kind: output, shape index: {}]
  %s6 = sld [smem:[#allocation0]]
  $region50: #{tpu_custom_call.1} parent=0
    _
  %s8 = ssub.s32 1, %s6
  %s9 = scalar_select 0, %s8, %s6
  $region1: #{tpu_custom_call.1} parent=0
    #allocation2 [shape = 'u8[12288]{0}', space=vmem, size = 0x3000, scoped, tag = 'input window, operand 0, single buffered']
    #allocation3 [shape = 's32[1]{0}', space=sflag, size = 0x4, scoped, tag = 'scoped memory for tpu_custom_call.1']
    #allocation4 [shape = 's32[1]{0}', space=sflag, size = 0x4, scoped, tag = 'scoped memory for tpu_custom_call.1']
    #allocation5 [shape = 'u8[3145728]{0}', space=vmem, size = 0x300000, scoped, tag = 'input window, operand 1, single buffered']
    #allocation6 [shape = 's32[1]{0}', space=sflag, size = 0x4, scoped, tag = 'scoped memory for tpu_custom_call.1']
    #allocation7 [shape = 'u8[2048]{0}', space=vmem, size = 0x800, scoped, tag = 'input window, operand 2, single buffered']
    #allocation8 [shape = 'u8[131072]{0}', space=vmem, size = 0x20000, scoped, tag = 'input window, operand 3, single buffered']
    #allocation9 [shape = 's32[1]{0}', space=sflag, size = 0x4, scoped, tag = 'scoped memory for tpu_custom_call.1']
    #allocation10 [shape = 'u8[512]{0}', space=vmem, size = 0x400, scoped, tag = 'input window, operand 4, single buffered']
    #allocation11 [shape = 'u8[1024]{0}', space=vmem, size = 0x400, scoped, tag = 'output window, operand 0, single buffered']
    %10 = vsyncpa [#allocation3], 0
    %11 = vsyncpa [#allocation6], 0
    %12 = vsyncpa [#allocation9], 0
    %13 = vsyncpa [#allocation4], 0
    // Predicated region
    $region2: #{tpu_custom_call.1} parent=1 // pred_check
      _
    $region3: #{tpu_custom_call.1} parent=1 // pred_check_branch
      %15 = sbr.rel (0) target = $region5
    $region4: #{tpu_custom_call.1} parent=1 // pred_region
      %17 = vsyncadd [#allocation3], 0
      %s19 = sshll.u32 %s0, 4
      %s20 = int_to_ptr.hbm [resolvable:$true] %s19
      %s21 = sshll.u32 [#allocation2], 4
      %s22 = int_to_ptr.vmem [resolvable:$true] %s21
      %24 = dma.hbm_to_vmem [thread:$0]  %s20, 384, %s22, [#allocation3]
    $region5: #{tpu_custom_call.1} parent=1 // pred_fallthru
      _
    // Predicated region
    $region6: #{tpu_custom_call.1} parent=1 // pred_check
      _
    $region7: #{tpu_custom_call.1} parent=1 // pred_check_branch
      %26 = sbr.rel (0) target = $region9
    $region8: #{tpu_custom_call.1} parent=1 // pred_region
      %28 = vsyncadd [#allocation6], 0
      %s29 = sshll.u32 %s1, 4
      %s30 = int_to_ptr.hbm [resolvable:$true] %s29
      %s31 = sshll.u32 [#allocation5], 4
      %s32 = int_to_ptr.vmem [resolvable:$true] %s31
      %37 = dma.hbm_to_vmem [thread:$0]  %s30, 98304, %s32, [#allocation6], 256, 256, 16
    $region9: #{tpu_custom_call.1} parent=1 // pred_fallthru
      _
    // Predicated region
    $region10: #{tpu_custom_call.1} parent=1 // pred_check
      _
    $region11: #{tpu_custom_call.1} parent=1 // pred_check_branch
      %39 = sbr.rel (0) target = $region13
    $region12: #{tpu_custom_call.1} parent=1 // pred_region
      %41 = vsyncadd [#allocation6], 0
      %s43 = sshll.u32 %s2, 4
      %s44 = int_to_ptr.hbm [resolvable:$true] %s43
      %s45 = sshll.u32 [#allocation7], 4
      %s46 = int_to_ptr.vmem [resolvable:$true] %s45
      %48 = dma.hbm_to_vmem [thread:$0]  %s44, 64, %s46, [#allocation6]
    $region13: #{tpu_custom_call.1} parent=1 // pred_fallthru
      _
    // Predicated region
    $region14: #{tpu_custom_call.1} parent=1 // pred_check
      _
    $region15: #{tpu_custom_call.1} parent=1 // pred_check_branch
      %50 = sbr.rel (0) target = $region17
    $region16: #{tpu_custom_call.1} parent=1 // pred_region
      %52 = vsyncadd [#allocation9], 0
      %s53 = sshll.u32 %s3, 4
      %s54 = int_to_ptr.hbm [resolvable:$true] %s53
      %s55 = sshll.u32 [#allocation8], 4
      %s56 = int_to_ptr.vmem [resolvable:$true] %s55
      %61 = dma.hbm_to_vmem [thread:$0]  %s54, 4096, %s56, [#allocation9], 64, 64, 4
    $region17: #{tpu_custom_call.1} parent=1 // pred_fallthru
      _
    // Predicated region
    $region18: #{tpu_custom_call.1} parent=1 // pred_check
      _
    $region19: #{tpu_custom_call.1} parent=1 // pred_check_branch
      %63 = sbr.rel (0) target = $region21
    $region20: #{tpu_custom_call.1} parent=1 // pred_region
      %65 = vsyncadd [#allocation9], 0
      %s67 = sshll.u32 %s4, 4
      %s68 = int_to_ptr.hbm [resolvable:$true] %s67
      %s69 = sshll.u32 [#allocation10], 4
      %s70 = int_to_ptr.vmem [resolvable:$true] %s69
      %72 = dma.hbm_to_vmem [thread:$0]  %s68, 16, %s70, [#allocation9]
    $region21: #{tpu_custom_call.1} parent=1 // pred_fallthru
      _
    // Predicated region
    $region22: #{tpu_custom_call.1} parent=1 // pred_check
      _
    $region23: #{tpu_custom_call.1} parent=1 // pred_check_branch
      %74 = sbr.rel (0) target = $region25
    $region24: #{tpu_custom_call.1} parent=1 // pred_region
      %76 = dma.done [#allocation3], 384
    $region25: #{tpu_custom_call.1} parent=1 // pred_fallthru
      _
    // Predicated region
    $region26: #{tpu_custom_call.1} parent=1 // pred_check
      _
    $region27: #{tpu_custom_call.1} parent=1 // pred_check_branch
      %78 = sbr.rel (0) target = $region29
    $region28: #{tpu_custom_call.1} parent=1 // pred_region
      %80 = dma.done [#allocation6], 98304
    $region29: #{tpu_custom_call.1} parent=1 // pred_fallthru
      _
    // Predicated region
    $region30: #{tpu_custom_call.1} parent=1 // pred_check
      _
    $region31: #{tpu_custom_call.1} parent=1 // pred_check_branch
      %82 = sbr.rel (0) target = $region33
    $region32: #{tpu_custom_call.1} parent=1 // pred_region
      %84 = dma.done [#allocation6], 64
    $region33: #{tpu_custom_call.1} parent=1 // pred_fallthru
      _
    // Predicated region
    $region34: #{tpu_custom_call.1} parent=1 // pred_check
      _
    $region35: #{tpu_custom_call.1} parent=1 // pred_check_branch
      %86 = sbr.rel (0) target = $region37
    $region36: #{tpu_custom_call.1} parent=1 // pred_region
      %88 = dma.done [#allocation9], 4096
    $region37: #{tpu_custom_call.1} parent=1 // pred_fallthru
      _
    // Predicated region
    $region38: #{tpu_custom_call.1} parent=1 // pred_check
      _
    $region39: #{tpu_custom_call.1} parent=1 // pred_check_branch
      %90 = sbr.rel (0) target = $region41
    $region40: #{tpu_custom_call.1} parent=1 // pred_region
      %92 = dma.done [#allocation9], 16
    $region41: #{tpu_custom_call.1} parent=1 // pred_fallthru
      _
    %v93 = vld [vmem:[#allocation2] sm:$0xff]
    %v94 = vld [vmem:[#allocation2 + $0x8] sm:$0xff]
    %v95 = vld [vmem:[#allocation2 + $0x10] sm:$0xff]
    %v96 = vld [vmem:[#allocation5] sm:$0xff]
    %v97 = vld [vmem:[#allocation5 + $0x8] sm:$0xff]
    %v98 = vld [vmem:[#allocation5 + $0x10] sm:$0xff]
    %v99 = vld [vmem:[#allocation5 + $0x18] sm:$0xff]
    %v100 = vld [vmem:[#allocation5 + $0x20] sm:$0xff]
    %v101 = vld [vmem:[#allocation5 + $0x28] sm:$0xff]
    %v102 = vld [vmem:[#allocation5 + $0x30] sm:$0xff]
    %v103 = vld [vmem:[#allocation5 + $0x38] sm:$0xff]
    %v104 = vld [vmem:[#allocation5 + $0x40] sm:$0xff]
    %v105 = vld [vmem:[#allocation5 + $0x48] sm:$0xff]
    %v106 = vld [vmem:[#allocation5 + $0x50] sm:$0xff]
    %v107 = vld [vmem:[#allocation5 + $0x58] sm:$0xff]
    %v108 = vld [vmem:[#allocation5 + $0x60] sm:$0xff]
    %v109 = vld [vmem:[#allocation5 + $0x68] sm:$0xff]
    %v110 = vld [vmem:[#allocation5 + $0x70] sm:$0xff]
    %v111 = vld [vmem:[#allocation5 + $0x78] sm:$0xff]
    %v112 = vld [vmem:[#allocation5 + $0x80] sm:$0xff]
    %v113 = vld [vmem:[#allocation5 + $0x88] sm:$0xff]
    %v114 = vld [vmem:[#allocation5 + $0x90] sm:$0xff]
    %v115 = vld [vmem:[#allocation5 + $0x98] sm:$0xff]
    %v116 = vld [vmem:[#allocation5 + $0xa0] sm:$0xff]
    %v117 = vld [vmem:[#allocation5 + $0xa8] sm:$0xff]
    %v118 = vld [vmem:[#allocation5 + $0xb0] sm:$0xff]
    %v119 = vld [vmem:[#allocation5 + $0xb8] sm:$0xff]
    %v120 = vld [vmem:[#allocation5 + $0xc0] sm:$0xff]
    %v121 = vld [vmem:[#allocation5 + $0xc8] sm:$0xff]
    %v122 = vld [vmem:[#allocation5 + $0xd0] sm:$0xff]
    %v123 = vld [vmem:[#allocation5 + $0xd8] sm:$0xff]
    %v124 = vld [vmem:[#allocation5 + $0xe0] sm:$0xff]
    %v125 = vld [vmem:[#allocation5 + $0xe8] sm:$0xff]
    %v126 = vld [vmem:[#allocation5 + $0xf0] sm:$0xff]
    %v127 = vld [vmem:[#allocation5 + $0xf8] sm:$0xff]
    %v128 = vld [vmem:[#allocation5 + $0x100] sm:$0xff]
    %v129 = vld [vmem:[#allocation5 + $0x108] sm:$0xff]
    %v130 = vld [vmem:[#allocation5 + $0x110] sm:$0xff]
    %v131 = vld [vmem:[#allocation5 + $0x118] sm:$0xff]
    %v132 = vld [vmem:[#allocation5 + $0x120] sm:$0xff]
    %v133 = vld [vmem:[#allocation5 + $0x128] sm:$0xff]
    %v134 = vld [vmem:[#allocation5 + $0x130] sm:$0xff]
    %v135 = vld [vmem:[#allocation5 + $0x138] sm:$0xff]
    %v136 = vld [vmem:[#allocation5 + $0x140] sm:$0xff]
    %v137 = vld [vmem:[#allocation5 + $0x148] sm:$0xff]
    %v138 = vld [vmem:[#allocation5 + $0x150] sm:$0xff]
    %v139 = vld [vmem:[#allocation5 + $0x158] sm:$0xff]
    %v140 = vld [vmem:[#allocation5 + $0x160] sm:$0xff]
    %v141 = vld [vmem:[#allocation5 + $0x168] sm:$0xff]
    %v142 = vld [vmem:[#allocation5 + $0x170] sm:$0xff]
    %v143 = vld [vmem:[#allocation5 + $0x178] sm:$0xff]
    %v144 = vld [vmem:[#allocation5 + $0x180] sm:$0xff]
    %v145 = vld [vmem:[#allocation5 + $0x188] sm:$0xff]
    %v146 = vld [vmem:[#allocation5 + $0x190] sm:$0xff]
    %v147 = vld [vmem:[#allocation5 + $0x198] sm:$0xff]
    %v148 = vld [vmem:[#allocation5 + $0x1a0] sm:$0xff]
    %v149 = vld [vmem:[#allocation5 + $0x1a8] sm:$0xff]
    %v150 = vld [vmem:[#allocation5 + $0x1b0] sm:$0xff]
    %v151 = vld [vmem:[#allocation5 + $0x1b8] sm:$0xff]
    %v152 = vld [vmem:[#allocation5 + $0x1c0] sm:$0xff]
    %v153 = vld [vmem:[#allocation5 + $0x1c8] sm:$0xff]
    %v154 = vld [vmem:[#allocation5 + $0x1d0] sm:$0xff]
    %v155 = vld [vmem:[#allocation5 + $0x1d8] sm:$0xff]
    %v156 = vld [vmem:[#allocation5 + $0x1e0] sm:$0xff]
    %v157 = vld [vmem:[#allocation5 + $0x1e8] sm:$0xff]
    %v158 = vld [vmem:[#allocation5 + $0x1f0] sm:$0xff]
    %v159 = vld [vmem:[#allocation5 + $0x1f8] sm:$0xff]
    %v160 = vld [vmem:[#allocation5 + $0x200] sm:$0xff]
    %v161 = vld [vmem:[#allocation5 + $0x208] sm:$0xff]
    %v162 = vld [vmem:[#allocation5 + $0x210] sm:$0xff]
    %v163 = vld [vmem:[#allocation5 + $0x218] sm:$0xff]
    %v164 = vld [vmem:[#allocation5 + $0x220] sm:$0xff]
    %v165 = vld [vmem:[#allocation5 + $0x228] sm:$0xff]
    %v166 = vld [vmem:[#allocation5 + $0x230] sm:$0xff]
    %v167 = vld [vmem:[#allocation5 + $0x238] sm:$0xff]
    %v168 = vld [vmem:[#allocation5 + $0x240] sm:$0xff]
    %v169 = vld [vmem:[#allocation5 + $0x248] sm:$0xff]
    %v170 = vld [vmem:[#allocation5 + $0x250] sm:$0xff]
    %v171 = vld [vmem:[#allocation5 + $0x258] sm:$0xff]
    %v172 = vld [vmem:[#allocation5 + $0x260] sm:$0xff]
    %v173 = vld [vmem:[#allocation5 + $0x268] sm:$0xff]
    %v174 = vld [vmem:[#allocation5 + $0x270] sm:$0xff]
    %v175 = vld [vmem:[#allocation5 + $0x278] sm:$0xff]
    %v176 = vld [vmem:[#allocation5 + $0x280] sm:$0xff]
    %v177 = vld [vmem:[#allocation5 + $0x288] sm:$0xff]
    %v178 = vld [vmem:[#allocation5 + $0x290] sm:$0xff]
    %v179 = vld [vmem:[#allocation5 + $0x298] sm:$0xff]
    %v180 = vld [vmem:[#allocation5 + $0x2a0] sm:$0xff]
    %v181 = vld [vmem:[#allocation5 + $0x2a8] sm:$0xff]
    %v182 = vld [vmem:[#allocation5 + $0x2b0] sm:$0xff]
    %v183 = vld [vmem:[#allocation5 + $0x2b8] sm:$0xff]
    %v184 = vld [vmem:[#allocation5 + $0x2c0] sm:$0xff]
    %v185 = vld [vmem:[#allocation5 + $0x2c8] sm:$0xff]
    %v186 = vld [vmem:[#allocation5 + $0x2d0] sm:$0xff]
    %v187 = vld [vmem:[#allocation5 + $0x2d8] sm:$0xff]
    %v188 = vld [vmem:[#allocation5 + $0x2e0] sm:$0xff]
    %v189 = vld [vmem:[#allocation5 + $0x2e8] sm:$0xff]
    %v190 = vld [vmem:[#allocation5 + $0x2f0] sm:$0xff]
    %v191 = vld [vmem:[#allocation5 + $0x2f8] sm:$0xff]
    %v192 = vld [vmem:[#allocation5 + $0x300] sm:$0xff]
    %v193 = vld [vmem:[#allocation5 + $0x308] sm:$0xff]
    %v194 = vld [vmem:[#allocation5 + $0x310] sm:$0xff]
    %v195 = vld [vmem:[#allocation5 + $0x318] sm:$0xff]
    %v196 = vld [vmem:[#allocation5 + $0x320] sm:$0xff]
    %v197 = vld [vmem:[#allocation5 + $0x328] sm:$0xff]
    %v198 = vld [vmem:[#allocation5 + $0x330] sm:$0xff]
    %v199 = vld [vmem:[#allocation5 + $0x338] sm:$0xff]
    %v200 = vld [vmem:[#allocation5 + $0x340] sm:$0xff]
    %v201 = vld [vmem:[#allocation5 + $0x348] sm:$0xff]
    %v202 = vld [vmem:[#allocation5 + $0x350] sm:$0xff]
    %v203 = vld [vmem:[#allocation5 + $0x358] sm:$0xff]
    %v204 = vld [vmem:[#allocation5 + $0x360] sm:$0xff]
    %v205 = vld [vmem:[#allocation5 + $0x368] sm:$0xff]
    %v206 = vld [vmem:[#allocation5 + $0x370] sm:$0xff]
    %v207 = vld [vmem:[#allocation5 + $0x378] sm:$0xff]
    %v208 = vld [vmem:[#allocation5 + $0x380] sm:$0xff]
    %v209 = vld [vmem:[#allocation5 + $0x388] sm:$0xff]
    %v210 = vld [vmem:[#allocation5 + $0x390] sm:$0xff]
    %v211 = vld [vmem:[#allocation5 + $0x398] sm:$0xff]
    %v212 = vld [vmem:[#allocation5 + $0x3a0] sm:$0xff]
    %v213 = vld [vmem:[#allocation5 + $0x3a8] sm:$0xff]
    %v214 = vld [vmem:[#allocation5 + $0x3b0] sm:$0xff]
    %v215 = vld [vmem:[#allocation5 + $0x3b8] sm:$0xff]
    %v216 = vld [vmem:[#allocation5 + $0x3c0] sm:$0xff]
    %v217 = vld [vmem:[#allocation5 + $0x3c8] sm:$0xff]
    %v218 = vld [vmem:[#allocation5 + $0x3d0] sm:$0xff]
    %v219 = vld [vmem:[#allocation5 + $0x3d8] sm:$0xff]
    %v220 = vld [vmem:[#allocation5 + $0x3e0] sm:$0xff]
    %v221 = vld [vmem:[#allocation5 + $0x3e8] sm:$0xff]
    %v222 = vld [vmem:[#allocation5 + $0x3f0] sm:$0xff]
    %v223 = vld [vmem:[#allocation5 + $0x3f8] sm:$0xff]
    %v224 = vld [vmem:[#allocation5 + $0x400] sm:$0xff]
    %v225 = vld [vmem:[#allocation5 + $0x408] sm:$0xff]
    %v226 = vld [vmem:[#allocation5 + $0x410] sm:$0xff]
    %v227 = vld [vmem:[#allocation5 + $0x418] sm:$0xff]
    %v228 = vld [vmem:[#allocation5 + $0x420] sm:$0xff]
    %v229 = vld [vmem:[#allocation5 + $0x428] sm:$0xff]
    %v230 = vld [vmem:[#allocation5 + $0x430] sm:$0xff]
    %v231 = vld [vmem:[#allocation5 + $0x438] sm:$0xff]
    %v232 = vld [vmem:[#allocation5 + $0x440] sm:$0xff]
    %v233 = vld [vmem:[#allocation5 + $0x448] sm:$0xff]
    %v234 = vld [vmem:[#allocation5 + $0x450] sm:$0xff]
    %v235 = vld [vmem:[#allocation5 + $0x458] sm:$0xff]
    %v236 = vld [vmem:[#allocation5 + $0x460] sm:$0xff]
    %v237 = vld [vmem:[#allocation5 + $0x468] sm:$0xff]
    %v238 = vld [vmem:[#allocation5 + $0x470] sm:$0xff]
    %v239 = vld [vmem:[#allocation5 + $0x478] sm:$0xff]
    %v240 = vld [vmem:[#allocation5 + $0x480] sm:$0xff]
    %v241 = vld [vmem:[#allocation5 + $0x488] sm:$0xff]
    %v242 = vld [vmem:[#allocation5 + $0x490] sm:$0xff]
    %v243 = vld [vmem:[#allocation5 + $0x498] sm:$0xff]
    %v244 = vld [vmem:[#allocation5 + $0x4a0] sm:$0xff]
    %v245 = vld [vmem:[#allocation5 + $0x4a8] sm:$0xff]
    %v246 = vld [vmem:[#allocation5 + $0x4b0] sm:$0xff]
    %v247 = vld [vmem:[#allocation5 + $0x4b8] sm:$0xff]
    %v248 = vld [vmem:[#allocation5 + $0x4c0] sm:$0xff]
    %v249 = vld [vmem:[#allocation5 + $0x4c8] sm:$0xff]
    %v250 = vld [vmem:[#allocation5 + $0x4d0] sm:$0xff]
    %v251 = vld [vmem:[#allocation5 + $0x4d8] sm:$0xff]
    %v252 = vld [vmem:[#allocation5 + $0x4e0] sm:$0xff]
    %v253 = vld [vmem:[#allocation5 + $0x4e8] sm:$0xff]
    %v254 = vld [vmem:[#allocation5 + $0x4f0] sm:$0xff]
    %v255 = vld [vmem:[#allocation5 + $0x4f8] sm:$0xff]
    %v256 = vld [vmem:[#allocation5 + $0x500] sm:$0xff]
    %v257 = vld [vmem:[#allocation5 + $0x508] sm:$0xff]
    %v258 = vld [vmem:[#allocation5 + $0x510] sm:$0xff]
    %v259 = vld [vmem:[#allocation5 + $0x518] sm:$0xff]
    %v260 = vld [vmem:[#allocation5 + $0x520] sm:$0xff]
    %v261 = vld [vmem:[#allocation5 + $0x528] sm:$0xff]
    %v262 = vld [vmem:[#allocation5 + $0x530] sm:$0xff]
    %v263 = vld [vmem:[#allocation5 + $0x538] sm:$0xff]
    %v264 = vld [vmem:[#allocation5 + $0x540] sm:$0xff]
    %v265 = vld [vmem:[#allocation5 + $0x548] sm:$0xff]
    %v266 = vld [vmem:[#allocation5 + $0x550] sm:$0xff]
    %v267 = vld [vmem:[#allocation5 + $0x558] sm:$0xff]
    %v268 = vld [vmem:[#allocation5 + $0x560] sm:$0xff]
    %v269 = vld [vmem:[#allocation5 + $0x568] sm:$0xff]
    %v270 = vld [vmem:[#allocation5 + $0x570] sm:$0xff]
    %v271 = vld [vmem:[#allocation5 + $0x578] sm:$0xff]
    %v272 = vld [vmem:[#allocation5 + $0x580] sm:$0xff]
    %v273 = vld [vmem:[#allocation5 + $0x588] sm:$0xff]
    %v274 = vld [vmem:[#allocation5 + $0x590] sm:$0xff]
    %v275 = vld [vmem:[#allocation5 + $0x598] sm:$0xff]
    %v276 = vld [vmem:[#allocation5 + $0x5a0] sm:$0xff]
    %v277 = vld [vmem:[#allocation5 + $0x5a8] sm:$0xff]
    %v278 = vld [vmem:[#allocation5 + $0x5b0] sm:$0xff]
    %v279 = vld [vmem:[#allocation5 + $0x5b8] sm:$0xff]
    %v280 = vld [vmem:[#allocation5 + $0x5c0] sm:$0xff]
    %v281 = vld [vmem:[#allocation5 + $0x5c8] sm:$0xff]
    %v282 = vld [vmem:[#allocation5 + $0x5d0] sm:$0xff]
    %v283 = vld [vmem:[#allocation5 + $0x5d8] sm:$0xff]
    %v284 = vld [vmem:[#allocation5 + $0x5e0] sm:$0xff]
    %v285 = vld [vmem:[#allocation5 + $0x5e8] sm:$0xff]
    %v286 = vld [vmem:[#allocation5 + $0x5f0] sm:$0xff]
    %v287 = vld [vmem:[#allocation5 + $0x5f8] sm:$0xff]
    %v288 = vld [vmem:[#allocation5 + $0x600] sm:$0xff]
    %v289 = vld [vmem:[#allocation5 + $0x608] sm:$0xff]
    %v290 = vld [vmem:[#allocation5 + $0x610] sm:$0xff]
    %v291 = vld [vmem:[#allocation5 + $0x618] sm:$0xff]
    %v292 = vld [vmem:[#allocation5 + $0x620] sm:$0xff]
    %v293 = vld [vmem:[#allocation5 + $0x628] sm:$0xff]
    %v294 = vld [vmem:[#allocation5 + $0x630] sm:$0xff]
    %v295 = vld [vmem:[#allocation5 + $0x638] sm:$0xff]
    %v296 = vld [vmem:[#allocation5 + $0x640] sm:$0xff]
    %v297 = vld [vmem:[#allocation5 + $0x648] sm:$0xff]
    %v298 = vld [vmem:[#allocation5 + $0x650] sm:$0xff]
    %v299 = vld [vmem:[#allocation5 + $0x658] sm:$0xff]
    %v300 = vld [vmem:[#allocation5 + $0x660] sm:$0xff]
    %v301 = vld [vmem:[#allocation5 + $0x668] sm:$0xff]
    %v302 = vld [vmem:[#allocation5 + $0x670] sm:$0xff]
    %v303 = vld [vmem:[#allocation5 + $0x678] sm:$0xff]
    %v304 = vld [vmem:[#allocation5 + $0x680] sm:$0xff]
    %v305 = vld [vmem:[#allocation5 + $0x688] sm:$0xff]
    %v306 = vld [vmem:[#allocation5 + $0x690] sm:$0xff]
    %v307 = vld [vmem:[#allocation5 + $0x698] sm:$0xff]
    %v308 = vld [vmem:[#allocation5 + $0x6a0] sm:$0xff]
    %v309 = vld [vmem:[#allocation5 + $0x6a8] sm:$0xff]
    %v310 = vld [vmem:[#allocation5 + $0x6b0] sm:$0xff]
    %v311 = vld [vmem:[#allocation5 + $0x6b8] sm:$0xff]
    %v312 = vld [vmem:[#allocation5 + $0x6c0] sm:$0xff]
    %v313 = vld [vmem:[#allocation5 + $0x6c8] sm:$0xff]
    %v314 = vld [vmem:[#allocation5 + $0x6d0] sm:$0xff]
    %v315 = vld [vmem:[#allocation5 + $0x6d8] sm:$0xff]
    %v316 = vld [vmem:[#allocation5 + $0x6e0] sm:$0xff]
    %v317 = vld [vmem:[#allocation5 + $0x6e8] sm:$0xff]
    %v318 = vld [vmem:[#allocation5 + $0x6f0] sm:$0xff]
    %v319 = vld [vmem:[#allocation5 + $0x6f8] sm:$0xff]
    %v320 = vld [vmem:[#allocation5 + $0x700] sm:$0xff]
    %v321 = vld [vmem:[#allocation5 + $0x708] sm:$0xff]
    %v322 = vld [vmem:[#allocation5 + $0x710] sm:$0xff]
    %v323 = vld [vmem:[#allocation5 + $0x718] sm:$0xff]
    %v324 = vld [vmem:[#allocation5 + $0x720] sm:$0xff]
    %v325 = vld [vmem:[#allocation5 + $0x728] sm:$0xff]
    %v326 = vld [vmem:[#allocation5 + $0x730] sm:$0xff]
    %v327 = vld [vmem:[#allocation5 + $0x738] sm:$0xff]
    %v328 = vld [vmem:[#allocation5 + $0x740] sm:$0xff]
    %v329 = vld [vmem:[#allocation5 + $0x748] sm:$0xff]
    %v330 = vld [vmem:[#allocation5 + $0x750] sm:$0xff]
    %v331 = vld [vmem:[#allocation5 + $0x758] sm:$0xff]
    %v332 = vld [vmem:[#allocation5 + $0x760] sm:$0xff]
    %v333 = vld [vmem:[#allocation5 + $0x768] sm:$0xff]
    %v334 = vld [vmem:[#allocation5 + $0x770] sm:$0xff]
    %v335 = vld [vmem:[#allocation5 + $0x778] sm:$0xff]
    %v336 = vld [vmem:[#allocation5 + $0x780] sm:$0xff]
    %v337 = vld [vmem:[#allocation5 + $0x788] sm:$0xff]
    %v338 = vld [vmem:[#allocation5 + $0x790] sm:$0xff]
    %v339 = vld [vmem:[#allocation5 + $0x798] sm:$0xff]
    %v340 = vld [vmem:[#allocation5 + $0x7a0] sm:$0xff]
    %v341 = vld [vmem:[#allocation5 + $0x7a8] sm:$0xff]
    %v342 = vld [vmem:[#allocation5 + $0x7b0] sm:$0xff]
    %v343 = vld [vmem:[#allocation5 + $0x7b8] sm:$0xff]
    %v344 = vld [vmem:[#allocation5 + $0x7c0] sm:$0xff]
    %v345 = vld [vmem:[#allocation5 + $0x7c8] sm:$0xff]
    %v346 = vld [vmem:[#allocation5 + $0x7d0] sm:$0xff]
    %v347 = vld [vmem:[#allocation5 + $0x7d8] sm:$0xff]
    %v348 = vld [vmem:[#allocation5 + $0x7e0] sm:$0xff]
    %v349 = vld [vmem:[#allocation5 + $0x7e8] sm:$0xff]
    %v350 = vld [vmem:[#allocation5 + $0x7f0] sm:$0xff]
    %v351 = vld [vmem:[#allocation5 + $0x7f8] sm:$0xff]
    %v352 = vld [vmem:[#allocation5 + $0x800] sm:$0xff]
    %v353 = vld [vmem:[#allocation5 + $0x808] sm:$0xff]
    %v354 = vld [vmem:[#allocation5 + $0x810] sm:$0xff]
    %v355 = vld [vmem:[#allocation5 + $0x818] sm:$0xff]
    %v356 = vld [vmem:[#allocation5 + $0x820] sm:$0xff]
    %v357 = vld [vmem:[#allocation5 + $0x828] sm:$0xff]
    %v358 = vld [vmem:[#allocation5 + $0x830] sm:$0xff]
    %v359 = vld [vmem:[#allocation5 + $0x838] sm:$0xff]
    %v360 = vld [vmem:[#allocation5 + $0x840] sm:$0xff]
    %v361 = vld [vmem:[#allocation5 + $0x848] sm:$0xff]
    %v362 = vld [vmem:[#allocation5 + $0x850] sm:$0xff]
    %v363 = vld [vmem:[#allocation5 + $0x858] sm:$0xff]
    %v364 = vld [vmem:[#allocation5 + $0x860] sm:$0xff]
    %v365 = vld [vmem:[#allocation5 + $0x868] sm:$0xff]
    %v366 = vld [vmem:[#allocation5 + $0x870] sm:$0xff]
    %v367 = vld [vmem:[#allocation5 + $0x878] sm:$0xff]
    %v368 = vld [vmem:[#allocation5 + $0x880] sm:$0xff]
    %v369 = vld [vmem:[#allocation5 + $0x888] sm:$0xff]
    %v370 = vld [vmem:[#allocation5 + $0x890] sm:$0xff]
    %v371 = vld [vmem:[#allocation5 + $0x898] sm:$0xff]
    %v372 = vld [vmem:[#allocation5 + $0x8a0] sm:$0xff]
    %v373 = vld [vmem:[#allocation5 + $0x8a8] sm:$0xff]
    %v374 = vld [vmem:[#allocation5 + $0x8b0] sm:$0xff]
    %v375 = vld [vmem:[#allocation5 + $0x8b8] sm:$0xff]
    %v376 = vld [vmem:[#allocation5 + $0x8c0] sm:$0xff]
    %v377 = vld [vmem:[#allocation5 + $0x8c8] sm:$0xff]
    %v378 = vld [vmem:[#allocation5 + $0x8d0] sm:$0xff]
    %v379 = vld [vmem:[#allocation5 + $0x8d8] sm:$0xff]
    %v380 = vld [vmem:[#allocation5 + $0x8e0] sm:$0xff]
    %v381 = vld [vmem:[#allocation5 + $0x8e8] sm:$0xff]
    %v382 = vld [vmem:[#allocation5 + $0x8f0] sm:$0xff]
    %v383 = vld [vmem:[#allocation5 + $0x8f8] sm:$0xff]
    %v384 = vld [vmem:[#allocation5 + $0x900] sm:$0xff]
    %v385 = vld [vmem:[#allocation5 + $0x908] sm:$0xff]
    %v386 = vld [vmem:[#allocation5 + $0x910] sm:$0xff]
    %v387 = vld [vmem:[#allocation5 + $0x918] sm:$0xff]
    %v388 = vld [vmem:[#allocation5 + $0x920] sm:$0xff]
    %v389 = vld [vmem:[#allocation5 + $0x928] sm:$0xff]
    %v390 = vld [vmem:[#allocation5 + $0x930] sm:$0xff]
    %v391 = vld [vmem:[#allocation5 + $0x938] sm:$0xff]
    %v392 = vld [vmem:[#allocation5 + $0x940] sm:$0xff]
    %v393 = vld [vmem:[#allocation5 + $0x948] sm:$0xff]
    %v394 = vld [vmem:[#allocation5 + $0x950] sm:$0xff]
    %v395 = vld [vmem:[#allocation5 + $0x958] sm:$0xff]
    %v396 = vld [vmem:[#allocation5 + $0x960] sm:$0xff]
    %v397 = vld [vmem:[#allocation5 + $0x968] sm:$0xff]
    %v398 = vld [vmem:[#allocation5 + $0x970] sm:$0xff]
    %v399 = vld [vmem:[#allocation5 + $0x978] sm:$0xff]
    %v400 = vld [vmem:[#allocation5 + $0x980] sm:$0xff]
    %v401 = vld [vmem:[#allocation5 + $0x988] sm:$0xff]
    %v402 = vld [vmem:[#allocation5 + $0x990] sm:$0xff]
    %v403 = vld [vmem:[#allocation5 + $0x998] sm:$0xff]
    %v404 = vld [vmem:[#allocation5 + $0x9a0] sm:$0xff]
    %v405 = vld [vmem:[#allocation5 + $0x9a8] sm:$0xff]
    %v406 = vld [vmem:[#allocation5 + $0x9b0] sm:$0xff]
    %v407 = vld [vmem:[#allocation5 + $0x9b8] sm:$0xff]
    %v408 = vld [vmem:[#allocation5 + $0x9c0] sm:$0xff]
    %v409 = vld [vmem:[#allocation5 + $0x9c8] sm:$0xff]
    %v410 = vld [vmem:[#allocation5 + $0x9d0] sm:$0xff]
    %v411 = vld [vmem:[#allocation5 + $0x9d8] sm:$0xff]
    %v412 = vld [vmem:[#allocation5 + $0x9e0] sm:$0xff]
    %v413 = vld [vmem:[#allocation5 + $0x9e8] sm:$0xff]
    %v414 = vld [vmem:[#allocation5 + $0x9f0] sm:$0xff]
    %v415 = vld [vmem:[#allocation5 + $0x9f8] sm:$0xff]
    %v416 = vld [vmem:[#allocation5 + $0xa00] sm:$0xff]
    %v417 = vld [vmem:[#allocation5 + $0xa08] sm:$0xff]
    %v418 = vld [vmem:[#allocation5 + $0xa10] sm:$0xff]
    %v419 = vld [vmem:[#allocation5 + $0xa18] sm:$0xff]
    %v420 = vld [vmem:[#allocation5 + $0xa20] sm:$0xff]
    %v421 = vld [vmem:[#allocation5 + $0xa28] sm:$0xff]
    %v422 = vld [vmem:[#allocation5 + $0xa30] sm:$0xff]
    %v423 = vld [vmem:[#allocation5 + $0xa38] sm:$0xff]
    %v424 = vld [vmem:[#allocation5 + $0xa40] sm:$0xff]
    %v425 = vld [vmem:[#allocation5 + $0xa48] sm:$0xff]
    %v426 = vld [vmem:[#allocation5 + $0xa50] sm:$0xff]
    %v427 = vld [vmem:[#allocation5 + $0xa58] sm:$0xff]
    %v428 = vld [vmem:[#allocation5 + $0xa60] sm:$0xff]
    %v429 = vld [vmem:[#allocation5 + $0xa68] sm:$0xff]
    %v430 = vld [vmem:[#allocation5 + $0xa70] sm:$0xff]
    %v431 = vld [vmem:[#allocation5 + $0xa78] sm:$0xff]
    %v432 = vld [vmem:[#allocation5 + $0xa80] sm:$0xff]
    %v433 = vld [vmem:[#allocation5 + $0xa88] sm:$0xff]
    %v434 = vld [vmem:[#allocation5 + $0xa90] sm:$0xff]
    %v435 = vld [vmem:[#allocation5 + $0xa98] sm:$0xff]
    %v436 = vld [vmem:[#allocation5 + $0xaa0] sm:$0xff]
    %v437 = vld [vmem:[#allocation5 + $0xaa8] sm:$0xff]
    %v438 = vld [vmem:[#allocation5 + $0xab0] sm:$0xff]
    %v439 = vld [vmem:[#allocation5 + $0xab8] sm:$0xff]
    %v440 = vld [vmem:[#allocation5 + $0xac0] sm:$0xff]
    %v441 = vld [vmem:[#allocation5 + $0xac8] sm:$0xff]
    %v442 = vld [vmem:[#allocation5 + $0xad0] sm:$0xff]
    %v443 = vld [vmem:[#allocation5 + $0xad8] sm:$0xff]
    %v444 = vld [vmem:[#allocation5 + $0xae0] sm:$0xff]
    %v445 = vld [vmem:[#allocation5 + $0xae8] sm:$0xff]
    %v446 = vld [vmem:[#allocation5 + $0xaf0] sm:$0xff]
    %v447 = vld [vmem:[#allocation5 + $0xaf8] sm:$0xff]
    %v448 = vld [vmem:[#allocation5 + $0xb00] sm:$0xff]
    %v449 = vld [vmem:[#allocation5 + $0xb08] sm:$0xff]
    %v450 = vld [vmem:[#allocation5 + $0xb10] sm:$0xff]
    %v451 = vld [vmem:[#allocation5 + $0xb18] sm:$0xff]
    %v452 = vld [vmem:[#allocation5 + $0xb20] sm:$0xff]
    %v453 = vld [vmem:[#allocation5 + $0xb28] sm:$0xff]
    %v454 = vld [vmem:[#allocation5 + $0xb30] sm:$0xff]
    %v455 = vld [vmem:[#allocation5 + $0xb38] sm:$0xff]
    %v456 = vld [vmem:[#allocation5 + $0xb40] sm:$0xff]
    %v457 = vld [vmem:[#allocation5 + $0xb48] sm:$0xff]
    %v458 = vld [vmem:[#allocation5 + $0xb50] sm:$0xff]
    %v459 = vld [vmem:[#allocation5 + $0xb58] sm:$0xff]
    %v460 = vld [vmem:[#allocation5 + $0xb60] sm:$0xff]
    %v461 = vld [vmem:[#allocation5 + $0xb68] sm:$0xff]
    %v462 = vld [vmem:[#allocation5 + $0xb70] sm:$0xff]
    %v463 = vld [vmem:[#allocation5 + $0xb78] sm:$0xff]
    %v464 = vld [vmem:[#allocation5 + $0xb80] sm:$0xff]
    %v465 = vld [vmem:[#allocation5 + $0xb88] sm:$0xff]
    %v466 = vld [vmem:[#allocation5 + $0xb90] sm:$0xff]
    %v467 = vld [vmem:[#allocation5 + $0xb98] sm:$0xff]
    %v468 = vld [vmem:[#allocation5 + $0xba0] sm:$0xff]
    %v469 = vld [vmem:[#allocation5 + $0xba8] sm:$0xff]
    %v470 = vld [vmem:[#allocation5 + $0xbb0] sm:$0xff]
    %v471 = vld [vmem:[#allocation5 + $0xbb8] sm:$0xff]
    %v472 = vld [vmem:[#allocation5 + $0xbc0] sm:$0xff]
    %v473 = vld [vmem:[#allocation5 + $0xbc8] sm:$0xff]
    %v474 = vld [vmem:[#allocation5 + $0xbd0] sm:$0xff]
    %v475 = vld [vmem:[#allocation5 + $0xbd8] sm:$0xff]
    %v476 = vld [vmem:[#allocation5 + $0xbe0] sm:$0xff]
    %v477 = vld [vmem:[#allocation5 + $0xbe8] sm:$0xff]
    %v478 = vld [vmem:[#allocation5 + $0xbf0] sm:$0xff]
    %v479 = vld [vmem:[#allocation5 + $0xbf8] sm:$0xff]
    %v480 = vld [vmem:[#allocation5 + $0xc00] sm:$0xff]
    %v481 = vld [vmem:[#allocation5 + $0xc08] sm:$0xff]
    %v482 = vld [vmem:[#allocation5 + $0xc10] sm:$0xff]
    %v483 = vld [vmem:[#allocation5 + $0xc18] sm:$0xff]
    %v484 = vld [vmem:[#allocation5 + $0xc20] sm:$0xff]
    %v485 = vld [vmem:[#allocation5 + $0xc28] sm:$0xff]
    %v486 = vld [vmem:[#allocation5 + $0xc30] sm:$0xff]
    %v487 = vld [vmem:[#allocation5 + $0xc38] sm:$0xff]
    %v488 = vld [vmem:[#allocation5 + $0xc40] sm:$0xff]
    %v489 = vld [vmem:[#allocation5 + $0xc48] sm:$0xff]
    %v490 = vld [vmem:[#allocation5 + $0xc50] sm:$0xff]
    %v491 = vld [vmem:[#allocation5 + $0xc58] sm:$0xff]
    %v492 = vld [vmem:[#allocation5 + $0xc60] sm:$0xff]
    %v493 = vld [vmem:[#allocation5 + $0xc68] sm:$0xff]
    %v494 = vld [vmem:[#allocation5 + $0xc70] sm:$0xff]
    %v495 = vld [vmem:[#allocation5 + $0xc78] sm:$0xff]
    %v496 = vld [vmem:[#allocation5 + $0xc80] sm:$0xff]
    %v497 = vld [vmem:[#allocation5 + $0xc88] sm:$0xff]
    %v498 = vld [vmem:[#allocation5 + $0xc90] sm:$0xff]
    %v499 = vld [vmem:[#allocation5 + $0xc98] sm:$0xff]
    %v500 = vld [vmem:[#allocation5 + $0xca0] sm:$0xff]
    %v501 = vld [vmem:[#allocation5 + $0xca8] sm:$0xff]
    %v502 = vld [vmem:[#allocation5 + $0xcb0] sm:$0xff]
    %v503 = vld [vmem:[#allocation5 + $0xcb8] sm:$0xff]
    %v504 = vld [vmem:[#allocation5 + $0xcc0] sm:$0xff]
    %v505 = vld [vmem:[#allocation5 + $0xcc8] sm:$0xff]
    %v506 = vld [vmem:[#allocation5 + $0xcd0] sm:$0xff]
    %v507 = vld [vmem:[#allocation5 + $0xcd8] sm:$0xff]
    %v508 = vld [vmem:[#allocation5 + $0xce0] sm:$0xff]
    %v509 = vld [vmem:[#allocation5 + $0xce8] sm:$0xff]
    %v510 = vld [vmem:[#allocation5 + $0xcf0] sm:$0xff]
    %v511 = vld [vmem:[#allocation5 + $0xcf8] sm:$0xff]
    %v512 = vld [vmem:[#allocation5 + $0xd00] sm:$0xff]
    %v513 = vld [vmem:[#allocation5 + $0xd08] sm:$0xff]
    %v514 = vld [vmem:[#allocation5 + $0xd10] sm:$0xff]
    %v515 = vld [vmem:[#allocation5 + $0xd18] sm:$0xff]
    %v516 = vld [vmem:[#allocation5 + $0xd20] sm:$0xff]
    %v517 = vld [vmem:[#allocation5 + $0xd28] sm:$0xff]
    %v518 = vld [vmem:[#allocation5 + $0xd30] sm:$0xff]
    %v519 = vld [vmem:[#allocation5 + $0xd38] sm:$0xff]
    %v520 = vld [vmem:[#allocation5 + $0xd40] sm:$0xff]
    %v521 = vld [vmem:[#allocation5 + $0xd48] sm:$0xff]
    %v522 = vld [vmem:[#allocation5 + $0xd50] sm:$0xff]
    %v523 = vld [vmem:[#allocation5 + $0xd58] sm:$0xff]
    %v524 = vld [vmem:[#allocation5 + $0xd60] sm:$0xff]
    %v525 = vld [vmem:[#allocation5 + $0xd68] sm:$0xff]
    %v526 = vld [vmem:[#allocation5 + $0xd70] sm:$0xff]
    %v527 = vld [vmem:[#allocation5 + $0xd78] sm:$0xff]
    %v528 = vld [vmem:[#allocation5 + $0xd80] sm:$0xff]
    %v529 = vld [vmem:[#allocation5 + $0xd88] sm:$0xff]
    %v530 = vld [vmem:[#allocation5 + $0xd90] sm:$0xff]
    %v531 = vld [vmem:[#allocation5 + $0xd98] sm:$0xff]
    %v532 = vld [vmem:[#allocation5 + $0xda0] sm:$0xff]
    %v533 = vld [vmem:[#allocation5 + $0xda8] sm:$0xff]
    %v534 = vld [vmem:[#allocation5 + $0xdb0] sm:$0xff]
    %v535 = vld [vmem:[#allocation5 + $0xdb8] sm:$0xff]
    %v536 = vld [vmem:[#allocation5 + $0xdc0] sm:$0xff]
    %v537 = vld [vmem:[#allocation5 + $0xdc8] sm:$0xff]
    %v538 = vld [vmem:[#allocation5 + $0xdd0] sm:$0xff]
    %v539 = vld [vmem:[#allocation5 + $0xdd8] sm:$0xff]
    %v540 = vld [vmem:[#allocation5 + $0xde0] sm:$0xff]
    %v541 = vld [vmem:[#allocation5 + $0xde8] sm:$0xff]
    %v542 = vld [vmem:[#allocation5 + $0xdf0] sm:$0xff]
    %v543 = vld [vmem:[#allocation5 + $0xdf8] sm:$0xff]
    %v544 = vld [vmem:[#allocation5 + $0xe00] sm:$0xff]
    %v545 = vld [vmem:[#allocation5 + $0xe08] sm:$0xff]
    %v546 = vld [vmem:[#allocation5 + $0xe10] sm:$0xff]
    %v547 = vld [vmem:[#allocation5 + $0xe18] sm:$0xff]
    %v548 = vld [vmem:[#allocation5 + $0xe20] sm:$0xff]
    %v549 = vld [vmem:[#allocation5 + $0xe28] sm:$0xff]
    %v550 = vld [vmem:[#allocation5 + $0xe30] sm:$0xff]
    %v551 = vld [vmem:[#allocation5 + $0xe38] sm:$0xff]
    %v552 = vld [vmem:[#allocation5 + $0xe40] sm:$0xff]
    %v553 = vld [vmem:[#allocation5 + $0xe48] sm:$0xff]
    %v554 = vld [vmem:[#allocation5 + $0xe50] sm:$0xff]
    %v555 = vld [vmem:[#allocation5 + $0xe58] sm:$0xff]
    %v556 = vld [vmem:[#allocation5 + $0xe60] sm:$0xff]
    %v557 = vld [vmem:[#allocation5 + $0xe68] sm:$0xff]
    %v558 = vld [vmem:[#allocation5 + $0xe70] sm:$0xff]
    %v559 = vld [vmem:[#allocation5 + $0xe78] sm:$0xff]
    %v560 = vld [vmem:[#allocation5 + $0xe80] sm:$0xff]
    %v561 = vld [vmem:[#allocation5 + $0xe88] sm:$0xff]
    %v562 = vld [vmem:[#allocation5 + $0xe90] sm:$0xff]
    %v563 = vld [vmem:[#allocation5 + $0xe98] sm:$0xff]
    %v564 = vld [vmem:[#allocation5 + $0xea0] sm:$0xff]
    %v565 = vld [vmem:[#allocation5 + $0xea8] sm:$0xff]
    %v566 = vld [vmem:[#allocation5 + $0xeb0] sm:$0xff]
    %v567 = vld [vmem:[#allocation5 + $0xeb8] sm:$0xff]
    %v568 = vld [vmem:[#allocation5 + $0xec0] sm:$0xff]
    %v569 = vld [vmem:[#allocation5 + $0xec8] sm:$0xff]
    %v570 = vld [vmem:[#allocation5 + $0xed0] sm:$0xff]
    %v571 = vld [vmem:[#allocation5 + $0xed8] sm:$0xff]
    %v572 = vld [vmem:[#allocation5 + $0xee0] sm:$0xff]
    %v573 = vld [vmem:[#allocation5 + $0xee8] sm:$0xff]
    %v574 = vld [vmem:[#allocation5 + $0xef0] sm:$0xff]
    %v575 = vld [vmem:[#allocation5 + $0xef8] sm:$0xff]
    %v576 = vld [vmem:[#allocation5 + $0xf00] sm:$0xff]
    %v577 = vld [vmem:[#allocation5 + $0xf08] sm:$0xff]
    %v578 = vld [vmem:[#allocation5 + $0xf10] sm:$0xff]
    %v579 = vld [vmem:[#allocation5 + $0xf18] sm:$0xff]
    %v580 = vld [vmem:[#allocation5 + $0xf20] sm:$0xff]
    %v581 = vld [vmem:[#allocation5 + $0xf28] sm:$0xff]
    %v582 = vld [vmem:[#allocation5 + $0xf30] sm:$0xff]
    %v583 = vld [vmem:[#allocation5 + $0xf38] sm:$0xff]
    %v584 = vld [vmem:[#allocation5 + $0xf40] sm:$0xff]
    %v585 = vld [vmem:[#allocation5 + $0xf48] sm:$0xff]
    %v586 = vld [vmem:[#allocation5 + $0xf50] sm:$0xff]
    %v587 = vld [vmem:[#allocation5 + $0xf58] sm:$0xff]
    %v588 = vld [vmem:[#allocation5 + $0xf60] sm:$0xff]
    %v589 = vld [vmem:[#allocation5 + $0xf68] sm:$0xff]
    %v590 = vld [vmem:[#allocation5 + $0xf70] sm:$0xff]
    %v591 = vld [vmem:[#allocation5 + $0xf78] sm:$0xff]
    %v592 = vld [vmem:[#allocation5 + $0xf80] sm:$0xff]
    %v593 = vld [vmem:[#allocation5 + $0xf88] sm:$0xff]
    %v594 = vld [vmem:[#allocation5 + $0xf90] sm:$0xff]
    %v595 = vld [vmem:[#allocation5 + $0xf98] sm:$0xff]
    %v596 = vld [vmem:[#allocation5 + $0xfa0] sm:$0xff]
    %v597 = vld [vmem:[#allocation5 + $0xfa8] sm:$0xff]
    %v598 = vld [vmem:[#allocation5 + $0xfb0] sm:$0xff]
    %v599 = vld [vmem:[#allocation5 + $0xfb8] sm:$0xff]
    %v600 = vld [vmem:[#allocation5 + $0xfc0] sm:$0xff]
    %v601 = vld [vmem:[#allocation5 + $0xfc8] sm:$0xff]
    %v602 = vld [vmem:[#allocation5 + $0xfd0] sm:$0xff]
    %v603 = vld [vmem:[#allocation5 + $0xfd8] sm:$0xff]
    %v604 = vld [vmem:[#allocation5 + $0xfe0] sm:$0xff]
    %v605 = vld [vmem:[#allocation5 + $0xfe8] sm:$0xff]
    %v606 = vld [vmem:[#allocation5 + $0xff0] sm:$0xff]
    %v607 = vld [vmem:[#allocation5 + $0xff8] sm:$0xff]
    %v608 = vld [vmem:[#allocation5 + $0x1000] sm:$0xff]
    %v609 = vld [vmem:[#allocation5 + $0x1008] sm:$0xff]
    %v610 = vld [vmem:[#allocation5 + $0x1010] sm:$0xff]
    %v611 = vld [vmem:[#allocation5 + $0x1018] sm:$0xff]
    %v612 = vld [vmem:[#allocation5 + $0x1020] sm:$0xff]
    %v613 = vld [vmem:[#allocation5 + $0x1028] sm:$0xff]
    %v614 = vld [vmem:[#allocation5 + $0x1030] sm:$0xff]
    %v615 = vld [vmem:[#allocation5 + $0x1038] sm:$0xff]
    %v616 = vld [vmem:[#allocation5 + $0x1040] sm:$0xff]
    %v617 = vld [vmem:[#allocation5 + $0x1048] sm:$0xff]
    %v618 = vld [vmem:[#allocation5 + $0x1050] sm:$0xff]
    %v619 = vld [vmem:[#allocation5 + $0x1058] sm:$0xff]
    %v620 = vld [vmem:[#allocation5 + $0x1060] sm:$0xff]
    %v621 = vld [vmem:[#allocation5 + $0x1068] sm:$0xff]
    %v622 = vld [vmem:[#allocation5 + $0x1070] sm:$0xff]
    %v623 = vld [vmem:[#allocation5 + $0x1078] sm:$0xff]
    %v624 = vld [vmem:[#allocation5 + $0x1080] sm:$0xff]
    %v625 = vld [vmem:[#allocation5 + $0x1088] sm:$0xff]
    %v626 = vld [vmem:[#allocation5 + $0x1090] sm:$0xff]
    %v627 = vld [vmem:[#allocation5 + $0x1098] sm:$0xff]
    %v628 = vld [vmem:[#allocation5 + $0x10a0] sm:$0xff]
    %v629 = vld [vmem:[#allocation5 + $0x10a8] sm:$0xff]
    %v630 = vld [vmem:[#allocation5 + $0x10b0] sm:$0xff]
    %v631 = vld [vmem:[#allocation5 + $0x10b8] sm:$0xff]
    %v632 = vld [vmem:[#allocation5 + $0x10c0] sm:$0xff]
    %v633 = vld [vmem:[#allocation5 + $0x10c8] sm:$0xff]
    %v634 = vld [vmem:[#allocation5 + $0x10d0] sm:$0xff]
    %v635 = vld [vmem:[#allocation5 + $0x10d8] sm:$0xff]
    %v636 = vld [vmem:[#allocation5 + $0x10e0] sm:$0xff]
    %v637 = vld [vmem:[#allocation5 + $0x10e8] sm:$0xff]
    %v638 = vld [vmem:[#allocation5 + $0x10f0] sm:$0xff]
    %v639 = vld [vmem:[#allocation5 + $0x10f8] sm:$0xff]
    %v640 = vld [vmem:[#allocation5 + $0x1100] sm:$0xff]
    %v641 = vld [vmem:[#allocation5 + $0x1108] sm:$0xff]
    %v642 = vld [vmem:[#allocation5 + $0x1110] sm:$0xff]
    %v643 = vld [vmem:[#allocation5 + $0x1118] sm:$0xff]
    %v644 = vld [vmem:[#allocation5 + $0x1120] sm:$0xff]
    %v645 = vld [vmem:[#allocation5 + $0x1128] sm:$0xff]
    %v646 = vld [vmem:[#allocation5 + $0x1130] sm:$0xff]
    %v647 = vld [vmem:[#allocation5 + $0x1138] sm:$0xff]
    %v648 = vld [vmem:[#allocation5 + $0x1140] sm:$0xff]
    %v649 = vld [vmem:[#allocation5 + $0x1148] sm:$0xff]
    %v650 = vld [vmem:[#allocation5 + $0x1150] sm:$0xff]
    %v651 = vld [vmem:[#allocation5 + $0x1158] sm:$0xff]
    %v652 = vld [vmem:[#allocation5 + $0x1160] sm:$0xff]
    %v653 = vld [vmem:[#allocation5 + $0x1168] sm:$0xff]
    %v654 = vld [vmem:[#allocation5 + $0x1170] sm:$0xff]
    %v655 = vld [vmem:[#allocation5 + $0x1178] sm:$0xff]
    %v656 = vld [vmem:[#allocation5 + $0x1180] sm:$0xff]
    %v657 = vld [vmem:[#allocation5 + $0x1188] sm:$0xff]
    %v658 = vld [vmem:[#allocation5 + $0x1190] sm:$0xff]
    %v659 = vld [vmem:[#allocation5 + $0x1198] sm:$0xff]
    %v660 = vld [vmem:[#allocation5 + $0x11a0] sm:$0xff]
    %v661 = vld [vmem:[#allocation5 + $0x11a8] sm:$0xff]
    %v662 = vld [vmem:[#allocation5 + $0x11b0] sm:$0xff]
    %v663 = vld [vmem:[#allocation5 + $0x11b8] sm:$0xff]
    %v664 = vld [vmem:[#allocation5 + $0x11c0] sm:$0xff]
    %v665 = vld [vmem:[#allocation5 + $0x11c8] sm:$0xff]
    %v666 = vld [vmem:[#allocation5 + $0x11d0] sm:$0xff]
    %v667 = vld [vmem:[#allocation5 + $0x11d8] sm:$0xff]
    %v668 = vld [vmem:[#allocation5 + $0x11e0] sm:$0xff]
    %v669 = vld [vmem:[#allocation5 + $0x11e8] sm:$0xff]
    %v670 = vld [vmem:[#allocation5 + $0x11f0] sm:$0xff]
    %v671 = vld [vmem:[#allocation5 + $0x11f8] sm:$0xff]
    %v672 = vld [vmem:[#allocation5 + $0x1200] sm:$0xff]
    %v673 = vld [vmem:[#allocation5 + $0x1208] sm:$0xff]
    %v674 = vld [vmem:[#allocation5 + $0x1210] sm:$0xff]
    %v675 = vld [vmem:[#allocation5 + $0x1218] sm:$0xff]
    %v676 = vld [vmem:[#allocation5 + $0x1220] sm:$0xff]
    %v677 = vld [vmem:[#allocation5 + $0x1228] sm:$0xff]
    %v678 = vld [vmem:[#allocation5 + $0x1230] sm:$0xff]
    %v679 = vld [vmem:[#allocation5 + $0x1238] sm:$0xff]
    %v680 = vld [vmem:[#allocation5 + $0x1240] sm:$0xff]
    %v681 = vld [vmem:[#allocation5 + $0x1248] sm:$0xff]
    %v682 = vld [vmem:[#allocation5 + $0x1250] sm:$0xff]
    %v683 = vld [vmem:[#allocation5 + $0x1258] sm:$0xff]
    %v684 = vld [vmem:[#allocation5 + $0x1260] sm:$0xff]
    %v685 = vld [vmem:[#allocation5 + $0x1268] sm:$0xff]
    %v686 = vld [vmem:[#allocation5 + $0x1270] sm:$0xff]
    %v687 = vld [vmem:[#allocation5 + $0x1278] sm:$0xff]
    %v688 = vld [vmem:[#allocation5 + $0x1280] sm:$0xff]
    %v689 = vld [vmem:[#allocation5 + $0x1288] sm:$0xff]
    %v690 = vld [vmem:[#allocation5 + $0x1290] sm:$0xff]
    %v691 = vld [vmem:[#allocation5 + $0x1298] sm:$0xff]
    %v692 = vld [vmem:[#allocation5 + $0x12a0] sm:$0xff]
    %v693 = vld [vmem:[#allocation5 + $0x12a8] sm:$0xff]
    %v694 = vld [vmem:[#allocation5 + $0x12b0] sm:$0xff]
    %v695 = vld [vmem:[#allocation5 + $0x12b8] sm:$0xff]
    %v696 = vld [vmem:[#allocation5 + $0x12c0] sm:$0xff]
    %v697 = vld [vmem:[#allocation5 + $0x12c8] sm:$0xff]
    %v698 = vld [vmem:[#allocation5 + $0x12d0] sm:$0xff]
    %v699 = vld [vmem:[#allocation5 + $0x12d8] sm:$0xff]
    %v700 = vld [vmem:[#allocation5 + $0x12e0] sm:$0xff]
    %v701 = vld [vmem:[#allocation5 + $0x12e8] sm:$0xff]
    %v702 = vld [vmem:[#allocation5 + $0x12f0] sm:$0xff]
    %v703 = vld [vmem:[#allocation5 + $0x12f8] sm:$0xff]
    %v704 = vld [vmem:[#allocation5 + $0x1300] sm:$0xff]
    %v705 = vld [vmem:[#allocation5 + $0x1308] sm:$0xff]
    %v706 = vld [vmem:[#allocation5 + $0x1310] sm:$0xff]
    %v707 = vld [vmem:[#allocation5 + $0x1318] sm:$0xff]
    %v708 = vld [vmem:[#allocation5 + $0x1320] sm:$0xff]
    %v709 = vld [vmem:[#allocation5 + $0x1328] sm:$0xff]
    %v710 = vld [vmem:[#allocation5 + $0x1330] sm:$0xff]
    %v711 = vld [vmem:[#allocation5 + $0x1338] sm:$0xff]
    %v712 = vld [vmem:[#allocation5 + $0x1340] sm:$0xff]
    %v713 = vld [vmem:[#allocation5 + $0x1348] sm:$0xff]
    %v714 = vld [vmem:[#allocation5 + $0x1350] sm:$0xff]
    %v715 = vld [vmem:[#allocation5 + $0x1358] sm:$0xff]
    %v716 = vld [vmem:[#allocation5 + $0x1360] sm:$0xff]
    %v717 = vld [vmem:[#allocation5 + $0x1368] sm:$0xff]
    %v718 = vld [vmem:[#allocation5 + $0x1370] sm:$0xff]
    %v719 = vld [vmem:[#allocation5 + $0x1378] sm:$0xff]
    %v720 = vld [vmem:[#allocation5 + $0x1380] sm:$0xff]
    %v721 = vld [vmem:[#allocation5 + $0x1388] sm:$0xff]
    %v722 = vld [vmem:[#allocation5 + $0x1390] sm:$0xff]
    %v723 = vld [vmem:[#allocation5 + $0x1398] sm:$0xff]
    %v724 = vld [vmem:[#allocation5 + $0x13a0] sm:$0xff]
    %v725 = vld [vmem:[#allocation5 + $0x13a8] sm:$0xff]
    %v726 = vld [vmem:[#allocation5 + $0x13b0] sm:$0xff]
    %v727 = vld [vmem:[#allocation5 + $0x13b8] sm:$0xff]
    %v728 = vld [vmem:[#allocation5 + $0x13c0] sm:$0xff]
    %v729 = vld [vmem:[#allocation5 + $0x13c8] sm:$0xff]
    %v730 = vld [vmem:[#allocation5 + $0x13d0] sm:$0xff]
    %v731 = vld [vmem:[#allocation5 + $0x13d8] sm:$0xff]
    %v732 = vld [vmem:[#allocation5 + $0x13e0] sm:$0xff]
    %v733 = vld [vmem:[#allocation5 + $0x13e8] sm:$0xff]
    %v734 = vld [vmem:[#allocation5 + $0x13f0] sm:$0xff]
    %v735 = vld [vmem:[#allocation5 + $0x13f8] sm:$0xff]
    %v736 = vld [vmem:[#allocation5 + $0x1400] sm:$0xff]
    %v737 = vld [vmem:[#allocation5 + $0x1408] sm:$0xff]
    %v738 = vld [vmem:[#allocation5 + $0x1410] sm:$0xff]
    %v739 = vld [vmem:[#allocation5 + $0x1418] sm:$0xff]
    %v740 = vld [vmem:[#allocation5 + $0x1420] sm:$0xff]
    %v741 = vld [vmem:[#allocation5 + $0x1428] sm:$0xff]
    %v742 = vld [vmem:[#allocation5 + $0x1430] sm:$0xff]
    %v743 = vld [vmem:[#allocation5 + $0x1438] sm:$0xff]
    %v744 = vld [vmem:[#allocation5 + $0x1440] sm:$0xff]
    %v745 = vld [vmem:[#allocation5 + $0x1448] sm:$0xff]
    %v746 = vld [vmem:[#allocation5 + $0x1450] sm:$0xff]
    %v747 = vld [vmem:[#allocation5 + $0x1458] sm:$0xff]
    %v748 = vld [vmem:[#allocation5 + $0x1460] sm:$0xff]
    %v749 = vld [vmem:[#allocation5 + $0x1468] sm:$0xff]
    %v750 = vld [vmem:[#allocation5 + $0x1470] sm:$0xff]
    %v751 = vld [vmem:[#allocation5 + $0x1478] sm:$0xff]
    %v752 = vld [vmem:[#allocation5 + $0x1480] sm:$0xff]
    %v753 = vld [vmem:[#allocation5 + $0x1488] sm:$0xff]
    %v754 = vld [vmem:[#allocation5 + $0x1490] sm:$0xff]
    %v755 = vld [vmem:[#allocation5 + $0x1498] sm:$0xff]
    %v756 = vld [vmem:[#allocation5 + $0x14a0] sm:$0xff]
    %v757 = vld [vmem:[#allocation5 + $0x14a8] sm:$0xff]
    %v758 = vld [vmem:[#allocation5 + $0x14b0] sm:$0xff]
    %v759 = vld [vmem:[#allocation5 + $0x14b8] sm:$0xff]
    %v760 = vld [vmem:[#allocation5 + $0x14c0] sm:$0xff]
    %v761 = vld [vmem:[#allocation5 + $0x14c8] sm:$0xff]
    %v762 = vld [vmem:[#allocation5 + $0x14d0] sm:$0xff]
    %v763 = vld [vmem:[#allocation5 + $0x14d8] sm:$0xff]
    %v764 = vld [vmem:[#allocation5 + $0x14e0] sm:$0xff]
    %v765 = vld [vmem:[#allocation5 + $0x14e8] sm:$0xff]
    %v766 = vld [vmem:[#allocation5 + $0x14f0] sm:$0xff]
    %v767 = vld [vmem:[#allocation5 + $0x14f8] sm:$0xff]
    %v768 = vld [vmem:[#allocation5 + $0x1500] sm:$0xff]
    %v769 = vld [vmem:[#allocation5 + $0x1508] sm:$0xff]
    %v770 = vld [vmem:[#allocation5 + $0x1510] sm:$0xff]
    %v771 = vld [vmem:[#allocation5 + $0x1518] sm:$0xff]
    %v772 = vld [vmem:[#allocation5 + $0x1520] sm:$0xff]
    %v773 = vld [vmem:[#allocation5 + $0x1528] sm:$0xff]
    %v774 = vld [vmem:[#allocation5 + $0x1530] sm:$0xff]
    %v775 = vld [vmem:[#allocation5 + $0x1538] sm:$0xff]
    %v776 = vld [vmem:[#allocation5 + $0x1540] sm:$0xff]
    %v777 = vld [vmem:[#allocation5 + $0x1548] sm:$0xff]
    %v778 = vld [vmem:[#allocation5 + $0x1550] sm:$0xff]
    %v779 = vld [vmem:[#allocation5 + $0x1558] sm:$0xff]
    %v780 = vld [vmem:[#allocation5 + $0x1560] sm:$0xff]
    %v781 = vld [vmem:[#allocation5 + $0x1568] sm:$0xff]
    %v782 = vld [vmem:[#allocation5 + $0x1570] sm:$0xff]
    %v783 = vld [vmem:[#allocation5 + $0x1578] sm:$0xff]
    %v784 = vld [vmem:[#allocation5 + $0x1580] sm:$0xff]
    %v785 = vld [vmem:[#allocation5 + $0x1588] sm:$0xff]
    %v786 = vld [vmem:[#allocation5 + $0x1590] sm:$0xff]
    %v787 = vld [vmem:[#allocation5 + $0x1598] sm:$0xff]
    %v788 = vld [vmem:[#allocation5 + $0x15a0] sm:$0xff]
    %v789 = vld [vmem:[#allocation5 + $0x15a8] sm:$0xff]
    %v790 = vld [vmem:[#allocation5 + $0x15b0] sm:$0xff]
    %v791 = vld [vmem:[#allocation5 + $0x15b8] sm:$0xff]
    %v792 = vld [vmem:[#allocation5 + $0x15c0] sm:$0xff]
    %v793 = vld [vmem:[#allocation5 + $0x15c8] sm:$0xff]
    %v794 = vld [vmem:[#allocation5 + $0x15d0] sm:$0xff]
    %v795 = vld [vmem:[#allocation5 + $0x15d8] sm:$0xff]
    %v796 = vld [vmem:[#allocation5 + $0x15e0] sm:$0xff]
    %v797 = vld [vmem:[#allocation5 + $0x15e8] sm:$0xff]
    %v798 = vld [vmem:[#allocation5 + $0x15f0] sm:$0xff]
    %v799 = vld [vmem:[#allocation5 + $0x15f8] sm:$0xff]
    %v800 = vld [vmem:[#allocation5 + $0x1600] sm:$0xff]
    %v801 = vld [vmem:[#allocation5 + $0x1608] sm:$0xff]
    %v802 = vld [vmem:[#allocation5 + $0x1610] sm:$0xff]
    %v803 = vld [vmem:[#allocation5 + $0x1618] sm:$0xff]
    %v804 = vld [vmem:[#allocation5 + $0x1620] sm:$0xff]
    %v805 = vld [vmem:[#allocation5 + $0x1628] sm:$0xff]
    %v806 = vld [vmem:[#allocation5 + $0x1630] sm:$0xff]
    %v807 = vld [vmem:[#allocation5 + $0x1638] sm:$0xff]
    %v808 = vld [vmem:[#allocation5 + $0x1640] sm:$0xff]
    %v809 = vld [vmem:[#allocation5 + $0x1648] sm:$0xff]
    %v810 = vld [vmem:[#allocation5 + $0x1650] sm:$0xff]
    %v811 = vld [vmem:[#allocation5 + $0x1658] sm:$0xff]
    %v812 = vld [vmem:[#allocation5 + $0x1660] sm:$0xff]
    %v813 = vld [vmem:[#allocation5 + $0x1668] sm:$0xff]
    %v814 = vld [vmem:[#allocation5 + $0x1670] sm:$0xff]
    %v815 = vld [vmem:[#allocation5 + $0x1678] sm:$0xff]
    %v816 = vld [vmem:[#allocation5 + $0x1680] sm:$0xff]
    %v817 = vld [vmem:[#allocation5 + $0x1688] sm:$0xff]
    %v818 = vld [vmem:[#allocation5 + $0x1690] sm:$0xff]
    %v819 = vld [vmem:[#allocation5 + $0x1698] sm:$0xff]
    %v820 = vld [vmem:[#allocation5 + $0x16a0] sm:$0xff]
    %v821 = vld [vmem:[#allocation5 + $0x16a8] sm:$0xff]
    %v822 = vld [vmem:[#allocation5 + $0x16b0] sm:$0xff]
    %v823 = vld [vmem:[#allocation5 + $0x16b8] sm:$0xff]
    %v824 = vld [vmem:[#allocation5 + $0x16c0] sm:$0xff]
    %v825 = vld [vmem:[#allocation5 + $0x16c8] sm:$0xff]
    %v826 = vld [vmem:[#allocation5 + $0x16d0] sm:$0xff]
    %v827 = vld [vmem:[#allocation5 + $0x16d8] sm:$0xff]
    %v828 = vld [vmem:[#allocation5 + $0x16e0] sm:$0xff]
    %v829 = vld [vmem:[#allocation5 + $0x16e8] sm:$0xff]
    %v830 = vld [vmem:[#allocation5 + $0x16f0] sm:$0xff]
    %v831 = vld [vmem:[#allocation5 + $0x16f8] sm:$0xff]
    %v832 = vld [vmem:[#allocation5 + $0x1700] sm:$0xff]
    %v833 = vld [vmem:[#allocation5 + $0x1708] sm:$0xff]
    %v834 = vld [vmem:[#allocation5 + $0x1710] sm:$0xff]
    %v835 = vld [vmem:[#allocation5 + $0x1718] sm:$0xff]
    %v836 = vld [vmem:[#allocation5 + $0x1720] sm:$0xff]
    %v837 = vld [vmem:[#allocation5 + $0x1728] sm:$0xff]
    %v838 = vld [vmem:[#allocation5 + $0x1730] sm:$0xff]
    %v839 = vld [vmem:[#allocation5 + $0x1738] sm:$0xff]
    %v840 = vld [vmem:[#allocation5 + $0x1740] sm:$0xff]
    %v841 = vld [vmem:[#allocation5 + $0x1748] sm:$0xff]
    %v842 = vld [vmem:[#allocation5 + $0x1750] sm:$0xff]
    %v843 = vld [vmem:[#allocation5 + $0x1758] sm:$0xff]
    %v844 = vld [vmem:[#allocation5 + $0x1760] sm:$0xff]
    %v845 = vld [vmem:[#allocation5 + $0x1768] sm:$0xff]
    %v846 = vld [vmem:[#allocation5 + $0x1770] sm:$0xff]
    %v847 = vld [vmem:[#allocation5 + $0x1778] sm:$0xff]
    %v848 = vld [vmem:[#allocation5 + $0x1780] sm:$0xff]
    %v849 = vld [vmem:[#allocation5 + $0x1788] sm:$0xff]
    %v850 = vld [vmem:[#allocation5 + $0x1790] sm:$0xff]
    %v851 = vld [vmem:[#allocation5 + $0x1798] sm:$0xff]
    %v852 = vld [vmem:[#allocation5 + $0x17a0] sm:$0xff]
    %v853 = vld [vmem:[#allocation5 + $0x17a8] sm:$0xff]
    %v854 = vld [vmem:[#allocation5 + $0x17b0] sm:$0xff]
    %v855 = vld [vmem:[#allocation5 + $0x17b8] sm:$0xff]
    %v856 = vld [vmem:[#allocation5 + $0x17c0] sm:$0xff]
    %v857 = vld [vmem:[#allocation5 + $0x17c8] sm:$0xff]
    %v858 = vld [vmem:[#allocation5 + $0x17d0] sm:$0xff]
    %v859 = vld [vmem:[#allocation5 + $0x17d8] sm:$0xff]
    %v860 = vld [vmem:[#allocation5 + $0x17e0] sm:$0xff]
    %v861 = vld [vmem:[#allocation5 + $0x17e8] sm:$0xff]
    %v862 = vld [vmem:[#allocation5 + $0x17f0] sm:$0xff]
    %v863 = vld [vmem:[#allocation5 + $0x17f8] sm:$0xff]
    %v864 = vld [vmem:[#allocation7] sm:$0xf]
    %v866 = vperm.slane %v864, 0
    %v867 = vperm.slane %v864, 1
    %v868 = vperm.slane %v864, 2
    %v869 = vperm.slane %v864, 3
    %875 = vst [vmem:[#allocation1] ss:$9 sm:$0xff] %v93
    %v876 = vld [vmem:[#allocation1] sm:$0xff]
    %v877 = vld [vmem:[#allocation1 + $0x9] sm:$0xff]
    %v878 = vld [vmem:[#allocation1 + $0x12] sm:$0xff]
    %v879 = vld [vmem:[#allocation1 + $0x1b] sm:$0xff]
    %v880 = vld [vmem:[#allocation1 + $0x24] sm:$0xff]
    %v881 = vld [vmem:[#allocation1 + $0x2d] sm:$0xff]
    %v882 = vld [vmem:[#allocation1 + $0x36] sm:$0xff]
    %v883 = vld [vmem:[#allocation1 + $0x3f] sm:$0xff]
    %885 = vst [vmem:[#allocation1] ss:$9 sm:$0xff] %v94
    %v886 = vld [vmem:[#allocation1] sm:$0xff]
    %v887 = vld [vmem:[#allocation1 + $0x9] sm:$0xff]
    %v888 = vld [vmem:[#allocation1 + $0x12] sm:$0xff]
    %v889 = vld [vmem:[#allocation1 + $0x1b] sm:$0xff]
    %v890 = vld [vmem:[#allocation1 + $0x24] sm:$0xff]
    %v891 = vld [vmem:[#allocation1 + $0x2d] sm:$0xff]
    %v892 = vld [vmem:[#allocation1 + $0x36] sm:$0xff]
    %v893 = vld [vmem:[#allocation1 + $0x3f] sm:$0xff]
    %895 = vst [vmem:[#allocation1] ss:$9 sm:$0xff] %v95
    %v896 = vld [vmem:[#allocation1] sm:$0xff]
    %v897 = vld [vmem:[#allocation1 + $0x9] sm:$0xff]
    %v898 = vld [vmem:[#allocation1 + $0x12] sm:$0xff]
    %v899 = vld [vmem:[#allocation1 + $0x1b] sm:$0xff]
    %v900 = vld [vmem:[#allocation1 + $0x24] sm:$0xff]
    %v901 = vld [vmem:[#allocation1 + $0x2d] sm:$0xff]
    %v902 = vld [vmem:[#allocation1 + $0x36] sm:$0xff]
    %v903 = vld [vmem:[#allocation1 + $0x3f] sm:$0xff]
    %v1696 = vunpack.c.l.b16 %v96
    %v1697 = vunpack.c.h.b16 %v96
    %v1698 = vunpack.c.l.b16 %v97
    %v1699 = vunpack.c.h.b16 %v97
    %v1700 = vunpack.c.l.b16 %v98
    %v1701 = vunpack.c.h.b16 %v98
    %v1702 = vunpack.c.l.b16 %v99
    %v1703 = vunpack.c.h.b16 %v99
    %v1704 = vunpack.c.l.b16 %v100
    %v1705 = vunpack.c.h.b16 %v100
    %v1706 = vunpack.c.l.b16 %v101
    %v1707 = vunpack.c.h.b16 %v101
    %v1708 = vunpack.c.l.b16 %v102
    %v1709 = vunpack.c.h.b16 %v102
    %v1710 = vunpack.c.l.b16 %v103
    %v1711 = vunpack.c.h.b16 %v103
    %v1712 = vunpack.c.l.b16 %v104
    %v1713 = vunpack.c.h.b16 %v104
    %v1714 = vunpack.c.l.b16 %v105
    %v1715 = vunpack.c.h.b16 %v105
    %v1716 = vunpack.c.l.b16 %v106
    %v1717 = vunpack.c.h.b16 %v106
    %v1718 = vunpack.c.l.b16 %v107
    %v1719 = vunpack.c.h.b16 %v107
    %v1720 = vunpack.c.l.b16 %v108
    %v1721 = vunpack.c.h.b16 %v108
    %v1722 = vunpack.c.l.b16 %v109
    %v1723 = vunpack.c.h.b16 %v109
    %v1724 = vunpack.c.l.b16 %v110
    %v1725 = vunpack.c.h.b16 %v110
    %v1726 = vunpack.c.l.b16 %v111
    %v1727 = vunpack.c.h.b16 %v111
    %v1728 = vunpack.c.l.b16 %v112
    %v1729 = vunpack.c.h.b16 %v112
    %v1730 = vunpack.c.l.b16 %v113
    %v1731 = vunpack.c.h.b16 %v113
    %v1732 = vunpack.c.l.b16 %v114
    %v1733 = vunpack.c.h.b16 %v114
    %v1734 = vunpack.c.l.b16 %v115
    %v1735 = vunpack.c.h.b16 %v115
    %v1736 = vunpack.c.l.b16 %v116
    %v1737 = vunpack.c.h.b16 %v116
    %v1738 = vunpack.c.l.b16 %v117
    %v1739 = vunpack.c.h.b16 %v117
    %v1740 = vunpack.c.l.b16 %v118
    %v1741 = vunpack.c.h.b16 %v118
    %v1742 = vunpack.c.l.b16 %v119
    %v1743 = vunpack.c.h.b16 %v119
    %v1744 = vunpack.c.l.b16 %v120
    %v1745 = vunpack.c.h.b16 %v120
    %v1746 = vunpack.c.l.b16 %v121
    %v1747 = vunpack.c.h.b16 %v121
    %v1748 = vunpack.c.l.b16 %v122
    %v1749 = vunpack.c.h.b16 %v122
    %v1750 = vunpack.c.l.b16 %v123
    %v1751 = vunpack.c.h.b16 %v123
    %v1752 = vunpack.c.l.b16 %v124
    %v1753 = vunpack.c.h.b16 %v124
    %v1754 = vunpack.c.l.b16 %v125
    %v1755 = vunpack.c.h.b16 %v125
    %v1756 = vunpack.c.l.b16 %v126
    %v1757 = vunpack.c.h.b16 %v126
    %v1758 = vunpack.c.l.b16 %v127
    %v1759 = vunpack.c.h.b16 %v127
    %v1760 = vunpack.c.l.b16 %v128
    %v1761 = vunpack.c.h.b16 %v128
    %v1762 = vunpack.c.l.b16 %v129
    %v1763 = vunpack.c.h.b16 %v129
    %v1764 = vunpack.c.l.b16 %v130
    %v1765 = vunpack.c.h.b16 %v130
    %v1766 = vunpack.c.l.b16 %v131
    %v1767 = vunpack.c.h.b16 %v131
    %v1768 = vunpack.c.l.b16 %v132
    %v1769 = vunpack.c.h.b16 %v132
    %v1770 = vunpack.c.l.b16 %v133
    %v1771 = vunpack.c.h.b16 %v133
    %v1772 = vunpack.c.l.b16 %v134
    %v1773 = vunpack.c.h.b16 %v134
    %v1774 = vunpack.c.l.b16 %v135
    %v1775 = vunpack.c.h.b16 %v135
    %v1776 = vunpack.c.l.b16 %v136
    %v1777 = vunpack.c.h.b16 %v136
    %v1778 = vunpack.c.l.b16 %v137
    %v1779 = vunpack.c.h.b16 %v137
    %v1780 = vunpack.c.l.b16 %v138
    %v1781 = vunpack.c.h.b16 %v138
    %v1782 = vunpack.c.l.b16 %v139
    %v1783 = vunpack.c.h.b16 %v139
    %v1784 = vunpack.c.l.b16 %v140
    %v1785 = vunpack.c.h.b16 %v140
    %v1786 = vunpack.c.l.b16 %v141
    %v1787 = vunpack.c.h.b16 %v141
    %v1788 = vunpack.c.l.b16 %v142
    %v1789 = vunpack.c.h.b16 %v142
    %v1790 = vunpack.c.l.b16 %v143
    %v1791 = vunpack.c.h.b16 %v143
    %v1792 = vunpack.c.l.b16 %v144
    %v1793 = vunpack.c.h.b16 %v144
    %v1794 = vunpack.c.l.b16 %v145
    %v1795 = vunpack.c.h.b16 %v145
    %v1796 = vunpack.c.l.b16 %v146
    %v1797 = vunpack.c.h.b16 %v146
    %v1798 = vunpack.c.l.b16 %v147
    %v1799 = vunpack.c.h.b16 %v147
    %v1800 = vunpack.c.l.b16 %v148
    %v1801 = vunpack.c.h.b16 %v148
    %v1802 = vunpack.c.l.b16 %v149
    %v1803 = vunpack.c.h.b16 %v149
    %v1804 = vunpack.c.l.b16 %v150
    %v1805 = vunpack.c.h.b16 %v150
    %v1806 = vunpack.c.l.b16 %v151
    %v1807 = vunpack.c.h.b16 %v151
    %v1808 = vunpack.c.l.b16 %v152
    %v1809 = vunpack.c.h.b16 %v152
    %v1810 = vunpack.c.l.b16 %v153
    %v1811 = vunpack.c.h.b16 %v153
    %v1812 = vunpack.c.l.b16 %v154
    %v1813 = vunpack.c.h.b16 %v154
    %v1814 = vunpack.c.l.b16 %v155
    %v1815 = vunpack.c.h.b16 %v155
    %v1816 = vunpack.c.l.b16 %v156
    %v1817 = vunpack.c.h.b16 %v156
    %v1818 = vunpack.c.l.b16 %v157
    %v1819 = vunpack.c.h.b16 %v157
    %v1820 = vunpack.c.l.b16 %v158
    %v1821 = vunpack.c.h.b16 %v158
    %v1822 = vunpack.c.l.b16 %v159
    %v1823 = vunpack.c.h.b16 %v159
    %v1824 = vunpack.c.l.b16 %v160
    %v1825 = vunpack.c.h.b16 %v160
    %v1826 = vunpack.c.l.b16 %v161
    %v1827 = vunpack.c.h.b16 %v161
    %v1828 = vunpack.c.l.b16 %v162
    %v1829 = vunpack.c.h.b16 %v162
    %v1830 = vunpack.c.l.b16 %v163
    %v1831 = vunpack.c.h.b16 %v163
    %v1832 = vunpack.c.l.b16 %v164
    %v1833 = vunpack.c.h.b16 %v164
    %v1834 = vunpack.c.l.b16 %v165
    %v1835 = vunpack.c.h.b16 %v165
    %v1836 = vunpack.c.l.b16 %v166
    %v1837 = vunpack.c.h.b16 %v166
    %v1838 = vunpack.c.l.b16 %v167
    %v1839 = vunpack.c.h.b16 %v167
    %v1840 = vunpack.c.l.b16 %v168
    %v1841 = vunpack.c.h.b16 %v168
    %v1842 = vunpack.c.l.b16 %v169
    %v1843 = vunpack.c.h.b16 %v169
    %v1844 = vunpack.c.l.b16 %v170
    %v1845 = vunpack.c.h.b16 %v170
    %v1846 = vunpack.c.l.b16 %v171
    %v1847 = vunpack.c.h.b16 %v171
    %v1848 = vunpack.c.l.b16 %v172
    %v1849 = vunpack.c.h.b16 %v172
    %v1850 = vunpack.c.l.b16 %v173
    %v1851 = vunpack.c.h.b16 %v173
    %v1852 = vunpack.c.l.b16 %v174
    %v1853 = vunpack.c.h.b16 %v174
    %v1854 = vunpack.c.l.b16 %v175
    %v1855 = vunpack.c.h.b16 %v175
    %v1856 = vunpack.c.l.b16 %v176
    %v1857 = vunpack.c.h.b16 %v176
    %v1858 = vunpack.c.l.b16 %v177
    %v1859 = vunpack.c.h.b16 %v177
    %v1860 = vunpack.c.l.b16 %v178
    %v1861 = vunpack.c.h.b16 %v178
    %v1862 = vunpack.c.l.b16 %v179
    %v1863 = vunpack.c.h.b16 %v179
    %v1864 = vunpack.c.l.b16 %v180
    %v1865 = vunpack.c.h.b16 %v180
    %v1866 = vunpack.c.l.b16 %v181
    %v1867 = vunpack.c.h.b16 %v181
    %v1868 = vunpack.c.l.b16 %v182
    %v1869 = vunpack.c.h.b16 %v182
    %v1870 = vunpack.c.l.b16 %v183
    %v1871 = vunpack.c.h.b16 %v183
    %v1872 = vunpack.c.l.b16 %v184
    %v1873 = vunpack.c.h.b16 %v184
    %v1874 = vunpack.c.l.b16 %v185
    %v1875 = vunpack.c.h.b16 %v185
    %v1876 = vunpack.c.l.b16 %v186
    %v1877 = vunpack.c.h.b16 %v186
    %v1878 = vunpack.c.l.b16 %v187
    %v1879 = vunpack.c.h.b16 %v187
    %v1880 = vunpack.c.l.b16 %v188
    %v1881 = vunpack.c.h.b16 %v188
    %v1882 = vunpack.c.l.b16 %v189
    %v1883 = vunpack.c.h.b16 %v189
    %v1884 = vunpack.c.l.b16 %v190
    %v1885 = vunpack.c.h.b16 %v190
    %v1886 = vunpack.c.l.b16 %v191
    %v1887 = vunpack.c.h.b16 %v191
    %v1888 = vunpack.c.l.b16 %v192
    %v1889 = vunpack.c.h.b16 %v192
    %v1890 = vunpack.c.l.b16 %v193
    %v1891 = vunpack.c.h.b16 %v193
    %v1892 = vunpack.c.l.b16 %v194
    %v1893 = vunpack.c.h.b16 %v194
    %v1894 = vunpack.c.l.b16 %v195
    %v1895 = vunpack.c.h.b16 %v195
    %v1896 = vunpack.c.l.b16 %v196
    %v1897 = vunpack.c.h.b16 %v196
    %v1898 = vunpack.c.l.b16 %v197
    %v1899 = vunpack.c.h.b16 %v197
    %v1900 = vunpack.c.l.b16 %v198
    %v1901 = vunpack.c.h.b16 %v198
    %v1902 = vunpack.c.l.b16 %v199
    %v1903 = vunpack.c.h.b16 %v199
    %v1904 = vunpack.c.l.b16 %v200
    %v1905 = vunpack.c.h.b16 %v200
    %v1906 = vunpack.c.l.b16 %v201
    %v1907 = vunpack.c.h.b16 %v201
    %v1908 = vunpack.c.l.b16 %v202
    %v1909 = vunpack.c.h.b16 %v202
    %v1910 = vunpack.c.l.b16 %v203
    %v1911 = vunpack.c.h.b16 %v203
    %v1912 = vunpack.c.l.b16 %v204
    %v1913 = vunpack.c.h.b16 %v204
    %v1914 = vunpack.c.l.b16 %v205
    %v1915 = vunpack.c.h.b16 %v205
    %v1916 = vunpack.c.l.b16 %v206
    %v1917 = vunpack.c.h.b16 %v206
    %v1918 = vunpack.c.l.b16 %v207
    %v1919 = vunpack.c.h.b16 %v207
    %v1920 = vunpack.c.l.b16 %v208
    %v1921 = vunpack.c.h.b16 %v208
    %v1922 = vunpack.c.l.b16 %v209
    %v1923 = vunpack.c.h.b16 %v209
    %v1924 = vunpack.c.l.b16 %v210
    %v1925 = vunpack.c.h.b16 %v210
    %v1926 = vunpack.c.l.b16 %v211
    %v1927 = vunpack.c.h.b16 %v211
    %v1928 = vunpack.c.l.b16 %v212
    %v1929 = vunpack.c.h.b16 %v212
    %v1930 = vunpack.c.l.b16 %v213
    %v1931 = vunpack.c.h.b16 %v213
    %v1932 = vunpack.c.l.b16 %v214
    %v1933 = vunpack.c.h.b16 %v214
    %v1934 = vunpack.c.l.b16 %v215
    %v1935 = vunpack.c.h.b16 %v215
    %v1936 = vunpack.c.l.b16 %v216
    %v1937 = vunpack.c.h.b16 %v216
    %v1938 = vunpack.c.l.b16 %v217
    %v1939 = vunpack.c.h.b16 %v217
    %v1940 = vunpack.c.l.b16 %v218
    %v1941 = vunpack.c.h.b16 %v218
    %v1942 = vunpack.c.l.b16 %v219
    %v1943 = vunpack.c.h.b16 %v219
    %v1944 = vunpack.c.l.b16 %v220
    %v1945 = vunpack.c.h.b16 %v220
    %v1946 = vunpack.c.l.b16 %v221
    %v1947 = vunpack.c.h.b16 %v221
    %v1948 = vunpack.c.l.b16 %v222
    %v1949 = vunpack.c.h.b16 %v222
    %v1950 = vunpack.c.l.b16 %v223
    %v1951 = vunpack.c.h.b16 %v223
    %v1952 = vunpack.c.l.b16 %v224
    %v1953 = vunpack.c.h.b16 %v224
    %v1954 = vunpack.c.l.b16 %v225
    %v1955 = vunpack.c.h.b16 %v225
    %v1956 = vunpack.c.l.b16 %v226
    %v1957 = vunpack.c.h.b16 %v226
    %v1958 = vunpack.c.l.b16 %v227
    %v1959 = vunpack.c.h.b16 %v227
    %v1960 = vunpack.c.l.b16 %v228
    %v1961 = vunpack.c.h.b16 %v228
    %v1962 = vunpack.c.l.b16 %v229
    %v1963 = vunpack.c.h.b16 %v229
    %v1964 = vunpack.c.l.b16 %v230
    %v1965 = vunpack.c.h.b16 %v230
    %v1966 = vunpack.c.l.b16 %v231
    %v1967 = vunpack.c.h.b16 %v231
    %v1968 = vunpack.c.l.b16 %v232
    %v1969 = vunpack.c.h.b16 %v232
    %v1970 = vunpack.c.l.b16 %v233
    %v1971 = vunpack.c.h.b16 %v233
    %v1972 = vunpack.c.l.b16 %v234
    %v1973 = vunpack.c.h.b16 %v234
    %v1974 = vunpack.c.l.b16 %v235
    %v1975 = vunpack.c.h.b16 %v235
    %v1976 = vunpack.c.l.b16 %v236
    %v1977 = vunpack.c.h.b16 %v236
    %v1978 = vunpack.c.l.b16 %v237
    %v1979 = vunpack.c.h.b16 %v237
    %v1980 = vunpack.c.l.b16 %v238
    %v1981 = vunpack.c.h.b16 %v238
    %v1982 = vunpack.c.l.b16 %v239
    %v1983 = vunpack.c.h.b16 %v239
    %v1984 = vunpack.c.l.b16 %v240
    %v1985 = vunpack.c.h.b16 %v240
    %v1986 = vunpack.c.l.b16 %v241
    %v1987 = vunpack.c.h.b16 %v241
    %v1988 = vunpack.c.l.b16 %v242
    %v1989 = vunpack.c.h.b16 %v242
    %v1990 = vunpack.c.l.b16 %v243
    %v1991 = vunpack.c.h.b16 %v243
    %v1992 = vunpack.c.l.b16 %v244
    %v1993 = vunpack.c.h.b16 %v244
    %v1994 = vunpack.c.l.b16 %v245
    %v1995 = vunpack.c.h.b16 %v245
    %v1996 = vunpack.c.l.b16 %v246
    %v1997 = vunpack.c.h.b16 %v246
    %v1998 = vunpack.c.l.b16 %v247
    %v1999 = vunpack.c.h.b16 %v247
    %v2000 = vunpack.c.l.b16 %v248
    %v2001 = vunpack.c.h.b16 %v248
    %v2002 = vunpack.c.l.b16 %v249
    %v2003 = vunpack.c.h.b16 %v249
    %v2004 = vunpack.c.l.b16 %v250
    %v2005 = vunpack.c.h.b16 %v250
    %v2006 = vunpack.c.l.b16 %v251
    %v2007 = vunpack.c.h.b16 %v251
    %v2008 = vunpack.c.l.b16 %v252
    %v2009 = vunpack.c.h.b16 %v252
    %v2010 = vunpack.c.l.b16 %v253
    %v2011 = vunpack.c.h.b16 %v253
    %v2012 = vunpack.c.l.b16 %v254
    %v2013 = vunpack.c.h.b16 %v254
    %v2014 = vunpack.c.l.b16 %v255
    %v2015 = vunpack.c.h.b16 %v255
    %v2016 = vunpack.c.l.b16 %v256
    %v2017 = vunpack.c.h.b16 %v256
    %v2018 = vunpack.c.l.b16 %v257
    %v2019 = vunpack.c.h.b16 %v257
    %v2020 = vunpack.c.l.b16 %v258
    %v2021 = vunpack.c.h.b16 %v258
    %v2022 = vunpack.c.l.b16 %v259
    %v2023 = vunpack.c.h.b16 %v259
    %v2024 = vunpack.c.l.b16 %v260
    %v2025 = vunpack.c.h.b16 %v260
    %v2026 = vunpack.c.l.b16 %v261
    %v2027 = vunpack.c.h.b16 %v261
    %v2028 = vunpack.c.l.b16 %v262
    %v2029 = vunpack.c.h.b16 %v262
    %v2030 = vunpack.c.l.b16 %v263
    %v2031 = vunpack.c.h.b16 %v263
    %v2032 = vunpack.c.l.b16 %v264
    %v2033 = vunpack.c.h.b16 %v264
    %v2034 = vunpack.c.l.b16 %v265
    %v2035 = vunpack.c.h.b16 %v265
    %v2036 = vunpack.c.l.b16 %v266
    %v2037 = vunpack.c.h.b16 %v266
    %v2038 = vunpack.c.l.b16 %v267
    %v2039 = vunpack.c.h.b16 %v267
    %v2040 = vunpack.c.l.b16 %v268
    %v2041 = vunpack.c.h.b16 %v268
    %v2042 = vunpack.c.l.b16 %v269
    %v2043 = vunpack.c.h.b16 %v269
    %v2044 = vunpack.c.l.b16 %v270
    %v2045 = vunpack.c.h.b16 %v270
    %v2046 = vunpack.c.l.b16 %v271
    %v2047 = vunpack.c.h.b16 %v271
    %v2048 = vunpack.c.l.b16 %v272
    %v2049 = vunpack.c.h.b16 %v272
    %v2050 = vunpack.c.l.b16 %v273
    %v2051 = vunpack.c.h.b16 %v273
    %v2052 = vunpack.c.l.b16 %v274
    %v2053 = vunpack.c.h.b16 %v274
    %v2054 = vunpack.c.l.b16 %v275
    %v2055 = vunpack.c.h.b16 %v275
    %v2056 = vunpack.c.l.b16 %v276
    %v2057 = vunpack.c.h.b16 %v276
    %v2058 = vunpack.c.l.b16 %v277
    %v2059 = vunpack.c.h.b16 %v277
    %v2060 = vunpack.c.l.b16 %v278
    %v2061 = vunpack.c.h.b16 %v278
    %v2062 = vunpack.c.l.b16 %v279
    %v2063 = vunpack.c.h.b16 %v279
    %v2064 = vunpack.c.l.b16 %v280
    %v2065 = vunpack.c.h.b16 %v280
    %v2066 = vunpack.c.l.b16 %v281
    %v2067 = vunpack.c.h.b16 %v281
    %v2068 = vunpack.c.l.b16 %v282
    %v2069 = vunpack.c.h.b16 %v282
    %v2070 = vunpack.c.l.b16 %v283
    %v2071 = vunpack.c.h.b16 %v283
    %v2072 = vunpack.c.l.b16 %v284
    %v2073 = vunpack.c.h.b16 %v284
    %v2074 = vunpack.c.l.b16 %v285
    %v2075 = vunpack.c.h.b16 %v285
    %v2076 = vunpack.c.l.b16 %v286
    %v2077 = vunpack.c.h.b16 %v286
    %v2078 = vunpack.c.l.b16 %v287
    %v2079 = vunpack.c.h.b16 %v287
    %v2080 = vunpack.c.l.b16 %v288
    %v2081 = vunpack.c.h.b16 %v288
    %v2082 = vunpack.c.l.b16 %v289
    %v2083 = vunpack.c.h.b16 %v289
    %v2084 = vunpack.c.l.b16 %v290
    %v2085 = vunpack.c.h.b16 %v290
    %v2086 = vunpack.c.l.b16 %v291
    %v2087 = vunpack.c.h.b16 %v291
    %v2088 = vunpack.c.l.b16 %v292
    %v2089 = vunpack.c.h.b16 %v292
    %v2090 = vunpack.c.l.b16 %v293
    %v2091 = vunpack.c.h.b16 %v293
    %v2092 = vunpack.c.l.b16 %v294
    %v2093 = vunpack.c.h.b16 %v294
    %v2094 = vunpack.c.l.b16 %v295
    %v2095 = vunpack.c.h.b16 %v295
    %v2096 = vunpack.c.l.b16 %v296
    %v2097 = vunpack.c.h.b16 %v296
    %v2098 = vunpack.c.l.b16 %v297
    %v2099 = vunpack.c.h.b16 %v297
    %v2100 = vunpack.c.l.b16 %v298
    %v2101 = vunpack.c.h.b16 %v298
    %v2102 = vunpack.c.l.b16 %v299
    %v2103 = vunpack.c.h.b16 %v299
    %v2104 = vunpack.c.l.b16 %v300
    %v2105 = vunpack.c.h.b16 %v300
    %v2106 = vunpack.c.l.b16 %v301
    %v2107 = vunpack.c.h.b16 %v301
    %v2108 = vunpack.c.l.b16 %v302
    %v2109 = vunpack.c.h.b16 %v302
    %v2110 = vunpack.c.l.b16 %v303
    %v2111 = vunpack.c.h.b16 %v303
    %v2112 = vunpack.c.l.b16 %v304
    %v2113 = vunpack.c.h.b16 %v304
    %v2114 = vunpack.c.l.b16 %v305
    %v2115 = vunpack.c.h.b16 %v305
    %v2116 = vunpack.c.l.b16 %v306
    %v2117 = vunpack.c.h.b16 %v306
    %v2118 = vunpack.c.l.b16 %v307
    %v2119 = vunpack.c.h.b16 %v307
    %v2120 = vunpack.c.l.b16 %v308
    %v2121 = vunpack.c.h.b16 %v308
    %v2122 = vunpack.c.l.b16 %v309
    %v2123 = vunpack.c.h.b16 %v309
    %v2124 = vunpack.c.l.b16 %v310
    %v2125 = vunpack.c.h.b16 %v310
    %v2126 = vunpack.c.l.b16 %v311
    %v2127 = vunpack.c.h.b16 %v311
    %v2128 = vunpack.c.l.b16 %v312
    %v2129 = vunpack.c.h.b16 %v312
    %v2130 = vunpack.c.l.b16 %v313
    %v2131 = vunpack.c.h.b16 %v313
    %v2132 = vunpack.c.l.b16 %v314
    %v2133 = vunpack.c.h.b16 %v314
    %v2134 = vunpack.c.l.b16 %v315
    %v2135 = vunpack.c.h.b16 %v315
    %v2136 = vunpack.c.l.b16 %v316
    %v2137 = vunpack.c.h.b16 %v316
    %v2138 = vunpack.c.l.b16 %v317
    %v2139 = vunpack.c.h.b16 %v317
    %v2140 = vunpack.c.l.b16 %v318
    %v2141 = vunpack.c.h.b16 %v318
    %v2142 = vunpack.c.l.b16 %v319
    %v2143 = vunpack.c.h.b16 %v319
    %v2144 = vunpack.c.l.b16 %v320
    %v2145 = vunpack.c.h.b16 %v320
    %v2146 = vunpack.c.l.b16 %v321
    %v2147 = vunpack.c.h.b16 %v321
    %v2148 = vunpack.c.l.b16 %v322
    %v2149 = vunpack.c.h.b16 %v322
    %v2150 = vunpack.c.l.b16 %v323
    %v2151 = vunpack.c.h.b16 %v323
    %v2152 = vunpack.c.l.b16 %v324
    %v2153 = vunpack.c.h.b16 %v324
    %v2154 = vunpack.c.l.b16 %v325
    %v2155 = vunpack.c.h.b16 %v325
    %v2156 = vunpack.c.l.b16 %v326
    %v2157 = vunpack.c.h.b16 %v326
    %v2158 = vunpack.c.l.b16 %v327
    %v2159 = vunpack.c.h.b16 %v327
    %v2160 = vunpack.c.l.b16 %v328
    %v2161 = vunpack.c.h.b16 %v328
    %v2162 = vunpack.c.l.b16 %v329
    %v2163 = vunpack.c.h.b16 %v329
    %v2164 = vunpack.c.l.b16 %v330
    %v2165 = vunpack.c.h.b16 %v330
    %v2166 = vunpack.c.l.b16 %v331
    %v2167 = vunpack.c.h.b16 %v331
    %v2168 = vunpack.c.l.b16 %v332
    %v2169 = vunpack.c.h.b16 %v332
    %v2170 = vunpack.c.l.b16 %v333
    %v2171 = vunpack.c.h.b16 %v333
    %v2172 = vunpack.c.l.b16 %v334
    %v2173 = vunpack.c.h.b16 %v334
    %v2174 = vunpack.c.l.b16 %v335
    %v2175 = vunpack.c.h.b16 %v335
    %v2176 = vunpack.c.l.b16 %v336
    %v2177 = vunpack.c.h.b16 %v336
    %v2178 = vunpack.c.l.b16 %v337
    %v2179 = vunpack.c.h.b16 %v337
    %v2180 = vunpack.c.l.b16 %v338
    %v2181 = vunpack.c.h.b16 %v338
    %v2182 = vunpack.c.l.b16 %v339
    %v2183 = vunpack.c.h.b16 %v339
    %v2184 = vunpack.c.l.b16 %v340
    %v2185 = vunpack.c.h.b16 %v340
    %v2186 = vunpack.c.l.b16 %v341
    %v2187 = vunpack.c.h.b16 %v341
    %v2188 = vunpack.c.l.b16 %v342
    %v2189 = vunpack.c.h.b16 %v342
    %v2190 = vunpack.c.l.b16 %v343
    %v2191 = vunpack.c.h.b16 %v343
    %v2192 = vunpack.c.l.b16 %v344
    %v2193 = vunpack.c.h.b16 %v344
    %v2194 = vunpack.c.l.b16 %v345
    %v2195 = vunpack.c.h.b16 %v345
    %v2196 = vunpack.c.l.b16 %v346
    %v2197 = vunpack.c.h.b16 %v346
    %v2198 = vunpack.c.l.b16 %v347
    %v2199 = vunpack.c.h.b16 %v347
    %v2200 = vunpack.c.l.b16 %v348
    %v2201 = vunpack.c.h.b16 %v348
    %v2202 = vunpack.c.l.b16 %v349
    %v2203 = vunpack.c.h.b16 %v349
    %v2204 = vunpack.c.l.b16 %v350
    %v2205 = vunpack.c.h.b16 %v350
    %v2206 = vunpack.c.l.b16 %v351
    %v2207 = vunpack.c.h.b16 %v351
    %v2208 = vunpack.c.l.b16 %v352
    %v2209 = vunpack.c.h.b16 %v352
    %v2210 = vunpack.c.l.b16 %v353
    %v2211 = vunpack.c.h.b16 %v353
    %v2212 = vunpack.c.l.b16 %v354
    %v2213 = vunpack.c.h.b16 %v354
    %v2214 = vunpack.c.l.b16 %v355
    %v2215 = vunpack.c.h.b16 %v355
    %v2216 = vunpack.c.l.b16 %v356
    %v2217 = vunpack.c.h.b16 %v356
    %v2218 = vunpack.c.l.b16 %v357
    %v2219 = vunpack.c.h.b16 %v357
    %v2220 = vunpack.c.l.b16 %v358
    %v2221 = vunpack.c.h.b16 %v358
    %v2222 = vunpack.c.l.b16 %v359
    %v2223 = vunpack.c.h.b16 %v359
    %v2224 = vunpack.c.l.b16 %v360
    %v2225 = vunpack.c.h.b16 %v360
    %v2226 = vunpack.c.l.b16 %v361
    %v2227 = vunpack.c.h.b16 %v361
    %v2228 = vunpack.c.l.b16 %v362
    %v2229 = vunpack.c.h.b16 %v362
    %v2230 = vunpack.c.l.b16 %v363
    %v2231 = vunpack.c.h.b16 %v363
    %v2232 = vunpack.c.l.b16 %v364
    %v2233 = vunpack.c.h.b16 %v364
    %v2234 = vunpack.c.l.b16 %v365
    %v2235 = vunpack.c.h.b16 %v365
    %v2236 = vunpack.c.l.b16 %v366
    %v2237 = vunpack.c.h.b16 %v366
    %v2238 = vunpack.c.l.b16 %v367
    %v2239 = vunpack.c.h.b16 %v367
    %v2240 = vunpack.c.l.b16 %v368
    %v2241 = vunpack.c.h.b16 %v368
    %v2242 = vunpack.c.l.b16 %v369
    %v2243 = vunpack.c.h.b16 %v369
    %v2244 = vunpack.c.l.b16 %v370
    %v2245 = vunpack.c.h.b16 %v370
    %v2246 = vunpack.c.l.b16 %v371
    %v2247 = vunpack.c.h.b16 %v371
    %v2248 = vunpack.c.l.b16 %v372
    %v2249 = vunpack.c.h.b16 %v372
    %v2250 = vunpack.c.l.b16 %v373
    %v2251 = vunpack.c.h.b16 %v373
    %v2252 = vunpack.c.l.b16 %v374
    %v2253 = vunpack.c.h.b16 %v374
    %v2254 = vunpack.c.l.b16 %v375
    %v2255 = vunpack.c.h.b16 %v375
    %v2256 = vunpack.c.l.b16 %v376
    %v2257 = vunpack.c.h.b16 %v376
    %v2258 = vunpack.c.l.b16 %v377
    %v2259 = vunpack.c.h.b16 %v377
    %v2260 = vunpack.c.l.b16 %v378
    %v2261 = vunpack.c.h.b16 %v378
    %v2262 = vunpack.c.l.b16 %v379
    %v2263 = vunpack.c.h.b16 %v379
    %v2264 = vunpack.c.l.b16 %v380
    %v2265 = vunpack.c.h.b16 %v380
    %v2266 = vunpack.c.l.b16 %v381
    %v2267 = vunpack.c.h.b16 %v381
    %v2268 = vunpack.c.l.b16 %v382
    %v2269 = vunpack.c.h.b16 %v382
    %v2270 = vunpack.c.l.b16 %v383
    %v2271 = vunpack.c.h.b16 %v383
    %v2272 = vunpack.c.l.b16 %v384
    %v2273 = vunpack.c.h.b16 %v384
    %v2274 = vunpack.c.l.b16 %v385
    %v2275 = vunpack.c.h.b16 %v385
    %v2276 = vunpack.c.l.b16 %v386
    %v2277 = vunpack.c.h.b16 %v386
    %v2278 = vunpack.c.l.b16 %v387
    %v2279 = vunpack.c.h.b16 %v387
    %v2280 = vunpack.c.l.b16 %v388
    %v2281 = vunpack.c.h.b16 %v388
    %v2282 = vunpack.c.l.b16 %v389
    %v2283 = vunpack.c.h.b16 %v389
    %v2284 = vunpack.c.l.b16 %v390
    %v2285 = vunpack.c.h.b16 %v390
    %v2286 = vunpack.c.l.b16 %v391
    %v2287 = vunpack.c.h.b16 %v391
    %v2288 = vunpack.c.l.b16 %v392
    %v2289 = vunpack.c.h.b16 %v392
    %v2290 = vunpack.c.l.b16 %v393
    %v2291 = vunpack.c.h.b16 %v393
    %v2292 = vunpack.c.l.b16 %v394
    %v2293 = vunpack.c.h.b16 %v394
    %v2294 = vunpack.c.l.b16 %v395
    %v2295 = vunpack.c.h.b16 %v395
    %v2296 = vunpack.c.l.b16 %v396
    %v2297 = vunpack.c.h.b16 %v396
    %v2298 = vunpack.c.l.b16 %v397
    %v2299 = vunpack.c.h.b16 %v397
    %v2300 = vunpack.c.l.b16 %v398
    %v2301 = vunpack.c.h.b16 %v398
    %v2302 = vunpack.c.l.b16 %v399
    %v2303 = vunpack.c.h.b16 %v399
    %v2304 = vunpack.c.l.b16 %v400
    %v2305 = vunpack.c.h.b16 %v400
    %v2306 = vunpack.c.l.b16 %v401
    %v2307 = vunpack.c.h.b16 %v401
    %v2308 = vunpack.c.l.b16 %v402
    %v2309 = vunpack.c.h.b16 %v402
    %v2310 = vunpack.c.l.b16 %v403
    %v2311 = vunpack.c.h.b16 %v403
    %v2312 = vunpack.c.l.b16 %v404
    %v2313 = vunpack.c.h.b16 %v404
    %v2314 = vunpack.c.l.b16 %v405
    %v2315 = vunpack.c.h.b16 %v405
    %v2316 = vunpack.c.l.b16 %v406
    %v2317 = vunpack.c.h.b16 %v406
    %v2318 = vunpack.c.l.b16 %v407
    %v2319 = vunpack.c.h.b16 %v407
    %v2320 = vunpack.c.l.b16 %v408
    %v2321 = vunpack.c.h.b16 %v408
    %v2322 = vunpack.c.l.b16 %v409
    %v2323 = vunpack.c.h.b16 %v409
    %v2324 = vunpack.c.l.b16 %v410
    %v2325 = vunpack.c.h.b16 %v410
    %v2326 = vunpack.c.l.b16 %v411
    %v2327 = vunpack.c.h.b16 %v411
    %v2328 = vunpack.c.l.b16 %v412
    %v2329 = vunpack.c.h.b16 %v412
    %v2330 = vunpack.c.l.b16 %v413
    %v2331 = vunpack.c.h.b16 %v413
    %v2332 = vunpack.c.l.b16 %v414
    %v2333 = vunpack.c.h.b16 %v414
    %v2334 = vunpack.c.l.b16 %v415
    %v2335 = vunpack.c.h.b16 %v415
    %v2336 = vunpack.c.l.b16 %v416
    %v2337 = vunpack.c.h.b16 %v416
    %v2338 = vunpack.c.l.b16 %v417
    %v2339 = vunpack.c.h.b16 %v417
    %v2340 = vunpack.c.l.b16 %v418
    %v2341 = vunpack.c.h.b16 %v418
    %v2342 = vunpack.c.l.b16 %v419
    %v2343 = vunpack.c.h.b16 %v419
    %v2344 = vunpack.c.l.b16 %v420
    %v2345 = vunpack.c.h.b16 %v420
    %v2346 = vunpack.c.l.b16 %v421
    %v2347 = vunpack.c.h.b16 %v421
    %v2348 = vunpack.c.l.b16 %v422
    %v2349 = vunpack.c.h.b16 %v422
    %v2350 = vunpack.c.l.b16 %v423
    %v2351 = vunpack.c.h.b16 %v423
    %v2352 = vunpack.c.l.b16 %v424
    %v2353 = vunpack.c.h.b16 %v424
    %v2354 = vunpack.c.l.b16 %v425
    %v2355 = vunpack.c.h.b16 %v425
    %v2356 = vunpack.c.l.b16 %v426
    %v2357 = vunpack.c.h.b16 %v426
    %v2358 = vunpack.c.l.b16 %v427
    %v2359 = vunpack.c.h.b16 %v427
    %v2360 = vunpack.c.l.b16 %v428
    %v2361 = vunpack.c.h.b16 %v428
    %v2362 = vunpack.c.l.b16 %v429
    %v2363 = vunpack.c.h.b16 %v429
    %v2364 = vunpack.c.l.b16 %v430
    %v2365 = vunpack.c.h.b16 %v430
    %v2366 = vunpack.c.l.b16 %v431
    %v2367 = vunpack.c.h.b16 %v431
    %v2368 = vunpack.c.l.b16 %v432
    %v2369 = vunpack.c.h.b16 %v432
    %v2370 = vunpack.c.l.b16 %v433
    %v2371 = vunpack.c.h.b16 %v433
    %v2372 = vunpack.c.l.b16 %v434
    %v2373 = vunpack.c.h.b16 %v434
    %v2374 = vunpack.c.l.b16 %v435
    %v2375 = vunpack.c.h.b16 %v435
    %v2376 = vunpack.c.l.b16 %v436
    %v2377 = vunpack.c.h.b16 %v436
    %v2378 = vunpack.c.l.b16 %v437
    %v2379 = vunpack.c.h.b16 %v437
    %v2380 = vunpack.c.l.b16 %v438
    %v2381 = vunpack.c.h.b16 %v438
    %v2382 = vunpack.c.l.b16 %v439
    %v2383 = vunpack.c.h.b16 %v439
    %v2384 = vunpack.c.l.b16 %v440
    %v2385 = vunpack.c.h.b16 %v440
    %v2386 = vunpack.c.l.b16 %v441
    %v2387 = vunpack.c.h.b16 %v441
    %v2388 = vunpack.c.l.b16 %v442
    %v2389 = vunpack.c.h.b16 %v442
    %v2390 = vunpack.c.l.b16 %v443
    %v2391 = vunpack.c.h.b16 %v443
    %v2392 = vunpack.c.l.b16 %v444
    %v2393 = vunpack.c.h.b16 %v444
    %v2394 = vunpack.c.l.b16 %v445
    %v2395 = vunpack.c.h.b16 %v445
    %v2396 = vunpack.c.l.b16 %v446
    %v2397 = vunpack.c.h.b16 %v446
    %v2398 = vunpack.c.l.b16 %v447
    %v2399 = vunpack.c.h.b16 %v447
    %v2400 = vunpack.c.l.b16 %v448
    %v2401 = vunpack.c.h.b16 %v448
    %v2402 = vunpack.c.l.b16 %v449
    %v2403 = vunpack.c.h.b16 %v449
    %v2404 = vunpack.c.l.b16 %v450
    %v2405 = vunpack.c.h.b16 %v450
    %v2406 = vunpack.c.l.b16 %v451
    %v2407 = vunpack.c.h.b16 %v451
    %v2408 = vunpack.c.l.b16 %v452
    %v2409 = vunpack.c.h.b16 %v452
    %v2410 = vunpack.c.l.b16 %v453
    %v2411 = vunpack.c.h.b16 %v453
    %v2412 = vunpack.c.l.b16 %v454
    %v2413 = vunpack.c.h.b16 %v454
    %v2414 = vunpack.c.l.b16 %v455
    %v2415 = vunpack.c.h.b16 %v455
    %v2416 = vunpack.c.l.b16 %v456
    %v2417 = vunpack.c.h.b16 %v456
    %v2418 = vunpack.c.l.b16 %v457
    %v2419 = vunpack.c.h.b16 %v457
    %v2420 = vunpack.c.l.b16 %v458
    %v2421 = vunpack.c.h.b16 %v458
    %v2422 = vunpack.c.l.b16 %v459
    %v2423 = vunpack.c.h.b16 %v459
    %v2424 = vunpack.c.l.b16 %v460
    %v2425 = vunpack.c.h.b16 %v460
    %v2426 = vunpack.c.l.b16 %v461
    %v2427 = vunpack.c.h.b16 %v461
    %v2428 = vunpack.c.l.b16 %v462
    %v2429 = vunpack.c.h.b16 %v462
    %v2430 = vunpack.c.l.b16 %v463
    %v2431 = vunpack.c.h.b16 %v463
    %v2432 = vunpack.c.l.b16 %v464
    %v2433 = vunpack.c.h.b16 %v464
    %v2434 = vunpack.c.l.b16 %v465
    %v2435 = vunpack.c.h.b16 %v465
    %v2436 = vunpack.c.l.b16 %v466
    %v2437 = vunpack.c.h.b16 %v466
    %v2438 = vunpack.c.l.b16 %v467
    %v2439 = vunpack.c.h.b16 %v467
    %v2440 = vunpack.c.l.b16 %v468
    %v2441 = vunpack.c.h.b16 %v468
    %v2442 = vunpack.c.l.b16 %v469
    %v2443 = vunpack.c.h.b16 %v469
    %v2444 = vunpack.c.l.b16 %v470
    %v2445 = vunpack.c.h.b16 %v470
    %v2446 = vunpack.c.l.b16 %v471
    %v2447 = vunpack.c.h.b16 %v471
    %v2448 = vunpack.c.l.b16 %v472
    %v2449 = vunpack.c.h.b16 %v472
    %v2450 = vunpack.c.l.b16 %v473
    %v2451 = vunpack.c.h.b16 %v473
    %v2452 = vunpack.c.l.b16 %v474
    %v2453 = vunpack.c.h.b16 %v474
    %v2454 = vunpack.c.l.b16 %v475
    %v2455 = vunpack.c.h.b16 %v475
    %v2456 = vunpack.c.l.b16 %v476
    %v2457 = vunpack.c.h.b16 %v476
    %v2458 = vunpack.c.l.b16 %v477
    %v2459 = vunpack.c.h.b16 %v477
    %v2460 = vunpack.c.l.b16 %v478
    %v2461 = vunpack.c.h.b16 %v478
    %v2462 = vunpack.c.l.b16 %v479
    %v2463 = vunpack.c.h.b16 %v479
    %v2464 = vunpack.c.l.b16 %v480
    %v2465 = vunpack.c.h.b16 %v480
    %v2466 = vunpack.c.l.b16 %v481
    %v2467 = vunpack.c.h.b16 %v481
    %v2468 = vunpack.c.l.b16 %v482
    %v2469 = vunpack.c.h.b16 %v482
    %v2470 = vunpack.c.l.b16 %v483
    %v2471 = vunpack.c.h.b16 %v483
    %v2472 = vunpack.c.l.b16 %v484
    %v2473 = vunpack.c.h.b16 %v484
    %v2474 = vunpack.c.l.b16 %v485
    %v2475 = vunpack.c.h.b16 %v485
    %v2476 = vunpack.c.l.b16 %v486
    %v2477 = vunpack.c.h.b16 %v486
    %v2478 = vunpack.c.l.b16 %v487
    %v2479 = vunpack.c.h.b16 %v487
    %v2480 = vunpack.c.l.b16 %v488
    %v2481 = vunpack.c.h.b16 %v488
    %v2482 = vunpack.c.l.b16 %v489
    %v2483 = vunpack.c.h.b16 %v489
    %v2484 = vunpack.c.l.b16 %v490
    %v2485 = vunpack.c.h.b16 %v490
    %v2486 = vunpack.c.l.b16 %v491
    %v2487 = vunpack.c.h.b16 %v491
    %v2488 = vunpack.c.l.b16 %v492
    %v2489 = vunpack.c.h.b16 %v492
    %v2490 = vunpack.c.l.b16 %v493
    %v2491 = vunpack.c.h.b16 %v493
    %v2492 = vunpack.c.l.b16 %v494
    %v2493 = vunpack.c.h.b16 %v494
    %v2494 = vunpack.c.l.b16 %v495
    %v2495 = vunpack.c.h.b16 %v495
    %v2496 = vunpack.c.l.b16 %v496
    %v2497 = vunpack.c.h.b16 %v496
    %v2498 = vunpack.c.l.b16 %v497
    %v2499 = vunpack.c.h.b16 %v497
    %v2500 = vunpack.c.l.b16 %v498
    %v2501 = vunpack.c.h.b16 %v498
    %v2502 = vunpack.c.l.b16 %v499
    %v2503 = vunpack.c.h.b16 %v499
    %v2504 = vunpack.c.l.b16 %v500
    %v2505 = vunpack.c.h.b16 %v500
    %v2506 = vunpack.c.l.b16 %v501
    %v2507 = vunpack.c.h.b16 %v501
    %v2508 = vunpack.c.l.b16 %v502
    %v2509 = vunpack.c.h.b16 %v502
    %v2510 = vunpack.c.l.b16 %v503
    %v2511 = vunpack.c.h.b16 %v503
    %v2512 = vunpack.c.l.b16 %v504
    %v2513 = vunpack.c.h.b16 %v504
    %v2514 = vunpack.c.l.b16 %v505
    %v2515 = vunpack.c.h.b16 %v505
    %v2516 = vunpack.c.l.b16 %v506
    %v2517 = vunpack.c.h.b16 %v506
    %v2518 = vunpack.c.l.b16 %v507
    %v2519 = vunpack.c.h.b16 %v507
    %v2520 = vunpack.c.l.b16 %v508
    %v2521 = vunpack.c.h.b16 %v508
    %v2522 = vunpack.c.l.b16 %v509
    %v2523 = vunpack.c.h.b16 %v509
    %v2524 = vunpack.c.l.b16 %v510
    %v2525 = vunpack.c.h.b16 %v510
    %v2526 = vunpack.c.l.b16 %v511
    %v2527 = vunpack.c.h.b16 %v511
    %v2528 = vunpack.c.l.b16 %v512
    %v2529 = vunpack.c.h.b16 %v512
    %v2530 = vunpack.c.l.b16 %v513
    %v2531 = vunpack.c.h.b16 %v513
    %v2532 = vunpack.c.l.b16 %v514
    %v2533 = vunpack.c.h.b16 %v514
    %v2534 = vunpack.c.l.b16 %v515
    %v2535 = vunpack.c.h.b16 %v515
    %v2536 = vunpack.c.l.b16 %v516
    %v2537 = vunpack.c.h.b16 %v516
    %v2538 = vunpack.c.l.b16 %v517
    %v2539 = vunpack.c.h.b16 %v517
    %v2540 = vunpack.c.l.b16 %v518
    %v2541 = vunpack.c.h.b16 %v518
    %v2542 = vunpack.c.l.b16 %v519
    %v2543 = vunpack.c.h.b16 %v519
    %v2544 = vunpack.c.l.b16 %v520
    %v2545 = vunpack.c.h.b16 %v520
    %v2546 = vunpack.c.l.b16 %v521
    %v2547 = vunpack.c.h.b16 %v521
    %v2548 = vunpack.c.l.b16 %v522
    %v2549 = vunpack.c.h.b16 %v522
    %v2550 = vunpack.c.l.b16 %v523
    %v2551 = vunpack.c.h.b16 %v523
    %v2552 = vunpack.c.l.b16 %v524
    %v2553 = vunpack.c.h.b16 %v524
    %v2554 = vunpack.c.l.b16 %v525
    %v2555 = vunpack.c.h.b16 %v525
    %v2556 = vunpack.c.l.b16 %v526
    %v2557 = vunpack.c.h.b16 %v526
    %v2558 = vunpack.c.l.b16 %v527
    %v2559 = vunpack.c.h.b16 %v527
    %v2560 = vunpack.c.l.b16 %v528
    %v2561 = vunpack.c.h.b16 %v528
    %v2562 = vunpack.c.l.b16 %v529
    %v2563 = vunpack.c.h.b16 %v529
    %v2564 = vunpack.c.l.b16 %v530
    %v2565 = vunpack.c.h.b16 %v530
    %v2566 = vunpack.c.l.b16 %v531
    %v2567 = vunpack.c.h.b16 %v531
    %v2568 = vunpack.c.l.b16 %v532
    %v2569 = vunpack.c.h.b16 %v532
    %v2570 = vunpack.c.l.b16 %v533
    %v2571 = vunpack.c.h.b16 %v533
    %v2572 = vunpack.c.l.b16 %v534
    %v2573 = vunpack.c.h.b16 %v534
    %v2574 = vunpack.c.l.b16 %v535
    %v2575 = vunpack.c.h.b16 %v535
    %v2576 = vunpack.c.l.b16 %v536
    %v2577 = vunpack.c.h.b16 %v536
    %v2578 = vunpack.c.l.b16 %v537
    %v2579 = vunpack.c.h.b16 %v537
    %v2580 = vunpack.c.l.b16 %v538
    %v2581 = vunpack.c.h.b16 %v538
    %v2582 = vunpack.c.l.b16 %v539
    %v2583 = vunpack.c.h.b16 %v539
    %v2584 = vunpack.c.l.b16 %v540
    %v2585 = vunpack.c.h.b16 %v540
    %v2586 = vunpack.c.l.b16 %v541
    %v2587 = vunpack.c.h.b16 %v541
    %v2588 = vunpack.c.l.b16 %v542
    %v2589 = vunpack.c.h.b16 %v542
    %v2590 = vunpack.c.l.b16 %v543
    %v2591 = vunpack.c.h.b16 %v543
    %v2592 = vunpack.c.l.b16 %v544
    %v2593 = vunpack.c.h.b16 %v544
    %v2594 = vunpack.c.l.b16 %v545
    %v2595 = vunpack.c.h.b16 %v545
    %v2596 = vunpack.c.l.b16 %v546
    %v2597 = vunpack.c.h.b16 %v546
    %v2598 = vunpack.c.l.b16 %v547
    %v2599 = vunpack.c.h.b16 %v547
    %v2600 = vunpack.c.l.b16 %v548
    %v2601 = vunpack.c.h.b16 %v548
    %v2602 = vunpack.c.l.b16 %v549
    %v2603 = vunpack.c.h.b16 %v549
    %v2604 = vunpack.c.l.b16 %v550
    %v2605 = vunpack.c.h.b16 %v550
    %v2606 = vunpack.c.l.b16 %v551
    %v2607 = vunpack.c.h.b16 %v551
    %v2608 = vunpack.c.l.b16 %v552
    %v2609 = vunpack.c.h.b16 %v552
    %v2610 = vunpack.c.l.b16 %v553
    %v2611 = vunpack.c.h.b16 %v553
    %v2612 = vunpack.c.l.b16 %v554
    %v2613 = vunpack.c.h.b16 %v554
    %v2614 = vunpack.c.l.b16 %v555
    %v2615 = vunpack.c.h.b16 %v555
    %v2616 = vunpack.c.l.b16 %v556
    %v2617 = vunpack.c.h.b16 %v556
    %v2618 = vunpack.c.l.b16 %v557
    %v2619 = vunpack.c.h.b16 %v557
    %v2620 = vunpack.c.l.b16 %v558
    %v2621 = vunpack.c.h.b16 %v558
    %v2622 = vunpack.c.l.b16 %v559
    %v2623 = vunpack.c.h.b16 %v559
    %v2624 = vunpack.c.l.b16 %v560
    %v2625 = vunpack.c.h.b16 %v560
    %v2626 = vunpack.c.l.b16 %v561
    %v2627 = vunpack.c.h.b16 %v561
    %v2628 = vunpack.c.l.b16 %v562
    %v2629 = vunpack.c.h.b16 %v562
    %v2630 = vunpack.c.l.b16 %v563
    %v2631 = vunpack.c.h.b16 %v563
    %v2632 = vunpack.c.l.b16 %v564
    %v2633 = vunpack.c.h.b16 %v564
    %v2634 = vunpack.c.l.b16 %v565
    %v2635 = vunpack.c.h.b16 %v565
    %v2636 = vunpack.c.l.b16 %v566
    %v2637 = vunpack.c.h.b16 %v566
    %v2638 = vunpack.c.l.b16 %v567
    %v2639 = vunpack.c.h.b16 %v567
    %v2640 = vunpack.c.l.b16 %v568
    %v2641 = vunpack.c.h.b16 %v568
    %v2642 = vunpack.c.l.b16 %v569
    %v2643 = vunpack.c.h.b16 %v569
    %v2644 = vunpack.c.l.b16 %v570
    %v2645 = vunpack.c.h.b16 %v570
    %v2646 = vunpack.c.l.b16 %v571
    %v2647 = vunpack.c.h.b16 %v571
    %v2648 = vunpack.c.l.b16 %v572
    %v2649 = vunpack.c.h.b16 %v572
    %v2650 = vunpack.c.l.b16 %v573
    %v2651 = vunpack.c.h.b16 %v573
    %v2652 = vunpack.c.l.b16 %v574
    %v2653 = vunpack.c.h.b16 %v574
    %v2654 = vunpack.c.l.b16 %v575
    %v2655 = vunpack.c.h.b16 %v575
    %v2656 = vunpack.c.l.b16 %v576
    %v2657 = vunpack.c.h.b16 %v576
    %v2658 = vunpack.c.l.b16 %v577
    %v2659 = vunpack.c.h.b16 %v577
    %v2660 = vunpack.c.l.b16 %v578
    %v2661 = vunpack.c.h.b16 %v578
    %v2662 = vunpack.c.l.b16 %v579
    %v2663 = vunpack.c.h.b16 %v579
    %v2664 = vunpack.c.l.b16 %v580
    %v2665 = vunpack.c.h.b16 %v580
    %v2666 = vunpack.c.l.b16 %v581
    %v2667 = vunpack.c.h.b16 %v581
    %v2668 = vunpack.c.l.b16 %v582
    %v2669 = vunpack.c.h.b16 %v582
    %v2670 = vunpack.c.l.b16 %v583
    %v2671 = vunpack.c.h.b16 %v583
    %v2672 = vunpack.c.l.b16 %v584
    %v2673 = vunpack.c.h.b16 %v584
    %v2674 = vunpack.c.l.b16 %v585
    %v2675 = vunpack.c.h.b16 %v585
    %v2676 = vunpack.c.l.b16 %v586
    %v2677 = vunpack.c.h.b16 %v586
    %v2678 = vunpack.c.l.b16 %v587
    %v2679 = vunpack.c.h.b16 %v587
    %v2680 = vunpack.c.l.b16 %v588
    %v2681 = vunpack.c.h.b16 %v588
    %v2682 = vunpack.c.l.b16 %v589
    %v2683 = vunpack.c.h.b16 %v589
    %v2684 = vunpack.c.l.b16 %v590
    %v2685 = vunpack.c.h.b16 %v590
    %v2686 = vunpack.c.l.b16 %v591
    %v2687 = vunpack.c.h.b16 %v591
    %v2688 = vunpack.c.l.b16 %v592
    %v2689 = vunpack.c.h.b16 %v592
    %v2690 = vunpack.c.l.b16 %v593
    %v2691 = vunpack.c.h.b16 %v593
    %v2692 = vunpack.c.l.b16 %v594
    %v2693 = vunpack.c.h.b16 %v594
    %v2694 = vunpack.c.l.b16 %v595
    %v2695 = vunpack.c.h.b16 %v595
    %v2696 = vunpack.c.l.b16 %v596
    %v2697 = vunpack.c.h.b16 %v596
    %v2698 = vunpack.c.l.b16 %v597
    %v2699 = vunpack.c.h.b16 %v597
    %v2700 = vunpack.c.l.b16 %v598
    %v2701 = vunpack.c.h.b16 %v598
    %v2702 = vunpack.c.l.b16 %v599
    %v2703 = vunpack.c.h.b16 %v599
    %v2704 = vunpack.c.l.b16 %v600
    %v2705 = vunpack.c.h.b16 %v600
    %v2706 = vunpack.c.l.b16 %v601
    %v2707 = vunpack.c.h.b16 %v601
    %v2708 = vunpack.c.l.b16 %v602
    %v2709 = vunpack.c.h.b16 %v602
    %v2710 = vunpack.c.l.b16 %v603
    %v2711 = vunpack.c.h.b16 %v603
    %v2712 = vunpack.c.l.b16 %v604
    %v2713 = vunpack.c.h.b16 %v604
    %v2714 = vunpack.c.l.b16 %v605
    %v2715 = vunpack.c.h.b16 %v605
    %v2716 = vunpack.c.l.b16 %v606
    %v2717 = vunpack.c.h.b16 %v606
    %v2718 = vunpack.c.l.b16 %v607
    %v2719 = vunpack.c.h.b16 %v607
    %v2720 = vunpack.c.l.b16 %v608
    %v2721 = vunpack.c.h.b16 %v608
    %v2722 = vunpack.c.l.b16 %v609
    %v2723 = vunpack.c.h.b16 %v609
    %v2724 = vunpack.c.l.b16 %v610
    %v2725 = vunpack.c.h.b16 %v610
    %v2726 = vunpack.c.l.b16 %v611
    %v2727 = vunpack.c.h.b16 %v611
    %v2728 = vunpack.c.l.b16 %v612
    %v2729 = vunpack.c.h.b16 %v612
    %v2730 = vunpack.c.l.b16 %v613
    %v2731 = vunpack.c.h.b16 %v613
    %v2732 = vunpack.c.l.b16 %v614
    %v2733 = vunpack.c.h.b16 %v614
    %v2734 = vunpack.c.l.b16 %v615
    %v2735 = vunpack.c.h.b16 %v615
    %v2736 = vunpack.c.l.b16 %v616
    %v2737 = vunpack.c.h.b16 %v616
    %v2738 = vunpack.c.l.b16 %v617
    %v2739 = vunpack.c.h.b16 %v617
    %v2740 = vunpack.c.l.b16 %v618
    %v2741 = vunpack.c.h.b16 %v618
    %v2742 = vunpack.c.l.b16 %v619
    %v2743 = vunpack.c.h.b16 %v619
    %v2744 = vunpack.c.l.b16 %v620
    %v2745 = vunpack.c.h.b16 %v620
    %v2746 = vunpack.c.l.b16 %v621
    %v2747 = vunpack.c.h.b16 %v621
    %v2748 = vunpack.c.l.b16 %v622
    %v2749 = vunpack.c.h.b16 %v622
    %v2750 = vunpack.c.l.b16 %v623
    %v2751 = vunpack.c.h.b16 %v623
    %v2752 = vunpack.c.l.b16 %v624
    %v2753 = vunpack.c.h.b16 %v624
    %v2754 = vunpack.c.l.b16 %v625
    %v2755 = vunpack.c.h.b16 %v625
    %v2756 = vunpack.c.l.b16 %v626
    %v2757 = vunpack.c.h.b16 %v626
    %v2758 = vunpack.c.l.b16 %v627
    %v2759 = vunpack.c.h.b16 %v627
    %v2760 = vunpack.c.l.b16 %v628
    %v2761 = vunpack.c.h.b16 %v628
    %v2762 = vunpack.c.l.b16 %v629
    %v2763 = vunpack.c.h.b16 %v629
    %v2764 = vunpack.c.l.b16 %v630
    %v2765 = vunpack.c.h.b16 %v630
    %v2766 = vunpack.c.l.b16 %v631
    %v2767 = vunpack.c.h.b16 %v631
    %v2768 = vunpack.c.l.b16 %v632
    %v2769 = vunpack.c.h.b16 %v632
    %v2770 = vunpack.c.l.b16 %v633
    %v2771 = vunpack.c.h.b16 %v633
    %v2772 = vunpack.c.l.b16 %v634
    %v2773 = vunpack.c.h.b16 %v634
    %v2774 = vunpack.c.l.b16 %v635
    %v2775 = vunpack.c.h.b16 %v635
    %v2776 = vunpack.c.l.b16 %v636
    %v2777 = vunpack.c.h.b16 %v636
    %v2778 = vunpack.c.l.b16 %v637
    %v2779 = vunpack.c.h.b16 %v637
    %v2780 = vunpack.c.l.b16 %v638
    %v2781 = vunpack.c.h.b16 %v638
    %v2782 = vunpack.c.l.b16 %v639
    %v2783 = vunpack.c.h.b16 %v639
    %v2784 = vunpack.c.l.b16 %v640
    %v2785 = vunpack.c.h.b16 %v640
    %v2786 = vunpack.c.l.b16 %v641
    %v2787 = vunpack.c.h.b16 %v641
    %v2788 = vunpack.c.l.b16 %v642
    %v2789 = vunpack.c.h.b16 %v642
    %v2790 = vunpack.c.l.b16 %v643
    %v2791 = vunpack.c.h.b16 %v643
    %v2792 = vunpack.c.l.b16 %v644
    %v2793 = vunpack.c.h.b16 %v644
    %v2794 = vunpack.c.l.b16 %v645
    %v2795 = vunpack.c.h.b16 %v645
    %v2796 = vunpack.c.l.b16 %v646
    %v2797 = vunpack.c.h.b16 %v646
    %v2798 = vunpack.c.l.b16 %v647
    %v2799 = vunpack.c.h.b16 %v647
    %v2800 = vunpack.c.l.b16 %v648
    %v2801 = vunpack.c.h.b16 %v648
    %v2802 = vunpack.c.l.b16 %v649
    %v2803 = vunpack.c.h.b16 %v649
    %v2804 = vunpack.c.l.b16 %v650
    %v2805 = vunpack.c.h.b16 %v650
    %v2806 = vunpack.c.l.b16 %v651
    %v2807 = vunpack.c.h.b16 %v651
    %v2808 = vunpack.c.l.b16 %v652
    %v2809 = vunpack.c.h.b16 %v652
    %v2810 = vunpack.c.l.b16 %v653
    %v2811 = vunpack.c.h.b16 %v653
    %v2812 = vunpack.c.l.b16 %v654
    %v2813 = vunpack.c.h.b16 %v654
    %v2814 = vunpack.c.l.b16 %v655
    %v2815 = vunpack.c.h.b16 %v655
    %v2816 = vunpack.c.l.b16 %v656
    %v2817 = vunpack.c.h.b16 %v656
    %v2818 = vunpack.c.l.b16 %v657
    %v2819 = vunpack.c.h.b16 %v657
    %v2820 = vunpack.c.l.b16 %v658
    %v2821 = vunpack.c.h.b16 %v658
    %v2822 = vunpack.c.l.b16 %v659
    %v2823 = vunpack.c.h.b16 %v659
    %v2824 = vunpack.c.l.b16 %v660
    %v2825 = vunpack.c.h.b16 %v660
    %v2826 = vunpack.c.l.b16 %v661
    %v2827 = vunpack.c.h.b16 %v661
    %v2828 = vunpack.c.l.b16 %v662
    %v2829 = vunpack.c.h.b16 %v662
    %v2830 = vunpack.c.l.b16 %v663
    %v2831 = vunpack.c.h.b16 %v663
    %v2832 = vunpack.c.l.b16 %v664
    %v2833 = vunpack.c.h.b16 %v664
    %v2834 = vunpack.c.l.b16 %v665
    %v2835 = vunpack.c.h.b16 %v665
    %v2836 = vunpack.c.l.b16 %v666
    %v2837 = vunpack.c.h.b16 %v666
    %v2838 = vunpack.c.l.b16 %v667
    %v2839 = vunpack.c.h.b16 %v667
    %v2840 = vunpack.c.l.b16 %v668
    %v2841 = vunpack.c.h.b16 %v668
    %v2842 = vunpack.c.l.b16 %v669
    %v2843 = vunpack.c.h.b16 %v669
    %v2844 = vunpack.c.l.b16 %v670
    %v2845 = vunpack.c.h.b16 %v670
    %v2846 = vunpack.c.l.b16 %v671
    %v2847 = vunpack.c.h.b16 %v671
    %v2848 = vunpack.c.l.b16 %v672
    %v2849 = vunpack.c.h.b16 %v672
    %v2850 = vunpack.c.l.b16 %v673
    %v2851 = vunpack.c.h.b16 %v673
    %v2852 = vunpack.c.l.b16 %v674
    %v2853 = vunpack.c.h.b16 %v674
    %v2854 = vunpack.c.l.b16 %v675
    %v2855 = vunpack.c.h.b16 %v675
    %v2856 = vunpack.c.l.b16 %v676
    %v2857 = vunpack.c.h.b16 %v676
    %v2858 = vunpack.c.l.b16 %v677
    %v2859 = vunpack.c.h.b16 %v677
    %v2860 = vunpack.c.l.b16 %v678
    %v2861 = vunpack.c.h.b16 %v678
    %v2862 = vunpack.c.l.b16 %v679
    %v2863 = vunpack.c.h.b16 %v679
    %v2864 = vunpack.c.l.b16 %v680
    %v2865 = vunpack.c.h.b16 %v680
    %v2866 = vunpack.c.l.b16 %v681
    %v2867 = vunpack.c.h.b16 %v681
    %v2868 = vunpack.c.l.b16 %v682
    %v2869 = vunpack.c.h.b16 %v682
    %v2870 = vunpack.c.l.b16 %v683
    %v2871 = vunpack.c.h.b16 %v683
    %v2872 = vunpack.c.l.b16 %v684
    %v2873 = vunpack.c.h.b16 %v684
    %v2874 = vunpack.c.l.b16 %v685
    %v2875 = vunpack.c.h.b16 %v685
    %v2876 = vunpack.c.l.b16 %v686
    %v2877 = vunpack.c.h.b16 %v686
    %v2878 = vunpack.c.l.b16 %v687
    %v2879 = vunpack.c.h.b16 %v687
    %v2880 = vunpack.c.l.b16 %v688
    %v2881 = vunpack.c.h.b16 %v688
    %v2882 = vunpack.c.l.b16 %v689
    %v2883 = vunpack.c.h.b16 %v689
    %v2884 = vunpack.c.l.b16 %v690
    %v2885 = vunpack.c.h.b16 %v690
    %v2886 = vunpack.c.l.b16 %v691
    %v2887 = vunpack.c.h.b16 %v691
    %v2888 = vunpack.c.l.b16 %v692
    %v2889 = vunpack.c.h.b16 %v692
    %v2890 = vunpack.c.l.b16 %v693
    %v2891 = vunpack.c.h.b16 %v693
    %v2892 = vunpack.c.l.b16 %v694
    %v2893 = vunpack.c.h.b16 %v694
    %v2894 = vunpack.c.l.b16 %v695
    %v2895 = vunpack.c.h.b16 %v695
    %v2896 = vunpack.c.l.b16 %v696
    %v2897 = vunpack.c.h.b16 %v696
    %v2898 = vunpack.c.l.b16 %v697
    %v2899 = vunpack.c.h.b16 %v697
    %v2900 = vunpack.c.l.b16 %v698
    %v2901 = vunpack.c.h.b16 %v698
    %v2902 = vunpack.c.l.b16 %v699
    %v2903 = vunpack.c.h.b16 %v699
    %v2904 = vunpack.c.l.b16 %v700
    %v2905 = vunpack.c.h.b16 %v700
    %v2906 = vunpack.c.l.b16 %v701
    %v2907 = vunpack.c.h.b16 %v701
    %v2908 = vunpack.c.l.b16 %v702
    %v2909 = vunpack.c.h.b16 %v702
    %v2910 = vunpack.c.l.b16 %v703
    %v2911 = vunpack.c.h.b16 %v703
    %v2912 = vunpack.c.l.b16 %v704
    %v2913 = vunpack.c.h.b16 %v704
    %v2914 = vunpack.c.l.b16 %v705
    %v2915 = vunpack.c.h.b16 %v705
    %v2916 = vunpack.c.l.b16 %v706
    %v2917 = vunpack.c.h.b16 %v706
    %v2918 = vunpack.c.l.b16 %v707
    %v2919 = vunpack.c.h.b16 %v707
    %v2920 = vunpack.c.l.b16 %v708
    %v2921 = vunpack.c.h.b16 %v708
    %v2922 = vunpack.c.l.b16 %v709
    %v2923 = vunpack.c.h.b16 %v709
    %v2924 = vunpack.c.l.b16 %v710
    %v2925 = vunpack.c.h.b16 %v710
    %v2926 = vunpack.c.l.b16 %v711
    %v2927 = vunpack.c.h.b16 %v711
    %v2928 = vunpack.c.l.b16 %v712
    %v2929 = vunpack.c.h.b16 %v712
    %v2930 = vunpack.c.l.b16 %v713
    %v2931 = vunpack.c.h.b16 %v713
    %v2932 = vunpack.c.l.b16 %v714
    %v2933 = vunpack.c.h.b16 %v714
    %v2934 = vunpack.c.l.b16 %v715
    %v2935 = vunpack.c.h.b16 %v715
    %v2936 = vunpack.c.l.b16 %v716
    %v2937 = vunpack.c.h.b16 %v716
    %v2938 = vunpack.c.l.b16 %v717
    %v2939 = vunpack.c.h.b16 %v717
    %v2940 = vunpack.c.l.b16 %v718
    %v2941 = vunpack.c.h.b16 %v718
    %v2942 = vunpack.c.l.b16 %v719
    %v2943 = vunpack.c.h.b16 %v719
    %v2944 = vunpack.c.l.b16 %v720
    %v2945 = vunpack.c.h.b16 %v720
    %v2946 = vunpack.c.l.b16 %v721
    %v2947 = vunpack.c.h.b16 %v721
    %v2948 = vunpack.c.l.b16 %v722
    %v2949 = vunpack.c.h.b16 %v722
    %v2950 = vunpack.c.l.b16 %v723
    %v2951 = vunpack.c.h.b16 %v723
    %v2952 = vunpack.c.l.b16 %v724
    %v2953 = vunpack.c.h.b16 %v724
    %v2954 = vunpack.c.l.b16 %v725
    %v2955 = vunpack.c.h.b16 %v725
    %v2956 = vunpack.c.l.b16 %v726
    %v2957 = vunpack.c.h.b16 %v726
    %v2958 = vunpack.c.l.b16 %v727
    %v2959 = vunpack.c.h.b16 %v727
    %v2960 = vunpack.c.l.b16 %v728
    %v2961 = vunpack.c.h.b16 %v728
    %v2962 = vunpack.c.l.b16 %v729
    %v2963 = vunpack.c.h.b16 %v729
    %v2964 = vunpack.c.l.b16 %v730
    %v2965 = vunpack.c.h.b16 %v730
    %v2966 = vunpack.c.l.b16 %v731
    %v2967 = vunpack.c.h.b16 %v731
    %v2968 = vunpack.c.l.b16 %v732
    %v2969 = vunpack.c.h.b16 %v732
    %v2970 = vunpack.c.l.b16 %v733
    %v2971 = vunpack.c.h.b16 %v733
    %v2972 = vunpack.c.l.b16 %v734
    %v2973 = vunpack.c.h.b16 %v734
    %v2974 = vunpack.c.l.b16 %v735
    %v2975 = vunpack.c.h.b16 %v735
    %v2976 = vunpack.c.l.b16 %v736
    %v2977 = vunpack.c.h.b16 %v736
    %v2978 = vunpack.c.l.b16 %v737
    %v2979 = vunpack.c.h.b16 %v737
    %v2980 = vunpack.c.l.b16 %v738
    %v2981 = vunpack.c.h.b16 %v738
    %v2982 = vunpack.c.l.b16 %v739
    %v2983 = vunpack.c.h.b16 %v739
    %v2984 = vunpack.c.l.b16 %v740
    %v2985 = vunpack.c.h.b16 %v740
    %v2986 = vunpack.c.l.b16 %v741
    %v2987 = vunpack.c.h.b16 %v741
    %v2988 = vunpack.c.l.b16 %v742
    %v2989 = vunpack.c.h.b16 %v742
    %v2990 = vunpack.c.l.b16 %v743
    %v2991 = vunpack.c.h.b16 %v743
    %v2992 = vunpack.c.l.b16 %v744
    %v2993 = vunpack.c.h.b16 %v744
    %v2994 = vunpack.c.l.b16 %v745
    %v2995 = vunpack.c.h.b16 %v745
    %v2996 = vunpack.c.l.b16 %v746
    %v2997 = vunpack.c.h.b16 %v746
    %v2998 = vunpack.c.l.b16 %v747
    %v2999 = vunpack.c.h.b16 %v747
    %v3000 = vunpack.c.l.b16 %v748
    %v3001 = vunpack.c.h.b16 %v748
    %v3002 = vunpack.c.l.b16 %v749
    %v3003 = vunpack.c.h.b16 %v749
    %v3004 = vunpack.c.l.b16 %v750
    %v3005 = vunpack.c.h.b16 %v750
    %v3006 = vunpack.c.l.b16 %v751
    %v3007 = vunpack.c.h.b16 %v751
    %v3008 = vunpack.c.l.b16 %v752
    %v3009 = vunpack.c.h.b16 %v752
    %v3010 = vunpack.c.l.b16 %v753
    %v3011 = vunpack.c.h.b16 %v753
    %v3012 = vunpack.c.l.b16 %v754
    %v3013 = vunpack.c.h.b16 %v754
    %v3014 = vunpack.c.l.b16 %v755
    %v3015 = vunpack.c.h.b16 %v755
    %v3016 = vunpack.c.l.b16 %v756
    %v3017 = vunpack.c.h.b16 %v756
    %v3018 = vunpack.c.l.b16 %v757
    %v3019 = vunpack.c.h.b16 %v757
    %v3020 = vunpack.c.l.b16 %v758
    %v3021 = vunpack.c.h.b16 %v758
    %v3022 = vunpack.c.l.b16 %v759
    %v3023 = vunpack.c.h.b16 %v759
    %v3024 = vunpack.c.l.b16 %v760
    %v3025 = vunpack.c.h.b16 %v760
    %v3026 = vunpack.c.l.b16 %v761
    %v3027 = vunpack.c.h.b16 %v761
    %v3028 = vunpack.c.l.b16 %v762
    %v3029 = vunpack.c.h.b16 %v762
    %v3030 = vunpack.c.l.b16 %v763
    %v3031 = vunpack.c.h.b16 %v763
    %v3032 = vunpack.c.l.b16 %v764
    %v3033 = vunpack.c.h.b16 %v764
    %v3034 = vunpack.c.l.b16 %v765
    %v3035 = vunpack.c.h.b16 %v765
    %v3036 = vunpack.c.l.b16 %v766
    %v3037 = vunpack.c.h.b16 %v766
    %v3038 = vunpack.c.l.b16 %v767
    %v3039 = vunpack.c.h.b16 %v767
    %v3040 = vunpack.c.l.b16 %v768
    %v3041 = vunpack.c.h.b16 %v768
    %v3042 = vunpack.c.l.b16 %v769
    %v3043 = vunpack.c.h.b16 %v769
    %v3044 = vunpack.c.l.b16 %v770
    %v3045 = vunpack.c.h.b16 %v770
    %v3046 = vunpack.c.l.b16 %v771
    %v3047 = vunpack.c.h.b16 %v771
    %v3048 = vunpack.c.l.b16 %v772
    %v3049 = vunpack.c.h.b16 %v772
    %v3050 = vunpack.c.l.b16 %v773
    %v3051 = vunpack.c.h.b16 %v773
    %v3052 = vunpack.c.l.b16 %v774
    %v3053 = vunpack.c.h.b16 %v774
    %v3054 = vunpack.c.l.b16 %v775
    %v3055 = vunpack.c.h.b16 %v775
    %v3056 = vunpack.c.l.b16 %v776
    %v3057 = vunpack.c.h.b16 %v776
    %v3058 = vunpack.c.l.b16 %v777
    %v3059 = vunpack.c.h.b16 %v777
    %v3060 = vunpack.c.l.b16 %v778
    %v3061 = vunpack.c.h.b16 %v778
    %v3062 = vunpack.c.l.b16 %v779
    %v3063 = vunpack.c.h.b16 %v779
    %v3064 = vunpack.c.l.b16 %v780
    %v3065 = vunpack.c.h.b16 %v780
    %v3066 = vunpack.c.l.b16 %v781
    %v3067 = vunpack.c.h.b16 %v781
    %v3068 = vunpack.c.l.b16 %v782
    %v3069 = vunpack.c.h.b16 %v782
    %v3070 = vunpack.c.l.b16 %v783
    %v3071 = vunpack.c.h.b16 %v783
    %v3072 = vunpack.c.l.b16 %v784
    %v3073 = vunpack.c.h.b16 %v784
    %v3074 = vunpack.c.l.b16 %v785
    %v3075 = vunpack.c.h.b16 %v785
    %v3076 = vunpack.c.l.b16 %v786
    %v3077 = vunpack.c.h.b16 %v786
    %v3078 = vunpack.c.l.b16 %v787
    %v3079 = vunpack.c.h.b16 %v787
    %v3080 = vunpack.c.l.b16 %v788
    %v3081 = vunpack.c.h.b16 %v788
    %v3082 = vunpack.c.l.b16 %v789
    %v3083 = vunpack.c.h.b16 %v789
    %v3084 = vunpack.c.l.b16 %v790
    %v3085 = vunpack.c.h.b16 %v790
    %v3086 = vunpack.c.l.b16 %v791
    %v3087 = vunpack.c.h.b16 %v791
    %v3088 = vunpack.c.l.b16 %v792
    %v3089 = vunpack.c.h.b16 %v792
    %v3090 = vunpack.c.l.b16 %v793
    %v3091 = vunpack.c.h.b16 %v793
    %v3092 = vunpack.c.l.b16 %v794
    %v3093 = vunpack.c.h.b16 %v794
    %v3094 = vunpack.c.l.b16 %v795
    %v3095 = vunpack.c.h.b16 %v795
    %v3096 = vunpack.c.l.b16 %v796
    %v3097 = vunpack.c.h.b16 %v796
    %v3098 = vunpack.c.l.b16 %v797
    %v3099 = vunpack.c.h.b16 %v797
    %v3100 = vunpack.c.l.b16 %v798
    %v3101 = vunpack.c.h.b16 %v798
    %v3102 = vunpack.c.l.b16 %v799
    %v3103 = vunpack.c.h.b16 %v799
    %v3104 = vunpack.c.l.b16 %v800
    %v3105 = vunpack.c.h.b16 %v800
    %v3106 = vunpack.c.l.b16 %v801
    %v3107 = vunpack.c.h.b16 %v801
    %v3108 = vunpack.c.l.b16 %v802
    %v3109 = vunpack.c.h.b16 %v802
    %v3110 = vunpack.c.l.b16 %v803
    %v3111 = vunpack.c.h.b16 %v803
    %v3112 = vunpack.c.l.b16 %v804
    %v3113 = vunpack.c.h.b16 %v804
    %v3114 = vunpack.c.l.b16 %v805
    %v3115 = vunpack.c.h.b16 %v805
    %v3116 = vunpack.c.l.b16 %v806
    %v3117 = vunpack.c.h.b16 %v806
    %v3118 = vunpack.c.l.b16 %v807
    %v3119 = vunpack.c.h.b16 %v807
    %v3120 = vunpack.c.l.b16 %v808
    %v3121 = vunpack.c.h.b16 %v808
    %v3122 = vunpack.c.l.b16 %v809
    %v3123 = vunpack.c.h.b16 %v809
    %v3124 = vunpack.c.l.b16 %v810
    %v3125 = vunpack.c.h.b16 %v810
    %v3126 = vunpack.c.l.b16 %v811
    %v3127 = vunpack.c.h.b16 %v811
    %v3128 = vunpack.c.l.b16 %v812
    %v3129 = vunpack.c.h.b16 %v812
    %v3130 = vunpack.c.l.b16 %v813
    %v3131 = vunpack.c.h.b16 %v813
    %v3132 = vunpack.c.l.b16 %v814
    %v3133 = vunpack.c.h.b16 %v814
    %v3134 = vunpack.c.l.b16 %v815
    %v3135 = vunpack.c.h.b16 %v815
    %v3136 = vunpack.c.l.b16 %v816
    %v3137 = vunpack.c.h.b16 %v816
    %v3138 = vunpack.c.l.b16 %v817
    %v3139 = vunpack.c.h.b16 %v817
    %v3140 = vunpack.c.l.b16 %v818
    %v3141 = vunpack.c.h.b16 %v818
    %v3142 = vunpack.c.l.b16 %v819
    %v3143 = vunpack.c.h.b16 %v819
    %v3144 = vunpack.c.l.b16 %v820
    %v3145 = vunpack.c.h.b16 %v820
    %v3146 = vunpack.c.l.b16 %v821
    %v3147 = vunpack.c.h.b16 %v821
    %v3148 = vunpack.c.l.b16 %v822
    %v3149 = vunpack.c.h.b16 %v822
    %v3150 = vunpack.c.l.b16 %v823
    %v3151 = vunpack.c.h.b16 %v823
    %v3152 = vunpack.c.l.b16 %v824
    %v3153 = vunpack.c.h.b16 %v824
    %v3154 = vunpack.c.l.b16 %v825
    %v3155 = vunpack.c.h.b16 %v825
    %v3156 = vunpack.c.l.b16 %v826
    %v3157 = vunpack.c.h.b16 %v826
    %v3158 = vunpack.c.l.b16 %v827
    %v3159 = vunpack.c.h.b16 %v827
    %v3160 = vunpack.c.l.b16 %v828
    %v3161 = vunpack.c.h.b16 %v828
    %v3162 = vunpack.c.l.b16 %v829
    %v3163 = vunpack.c.h.b16 %v829
    %v3164 = vunpack.c.l.b16 %v830
    %v3165 = vunpack.c.h.b16 %v830
    %v3166 = vunpack.c.l.b16 %v831
    %v3167 = vunpack.c.h.b16 %v831
    %v3168 = vunpack.c.l.b16 %v832
    %v3169 = vunpack.c.h.b16 %v832
    %v3170 = vunpack.c.l.b16 %v833
    %v3171 = vunpack.c.h.b16 %v833
    %v3172 = vunpack.c.l.b16 %v834
    %v3173 = vunpack.c.h.b16 %v834
    %v3174 = vunpack.c.l.b16 %v835
    %v3175 = vunpack.c.h.b16 %v835
    %v3176 = vunpack.c.l.b16 %v836
    %v3177 = vunpack.c.h.b16 %v836
    %v3178 = vunpack.c.l.b16 %v837
    %v3179 = vunpack.c.h.b16 %v837
    %v3180 = vunpack.c.l.b16 %v838
    %v3181 = vunpack.c.h.b16 %v838
    %v3182 = vunpack.c.l.b16 %v839
    %v3183 = vunpack.c.h.b16 %v839
    %v3184 = vunpack.c.l.b16 %v840
    %v3185 = vunpack.c.h.b16 %v840
    %v3186 = vunpack.c.l.b16 %v841
    %v3187 = vunpack.c.h.b16 %v841
    %v3188 = vunpack.c.l.b16 %v842
    %v3189 = vunpack.c.h.b16 %v842
    %v3190 = vunpack.c.l.b16 %v843
    %v3191 = vunpack.c.h.b16 %v843
    %v3192 = vunpack.c.l.b16 %v844
    %v3193 = vunpack.c.h.b16 %v844
    %v3194 = vunpack.c.l.b16 %v845
    %v3195 = vunpack.c.h.b16 %v845
    %v3196 = vunpack.c.l.b16 %v846
    %v3197 = vunpack.c.h.b16 %v846
    %v3198 = vunpack.c.l.b16 %v847
    %v3199 = vunpack.c.h.b16 %v847
    %v3200 = vunpack.c.l.b16 %v848
    %v3201 = vunpack.c.h.b16 %v848
    %v3202 = vunpack.c.l.b16 %v849
    %v3203 = vunpack.c.h.b16 %v849
    %v3204 = vunpack.c.l.b16 %v850
    %v3205 = vunpack.c.h.b16 %v850
    %v3206 = vunpack.c.l.b16 %v851
    %v3207 = vunpack.c.h.b16 %v851
    %v3208 = vunpack.c.l.b16 %v852
    %v3209 = vunpack.c.h.b16 %v852
    %v3210 = vunpack.c.l.b16 %v853
    %v3211 = vunpack.c.h.b16 %v853
    %v3212 = vunpack.c.l.b16 %v854
    %v3213 = vunpack.c.h.b16 %v854
    %v3214 = vunpack.c.l.b16 %v855
    %v3215 = vunpack.c.h.b16 %v855
    %v3216 = vunpack.c.l.b16 %v856
    %v3217 = vunpack.c.h.b16 %v856
    %v3218 = vunpack.c.l.b16 %v857
    %v3219 = vunpack.c.h.b16 %v857
    %v3220 = vunpack.c.l.b16 %v858
    %v3221 = vunpack.c.h.b16 %v858
    %v3222 = vunpack.c.l.b16 %v859
    %v3223 = vunpack.c.h.b16 %v859
    %v3224 = vunpack.c.l.b16 %v860
    %v3225 = vunpack.c.h.b16 %v860
    %v3226 = vunpack.c.l.b16 %v861
    %v3227 = vunpack.c.h.b16 %v861
    %v3228 = vunpack.c.l.b16 %v862
    %v3229 = vunpack.c.h.b16 %v862
    %v3230 = vunpack.c.l.b16 %v863
    %v3231 = vunpack.c.h.b16 %v863
    %v3232 = vpack.c.b16 %v1700, %v1696
    %v3233 = vpack.c.b16 %v1701, %v1697
    %v3234 = vpack.c.b16 %v1702, %v1698
    %v3235 = vpack.c.b16 %v1703, %v1699
    %v3236 = vpack.c.b16 %v1708, %v1704
    %v3237 = vpack.c.b16 %v1709, %v1705
    %v3238 = vpack.c.b16 %v1710, %v1706
    %v3239 = vpack.c.b16 %v1711, %v1707
    %v3240 = vpack.c.b16 %v1716, %v1712
    %v3241 = vpack.c.b16 %v1717, %v1713
    %v3242 = vpack.c.b16 %v1718, %v1714
    %v3243 = vpack.c.b16 %v1719, %v1715
    %v3244 = vpack.c.b16 %v1724, %v1720
    %v3245 = vpack.c.b16 %v1725, %v1721
    %v3246 = vpack.c.b16 %v1726, %v1722
    %v3247 = vpack.c.b16 %v1727, %v1723
    %v3248 = vpack.c.b16 %v1732, %v1728
    %v3249 = vpack.c.b16 %v1733, %v1729
    %v3250 = vpack.c.b16 %v1734, %v1730
    %v3251 = vpack.c.b16 %v1735, %v1731
    %v3252 = vpack.c.b16 %v1740, %v1736
    %v3253 = vpack.c.b16 %v1741, %v1737
    %v3254 = vpack.c.b16 %v1742, %v1738
    %v3255 = vpack.c.b16 %v1743, %v1739
    %v3256 = vpack.c.b16 %v1748, %v1744
    %v3257 = vpack.c.b16 %v1749, %v1745
    %v3258 = vpack.c.b16 %v1750, %v1746
    %v3259 = vpack.c.b16 %v1751, %v1747
    %v3260 = vpack.c.b16 %v1756, %v1752
    %v3261 = vpack.c.b16 %v1757, %v1753
    %v3262 = vpack.c.b16 %v1758, %v1754
    %v3263 = vpack.c.b16 %v1759, %v1755
    %v3264 = vpack.c.b16 %v1764, %v1760
    %v3265 = vpack.c.b16 %v1765, %v1761
    %v3266 = vpack.c.b16 %v1766, %v1762
    %v3267 = vpack.c.b16 %v1767, %v1763
    %v3268 = vpack.c.b16 %v1772, %v1768
    %v3269 = vpack.c.b16 %v1773, %v1769
    %v3270 = vpack.c.b16 %v1774, %v1770
    %v3271 = vpack.c.b16 %v1775, %v1771
    %v3272 = vpack.c.b16 %v1780, %v1776
    %v3273 = vpack.c.b16 %v1781, %v1777
    %v3274 = vpack.c.b16 %v1782, %v1778
    %v3275 = vpack.c.b16 %v1783, %v1779
    %v3276 = vpack.c.b16 %v1788, %v1784
    %v3277 = vpack.c.b16 %v1789, %v1785
    %v3278 = vpack.c.b16 %v1790, %v1786
    %v3279 = vpack.c.b16 %v1791, %v1787
    %v3280 = vpack.c.b16 %v1796, %v1792
    %v3281 = vpack.c.b16 %v1797, %v1793
    %v3282 = vpack.c.b16 %v1798, %v1794
    %v3283 = vpack.c.b16 %v1799, %v1795
    %v3284 = vpack.c.b16 %v1804, %v1800
    %v3285 = vpack.c.b16 %v1805, %v1801
    %v3286 = vpack.c.b16 %v1806, %v1802
    %v3287 = vpack.c.b16 %v1807, %v1803
    %v3288 = vpack.c.b16 %v1812, %v1808
    %v3289 = vpack.c.b16 %v1813, %v1809
    %v3290 = vpack.c.b16 %v1814, %v1810
    %v3291 = vpack.c.b16 %v1815, %v1811
    %v3292 = vpack.c.b16 %v1820, %v1816
    %v3293 = vpack.c.b16 %v1821, %v1817
    %v3294 = vpack.c.b16 %v1822, %v1818
    %v3295 = vpack.c.b16 %v1823, %v1819
    %v3296 = vpack.c.b16 %v1828, %v1824
    %v3297 = vpack.c.b16 %v1829, %v1825
    %v3298 = vpack.c.b16 %v1830, %v1826
    %v3299 = vpack.c.b16 %v1831, %v1827
    %v3300 = vpack.c.b16 %v1836, %v1832
    %v3301 = vpack.c.b16 %v1837, %v1833
    %v3302 = vpack.c.b16 %v1838, %v1834
    %v3303 = vpack.c.b16 %v1839, %v1835
    %v3304 = vpack.c.b16 %v1844, %v1840
    %v3305 = vpack.c.b16 %v1845, %v1841
    %v3306 = vpack.c.b16 %v1846, %v1842
    %v3307 = vpack.c.b16 %v1847, %v1843
    %v3308 = vpack.c.b16 %v1852, %v1848
    %v3309 = vpack.c.b16 %v1853, %v1849
    %v3310 = vpack.c.b16 %v1854, %v1850
    %v3311 = vpack.c.b16 %v1855, %v1851
    %v3312 = vpack.c.b16 %v1860, %v1856
    %v3313 = vpack.c.b16 %v1861, %v1857
    %v3314 = vpack.c.b16 %v1862, %v1858
    %v3315 = vpack.c.b16 %v1863, %v1859
    %v3316 = vpack.c.b16 %v1868, %v1864
    %v3317 = vpack.c.b16 %v1869, %v1865
    %v3318 = vpack.c.b16 %v1870, %v1866
    %v3319 = vpack.c.b16 %v1871, %v1867
    %v3320 = vpack.c.b16 %v1876, %v1872
    %v3321 = vpack.c.b16 %v1877, %v1873
    %v3322 = vpack.c.b16 %v1878, %v1874
    %v3323 = vpack.c.b16 %v1879, %v1875
    %v3324 = vpack.c.b16 %v1884, %v1880
    %v3325 = vpack.c.b16 %v1885, %v1881
    %v3326 = vpack.c.b16 %v1886, %v1882
    %v3327 = vpack.c.b16 %v1887, %v1883
    %v3328 = vpack.c.b16 %v1892, %v1888
    %v3329 = vpack.c.b16 %v1893, %v1889
    %v3330 = vpack.c.b16 %v1894, %v1890
    %v3331 = vpack.c.b16 %v1895, %v1891
    %v3332 = vpack.c.b16 %v1900, %v1896
    %v3333 = vpack.c.b16 %v1901, %v1897
    %v3334 = vpack.c.b16 %v1902, %v1898
    %v3335 = vpack.c.b16 %v1903, %v1899
    %v3336 = vpack.c.b16 %v1908, %v1904
    %v3337 = vpack.c.b16 %v1909, %v1905
    %v3338 = vpack.c.b16 %v1910, %v1906
    %v3339 = vpack.c.b16 %v1911, %v1907
    %v3340 = vpack.c.b16 %v1916, %v1912
    %v3341 = vpack.c.b16 %v1917, %v1913
    %v3342 = vpack.c.b16 %v1918, %v1914
    %v3343 = vpack.c.b16 %v1919, %v1915
    %v3344 = vpack.c.b16 %v1924, %v1920
    %v3345 = vpack.c.b16 %v1925, %v1921
    %v3346 = vpack.c.b16 %v1926, %v1922
    %v3347 = vpack.c.b16 %v1927, %v1923
    %v3348 = vpack.c.b16 %v1932, %v1928
    %v3349 = vpack.c.b16 %v1933, %v1929
    %v3350 = vpack.c.b16 %v1934, %v1930
    %v3351 = vpack.c.b16 %v1935, %v1931
    %v3352 = vpack.c.b16 %v1940, %v1936
    %v3353 = vpack.c.b16 %v1941, %v1937
    %v3354 = vpack.c.b16 %v1942, %v1938
    %v3355 = vpack.c.b16 %v1943, %v1939
    %v3356 = vpack.c.b16 %v1948, %v1944
    %v3357 = vpack.c.b16 %v1949, %v1945
    %v3358 = vpack.c.b16 %v1950, %v1946
    %v3359 = vpack.c.b16 %v1951, %v1947
    %v3360 = vpack.c.b16 %v1956, %v1952
    %v3361 = vpack.c.b16 %v1957, %v1953
    %v3362 = vpack.c.b16 %v1958, %v1954
    %v3363 = vpack.c.b16 %v1959, %v1955
    %v3364 = vpack.c.b16 %v1964, %v1960
    %v3365 = vpack.c.b16 %v1965, %v1961
    %v3366 = vpack.c.b16 %v1966, %v1962
    %v3367 = vpack.c.b16 %v1967, %v1963
    %v3368 = vpack.c.b16 %v1972, %v1968
    %v3369 = vpack.c.b16 %v1973, %v1969
    %v3370 = vpack.c.b16 %v1974, %v1970
    %v3371 = vpack.c.b16 %v1975, %v1971
    %v3372 = vpack.c.b16 %v1980, %v1976
    %v3373 = vpack.c.b16 %v1981, %v1977
    %v3374 = vpack.c.b16 %v1982, %v1978
    %v3375 = vpack.c.b16 %v1983, %v1979
    %v3376 = vpack.c.b16 %v1988, %v1984
    %v3377 = vpack.c.b16 %v1989, %v1985
    %v3378 = vpack.c.b16 %v1990, %v1986
    %v3379 = vpack.c.b16 %v1991, %v1987
    %v3380 = vpack.c.b16 %v1996, %v1992
    %v3381 = vpack.c.b16 %v1997, %v1993
    %v3382 = vpack.c.b16 %v1998, %v1994
    %v3383 = vpack.c.b16 %v1999, %v1995
    %v3384 = vpack.c.b16 %v2004, %v2000
    %v3385 = vpack.c.b16 %v2005, %v2001
    %v3386 = vpack.c.b16 %v2006, %v2002
    %v3387 = vpack.c.b16 %v2007, %v2003
    %v3388 = vpack.c.b16 %v2012, %v2008
    %v3389 = vpack.c.b16 %v2013, %v2009
    %v3390 = vpack.c.b16 %v2014, %v2010
    %v3391 = vpack.c.b16 %v2015, %v2011
    %v3392 = vpack.c.b16 %v2020, %v2016
    %v3393 = vpack.c.b16 %v2021, %v2017
    %v3394 = vpack.c.b16 %v2022, %v2018
    %v3395 = vpack.c.b16 %v2023, %v2019
    %v3396 = vpack.c.b16 %v2028, %v2024
    %v3397 = vpack.c.b16 %v2029, %v2025
    %v3398 = vpack.c.b16 %v2030, %v2026
    %v3399 = vpack.c.b16 %v2031, %v2027
    %v3400 = vpack.c.b16 %v2036, %v2032
    %v3401 = vpack.c.b16 %v2037, %v2033
    %v3402 = vpack.c.b16 %v2038, %v2034
    %v3403 = vpack.c.b16 %v2039, %v2035
    %v3404 = vpack.c.b16 %v2044, %v2040
    %v3405 = vpack.c.b16 %v2045, %v2041
    %v3406 = vpack.c.b16 %v2046, %v2042
    %v3407 = vpack.c.b16 %v2047, %v2043
    %v3408 = vpack.c.b16 %v2052, %v2048
    %v3409 = vpack.c.b16 %v2053, %v2049
    %v3410 = vpack.c.b16 %v2054, %v2050
    %v3411 = vpack.c.b16 %v2055, %v2051
    %v3412 = vpack.c.b16 %v2060, %v2056
    %v3413 = vpack.c.b16 %v2061, %v2057
    %v3414 = vpack.c.b16 %v2062, %v2058
    %v3415 = vpack.c.b16 %v2063, %v2059
    %v3416 = vpack.c.b16 %v2068, %v2064
    %v3417 = vpack.c.b16 %v2069, %v2065
    %v3418 = vpack.c.b16 %v2070, %v2066
    %v3419 = vpack.c.b16 %v2071, %v2067
    %v3420 = vpack.c.b16 %v2076, %v2072
    %v3421 = vpack.c.b16 %v2077, %v2073
    %v3422 = vpack.c.b16 %v2078, %v2074
    %v3423 = vpack.c.b16 %v2079, %v2075
    %v3424 = vpack.c.b16 %v2084, %v2080
    %v3425 = vpack.c.b16 %v2085, %v2081
    %v3426 = vpack.c.b16 %v2086, %v2082
    %v3427 = vpack.c.b16 %v2087, %v2083
    %v3428 = vpack.c.b16 %v2092, %v2088
    %v3429 = vpack.c.b16 %v2093, %v2089
    %v3430 = vpack.c.b16 %v2094, %v2090
    %v3431 = vpack.c.b16 %v2095, %v2091
    %v3432 = vpack.c.b16 %v2100, %v2096
    %v3433 = vpack.c.b16 %v2101, %v2097
    %v3434 = vpack.c.b16 %v2102, %v2098
    %v3435 = vpack.c.b16 %v2103, %v2099
    %v3436 = vpack.c.b16 %v2108, %v2104
    %v3437 = vpack.c.b16 %v2109, %v2105
    %v3438 = vpack.c.b16 %v2110, %v2106
    %v3439 = vpack.c.b16 %v2111, %v2107
    %v3440 = vpack.c.b16 %v2116, %v2112
    %v3441 = vpack.c.b16 %v2117, %v2113
    %v3442 = vpack.c.b16 %v2118, %v2114
    %v3443 = vpack.c.b16 %v2119, %v2115
    %v3444 = vpack.c.b16 %v2124, %v2120
    %v3445 = vpack.c.b16 %v2125, %v2121
    %v3446 = vpack.c.b16 %v2126, %v2122
    %v3447 = vpack.c.b16 %v2127, %v2123
    %v3448 = vpack.c.b16 %v2132, %v2128
    %v3449 = vpack.c.b16 %v2133, %v2129
    %v3450 = vpack.c.b16 %v2134, %v2130
    %v3451 = vpack.c.b16 %v2135, %v2131
    %v3452 = vpack.c.b16 %v2140, %v2136
    %v3453 = vpack.c.b16 %v2141, %v2137
    %v3454 = vpack.c.b16 %v2142, %v2138
    %v3455 = vpack.c.b16 %v2143, %v2139
    %v3456 = vpack.c.b16 %v2148, %v2144
    %v3457 = vpack.c.b16 %v2149, %v2145
    %v3458 = vpack.c.b16 %v2150, %v2146
    %v3459 = vpack.c.b16 %v2151, %v2147
    %v3460 = vpack.c.b16 %v2156, %v2152
    %v3461 = vpack.c.b16 %v2157, %v2153
    %v3462 = vpack.c.b16 %v2158, %v2154
    %v3463 = vpack.c.b16 %v2159, %v2155
    %v3464 = vpack.c.b16 %v2164, %v2160
    %v3465 = vpack.c.b16 %v2165, %v2161
    %v3466 = vpack.c.b16 %v2166, %v2162
    %v3467 = vpack.c.b16 %v2167, %v2163
    %v3468 = vpack.c.b16 %v2172, %v2168
    %v3469 = vpack.c.b16 %v2173, %v2169
    %v3470 = vpack.c.b16 %v2174, %v2170
    %v3471 = vpack.c.b16 %v2175, %v2171
    %v3472 = vpack.c.b16 %v2180, %v2176
    %v3473 = vpack.c.b16 %v2181, %v2177
    %v3474 = vpack.c.b16 %v2182, %v2178
    %v3475 = vpack.c.b16 %v2183, %v2179
    %v3476 = vpack.c.b16 %v2188, %v2184
    %v3477 = vpack.c.b16 %v2189, %v2185
    %v3478 = vpack.c.b16 %v2190, %v2186
    %v3479 = vpack.c.b16 %v2191, %v2187
    %v3480 = vpack.c.b16 %v2196, %v2192
    %v3481 = vpack.c.b16 %v2197, %v2193
    %v3482 = vpack.c.b16 %v2198, %v2194
    %v3483 = vpack.c.b16 %v2199, %v2195
    %v3484 = vpack.c.b16 %v2204, %v2200
    %v3485 = vpack.c.b16 %v2205, %v2201
    %v3486 = vpack.c.b16 %v2206, %v2202
    %v3487 = vpack.c.b16 %v2207, %v2203
    %v3488 = vpack.c.b16 %v2212, %v2208
    %v3489 = vpack.c.b16 %v2213, %v2209
    %v3490 = vpack.c.b16 %v2214, %v2210
    %v3491 = vpack.c.b16 %v2215, %v2211
    %v3492 = vpack.c.b16 %v2220, %v2216
    %v3493 = vpack.c.b16 %v2221, %v2217
    %v3494 = vpack.c.b16 %v2222, %v2218
    %v3495 = vpack.c.b16 %v2223, %v2219
    %v3496 = vpack.c.b16 %v2228, %v2224
    %v3497 = vpack.c.b16 %v2229, %v2225
    %v3498 = vpack.c.b16 %v2230, %v2226
    %v3499 = vpack.c.b16 %v2231, %v2227
    %v3500 = vpack.c.b16 %v2236, %v2232
    %v3501 = vpack.c.b16 %v2237, %v2233
    %v3502 = vpack.c.b16 %v2238, %v2234
    %v3503 = vpack.c.b16 %v2239, %v2235
    %v3504 = vpack.c.b16 %v2244, %v2240
    %v3505 = vpack.c.b16 %v2245, %v2241
    %v3506 = vpack.c.b16 %v2246, %v2242
    %v3507 = vpack.c.b16 %v2247, %v2243
    %v3508 = vpack.c.b16 %v2252, %v2248
    %v3509 = vpack.c.b16 %v2253, %v2249
    %v3510 = vpack.c.b16 %v2254, %v2250
    %v3511 = vpack.c.b16 %v2255, %v2251
    %v3512 = vpack.c.b16 %v2260, %v2256
    %v3513 = vpack.c.b16 %v2261, %v2257
    %v3514 = vpack.c.b16 %v2262, %v2258
    %v3515 = vpack.c.b16 %v2263, %v2259
    %v3516 = vpack.c.b16 %v2268, %v2264
    %v3517 = vpack.c.b16 %v2269, %v2265
    %v3518 = vpack.c.b16 %v2270, %v2266
    %v3519 = vpack.c.b16 %v2271, %v2267
    %v3520 = vpack.c.b16 %v2276, %v2272
    %v3521 = vpack.c.b16 %v2277, %v2273
    %v3522 = vpack.c.b16 %v2278, %v2274
    %v3523 = vpack.c.b16 %v2279, %v2275
    %v3524 = vpack.c.b16 %v2284, %v2280
    %v3525 = vpack.c.b16 %v2285, %v2281
    %v3526 = vpack.c.b16 %v2286, %v2282
    %v3527 = vpack.c.b16 %v2287, %v2283
    %v3528 = vpack.c.b16 %v2292, %v2288
    %v3529 = vpack.c.b16 %v2293, %v2289
    %v3530 = vpack.c.b16 %v2294, %v2290
    %v3531 = vpack.c.b16 %v2295, %v2291
    %v3532 = vpack.c.b16 %v2300, %v2296
    %v3533 = vpack.c.b16 %v2301, %v2297
    %v3534 = vpack.c.b16 %v2302, %v2298
    %v3535 = vpack.c.b16 %v2303, %v2299
    %v3536 = vpack.c.b16 %v2308, %v2304
    %v3537 = vpack.c.b16 %v2309, %v2305
    %v3538 = vpack.c.b16 %v2310, %v2306
    %v3539 = vpack.c.b16 %v2311, %v2307
    %v3540 = vpack.c.b16 %v2316, %v2312
    %v3541 = vpack.c.b16 %v2317, %v2313
    %v3542 = vpack.c.b16 %v2318, %v2314
    %v3543 = vpack.c.b16 %v2319, %v2315
    %v3544 = vpack.c.b16 %v2324, %v2320
    %v3545 = vpack.c.b16 %v2325, %v2321
    %v3546 = vpack.c.b16 %v2326, %v2322
    %v3547 = vpack.c.b16 %v2327, %v2323
    %v3548 = vpack.c.b16 %v2332, %v2328
    %v3549 = vpack.c.b16 %v2333, %v2329
    %v3550 = vpack.c.b16 %v2334, %v2330
    %v3551 = vpack.c.b16 %v2335, %v2331
    %v3552 = vpack.c.b16 %v2340, %v2336
    %v3553 = vpack.c.b16 %v2341, %v2337
    %v3554 = vpack.c.b16 %v2342, %v2338
    %v3555 = vpack.c.b16 %v2343, %v2339
    %v3556 = vpack.c.b16 %v2348, %v2344
    %v3557 = vpack.c.b16 %v2349, %v2345
    %v3558 = vpack.c.b16 %v2350, %v2346
    %v3559 = vpack.c.b16 %v2351, %v2347
    %v3560 = vpack.c.b16 %v2356, %v2352
    %v3561 = vpack.c.b16 %v2357, %v2353
    %v3562 = vpack.c.b16 %v2358, %v2354
    %v3563 = vpack.c.b16 %v2359, %v2355
    %v3564 = vpack.c.b16 %v2364, %v2360
    %v3565 = vpack.c.b16 %v2365, %v2361
    %v3566 = vpack.c.b16 %v2366, %v2362
    %v3567 = vpack.c.b16 %v2367, %v2363
    %v3568 = vpack.c.b16 %v2372, %v2368
    %v3569 = vpack.c.b16 %v2373, %v2369
    %v3570 = vpack.c.b16 %v2374, %v2370
    %v3571 = vpack.c.b16 %v2375, %v2371
    %v3572 = vpack.c.b16 %v2380, %v2376
    %v3573 = vpack.c.b16 %v2381, %v2377
    %v3574 = vpack.c.b16 %v2382, %v2378
    %v3575 = vpack.c.b16 %v2383, %v2379
    %v3576 = vpack.c.b16 %v2388, %v2384
    %v3577 = vpack.c.b16 %v2389, %v2385
    %v3578 = vpack.c.b16 %v2390, %v2386
    %v3579 = vpack.c.b16 %v2391, %v2387
    %v3580 = vpack.c.b16 %v2396, %v2392
    %v3581 = vpack.c.b16 %v2397, %v2393
    %v3582 = vpack.c.b16 %v2398, %v2394
    %v3583 = vpack.c.b16 %v2399, %v2395
    %v3584 = vpack.c.b16 %v2404, %v2400
    %v3585 = vpack.c.b16 %v2405, %v2401
    %v3586 = vpack.c.b16 %v2406, %v2402
    %v3587 = vpack.c.b16 %v2407, %v2403
    %v3588 = vpack.c.b16 %v2412, %v2408
    %v3589 = vpack.c.b16 %v2413, %v2409
    %v3590 = vpack.c.b16 %v2414, %v2410
    %v3591 = vpack.c.b16 %v2415, %v2411
    %v3592 = vpack.c.b16 %v2420, %v2416
    %v3593 = vpack.c.b16 %v2421, %v2417
    %v3594 = vpack.c.b16 %v2422, %v2418
    %v3595 = vpack.c.b16 %v2423, %v2419
    %v3596 = vpack.c.b16 %v2428, %v2424
    %v3597 = vpack.c.b16 %v2429, %v2425
    %v3598 = vpack.c.b16 %v2430, %v2426
    %v3599 = vpack.c.b16 %v2431, %v2427
    %v3600 = vpack.c.b16 %v2436, %v2432
    %v3601 = vpack.c.b16 %v2437, %v2433
    %v3602 = vpack.c.b16 %v2438, %v2434
    %v3603 = vpack.c.b16 %v2439, %v2435
    %v3604 = vpack.c.b16 %v2444, %v2440
    %v3605 = vpack.c.b16 %v2445, %v2441
    %v3606 = vpack.c.b16 %v2446, %v2442
    %v3607 = vpack.c.b16 %v2447, %v2443
    %v3608 = vpack.c.b16 %v2452, %v2448
    %v3609 = vpack.c.b16 %v2453, %v2449
    %v3610 = vpack.c.b16 %v2454, %v2450
    %v3611 = vpack.c.b16 %v2455, %v2451
    %v3612 = vpack.c.b16 %v2460, %v2456
    %v3613 = vpack.c.b16 %v2461, %v2457
    %v3614 = vpack.c.b16 %v2462, %v2458
    %v3615 = vpack.c.b16 %v2463, %v2459
    %v3616 = vpack.c.b16 %v2468, %v2464
    %v3617 = vpack.c.b16 %v2469, %v2465
    %v3618 = vpack.c.b16 %v2470, %v2466
    %v3619 = vpack.c.b16 %v2471, %v2467
    %v3620 = vpack.c.b16 %v2476, %v2472
    %v3621 = vpack.c.b16 %v2477, %v2473
    %v3622 = vpack.c.b16 %v2478, %v2474
    %v3623 = vpack.c.b16 %v2479, %v2475
    %v3624 = vpack.c.b16 %v2484, %v2480
    %v3625 = vpack.c.b16 %v2485, %v2481
    %v3626 = vpack.c.b16 %v2486, %v2482
    %v3627 = vpack.c.b16 %v2487, %v2483
    %v3628 = vpack.c.b16 %v2492, %v2488
    %v3629 = vpack.c.b16 %v2493, %v2489
    %v3630 = vpack.c.b16 %v2494, %v2490
    %v3631 = vpack.c.b16 %v2495, %v2491
    %v3632 = vpack.c.b16 %v2500, %v2496
    %v3633 = vpack.c.b16 %v2501, %v2497
    %v3634 = vpack.c.b16 %v2502, %v2498
    %v3635 = vpack.c.b16 %v2503, %v2499
    %v3636 = vpack.c.b16 %v2508, %v2504
    %v3637 = vpack.c.b16 %v2509, %v2505
    %v3638 = vpack.c.b16 %v2510, %v2506
    %v3639 = vpack.c.b16 %v2511, %v2507
    %v3640 = vpack.c.b16 %v2516, %v2512
    %v3641 = vpack.c.b16 %v2517, %v2513
    %v3642 = vpack.c.b16 %v2518, %v2514
    %v3643 = vpack.c.b16 %v2519, %v2515
    %v3644 = vpack.c.b16 %v2524, %v2520
    %v3645 = vpack.c.b16 %v2525, %v2521
    %v3646 = vpack.c.b16 %v2526, %v2522
    %v3647 = vpack.c.b16 %v2527, %v2523
    %v3648 = vpack.c.b16 %v2532, %v2528
    %v3649 = vpack.c.b16 %v2533, %v2529
    %v3650 = vpack.c.b16 %v2534, %v2530
    %v3651 = vpack.c.b16 %v2535, %v2531
    %v3652 = vpack.c.b16 %v2540, %v2536
    %v3653 = vpack.c.b16 %v2541, %v2537
    %v3654 = vpack.c.b16 %v2542, %v2538
    %v3655 = vpack.c.b16 %v2543, %v2539
    %v3656 = vpack.c.b16 %v2548, %v2544
    %v3657 = vpack.c.b16 %v2549, %v2545
    %v3658 = vpack.c.b16 %v2550, %v2546
    %v3659 = vpack.c.b16 %v2551, %v2547
    %v3660 = vpack.c.b16 %v2556, %v2552
    %v3661 = vpack.c.b16 %v2557, %v2553
    %v3662 = vpack.c.b16 %v2558, %v2554
    %v3663 = vpack.c.b16 %v2559, %v2555
    %v3664 = vpack.c.b16 %v2564, %v2560
    %v3665 = vpack.c.b16 %v2565, %v2561
    %v3666 = vpack.c.b16 %v2566, %v2562
    %v3667 = vpack.c.b16 %v2567, %v2563
    %v3668 = vpack.c.b16 %v2572, %v2568
    %v3669 = vpack.c.b16 %v2573, %v2569
    %v3670 = vpack.c.b16 %v2574, %v2570
    %v3671 = vpack.c.b16 %v2575, %v2571
    %v3672 = vpack.c.b16 %v2580, %v2576
    %v3673 = vpack.c.b16 %v2581, %v2577
    %v3674 = vpack.c.b16 %v2582, %v2578
    %v3675 = vpack.c.b16 %v2583, %v2579
    %v3676 = vpack.c.b16 %v2588, %v2584
    %v3677 = vpack.c.b16 %v2589, %v2585
    %v3678 = vpack.c.b16 %v2590, %v2586
    %v3679 = vpack.c.b16 %v2591, %v2587
    %v3680 = vpack.c.b16 %v2596, %v2592
    %v3681 = vpack.c.b16 %v2597, %v2593
    %v3682 = vpack.c.b16 %v2598, %v2594
    %v3683 = vpack.c.b16 %v2599, %v2595
    %v3684 = vpack.c.b16 %v2604, %v2600
    %v3685 = vpack.c.b16 %v2605, %v2601
    %v3686 = vpack.c.b16 %v2606, %v2602
    %v3687 = vpack.c.b16 %v2607, %v2603
    %v3688 = vpack.c.b16 %v2612, %v2608
    %v3689 = vpack.c.b16 %v2613, %v2609
    %v3690 = vpack.c.b16 %v2614, %v2610
    %v3691 = vpack.c.b16 %v2615, %v2611
    %v3692 = vpack.c.b16 %v2620, %v2616
    %v3693 = vpack.c.b16 %v2621, %v2617
    %v3694 = vpack.c.b16 %v2622, %v2618
    %v3695 = vpack.c.b16 %v2623, %v2619
    %v3696 = vpack.c.b16 %v2628, %v2624
    %v3697 = vpack.c.b16 %v2629, %v2625
    %v3698 = vpack.c.b16 %v2630, %v2626
    %v3699 = vpack.c.b16 %v2631, %v2627
    %v3700 = vpack.c.b16 %v2636, %v2632
    %v3701 = vpack.c.b16 %v2637, %v2633
    %v3702 = vpack.c.b16 %v2638, %v2634
    %v3703 = vpack.c.b16 %v2639, %v2635
    %v3704 = vpack.c.b16 %v2644, %v2640
    %v3705 = vpack.c.b16 %v2645, %v2641
    %v3706 = vpack.c.b16 %v2646, %v2642
    %v3707 = vpack.c.b16 %v2647, %v2643
    %v3708 = vpack.c.b16 %v2652, %v2648
    %v3709 = vpack.c.b16 %v2653, %v2649
    %v3710 = vpack.c.b16 %v2654, %v2650
    %v3711 = vpack.c.b16 %v2655, %v2651
    %v3712 = vpack.c.b16 %v2660, %v2656
    %v3713 = vpack.c.b16 %v2661, %v2657
    %v3714 = vpack.c.b16 %v2662, %v2658
    %v3715 = vpack.c.b16 %v2663, %v2659
    %v3716 = vpack.c.b16 %v2668, %v2664
    %v3717 = vpack.c.b16 %v2669, %v2665
    %v3718 = vpack.c.b16 %v2670, %v2666
    %v3719 = vpack.c.b16 %v2671, %v2667
    %v3720 = vpack.c.b16 %v2676, %v2672
    %v3721 = vpack.c.b16 %v2677, %v2673
    %v3722 = vpack.c.b16 %v2678, %v2674
    %v3723 = vpack.c.b16 %v2679, %v2675
    %v3724 = vpack.c.b16 %v2684, %v2680
    %v3725 = vpack.c.b16 %v2685, %v2681
    %v3726 = vpack.c.b16 %v2686, %v2682
    %v3727 = vpack.c.b16 %v2687, %v2683
    %v3728 = vpack.c.b16 %v2692, %v2688
    %v3729 = vpack.c.b16 %v2693, %v2689
    %v3730 = vpack.c.b16 %v2694, %v2690
    %v3731 = vpack.c.b16 %v2695, %v2691
    %v3732 = vpack.c.b16 %v2700, %v2696
    %v3733 = vpack.c.b16 %v2701, %v2697
    %v3734 = vpack.c.b16 %v2702, %v2698
    %v3735 = vpack.c.b16 %v2703, %v2699
    %v3736 = vpack.c.b16 %v2708, %v2704
    %v3737 = vpack.c.b16 %v2709, %v2705
    %v3738 = vpack.c.b16 %v2710, %v2706
    %v3739 = vpack.c.b16 %v2711, %v2707
    %v3740 = vpack.c.b16 %v2716, %v2712
    %v3741 = vpack.c.b16 %v2717, %v2713
    %v3742 = vpack.c.b16 %v2718, %v2714
    %v3743 = vpack.c.b16 %v2719, %v2715
    %v3744 = vpack.c.b16 %v2724, %v2720
    %v3745 = vpack.c.b16 %v2725, %v2721
    %v3746 = vpack.c.b16 %v2726, %v2722
    %v3747 = vpack.c.b16 %v2727, %v2723
    %v3748 = vpack.c.b16 %v2732, %v2728
    %v3749 = vpack.c.b16 %v2733, %v2729
    %v3750 = vpack.c.b16 %v2734, %v2730
    %v3751 = vpack.c.b16 %v2735, %v2731
    %v3752 = vpack.c.b16 %v2740, %v2736
    %v3753 = vpack.c.b16 %v2741, %v2737
    %v3754 = vpack.c.b16 %v2742, %v2738
    %v3755 = vpack.c.b16 %v2743, %v2739
    %v3756 = vpack.c.b16 %v2748, %v2744
    %v3757 = vpack.c.b16 %v2749, %v2745
    %v3758 = vpack.c.b16 %v2750, %v2746
    %v3759 = vpack.c.b16 %v2751, %v2747
    %v3760 = vpack.c.b16 %v2756, %v2752
    %v3761 = vpack.c.b16 %v2757, %v2753
    %v3762 = vpack.c.b16 %v2758, %v2754
    %v3763 = vpack.c.b16 %v2759, %v2755
    %v3764 = vpack.c.b16 %v2764, %v2760
    %v3765 = vpack.c.b16 %v2765, %v2761
    %v3766 = vpack.c.b16 %v2766, %v2762
    %v3767 = vpack.c.b16 %v2767, %v2763
    %v3768 = vpack.c.b16 %v2772, %v2768
    %v3769 = vpack.c.b16 %v2773, %v2769
    %v3770 = vpack.c.b16 %v2774, %v2770
    %v3771 = vpack.c.b16 %v2775, %v2771
    %v3772 = vpack.c.b16 %v2780, %v2776
    %v3773 = vpack.c.b16 %v2781, %v2777
    %v3774 = vpack.c.b16 %v2782, %v2778
    %v3775 = vpack.c.b16 %v2783, %v2779
    %v3776 = vpack.c.b16 %v2788, %v2784
    %v3777 = vpack.c.b16 %v2789, %v2785
    %v3778 = vpack.c.b16 %v2790, %v2786
    %v3779 = vpack.c.b16 %v2791, %v2787
    %v3780 = vpack.c.b16 %v2796, %v2792
    %v3781 = vpack.c.b16 %v2797, %v2793
    %v3782 = vpack.c.b16 %v2798, %v2794
    %v3783 = vpack.c.b16 %v2799, %v2795
    %v3784 = vpack.c.b16 %v2804, %v2800
    %v3785 = vpack.c.b16 %v2805, %v2801
    %v3786 = vpack.c.b16 %v2806, %v2802
    %v3787 = vpack.c.b16 %v2807, %v2803
    %v3788 = vpack.c.b16 %v2812, %v2808
    %v3789 = vpack.c.b16 %v2813, %v2809
    %v3790 = vpack.c.b16 %v2814, %v2810
    %v3791 = vpack.c.b16 %v2815, %v2811
    %v3792 = vpack.c.b16 %v2820, %v2816
    %v3793 = vpack.c.b16 %v2821, %v2817
    %v3794 = vpack.c.b16 %v2822, %v2818
    %v3795 = vpack.c.b16 %v2823, %v2819
    %v3796 = vpack.c.b16 %v2828, %v2824
    %v3797 = vpack.c.b16 %v2829, %v2825
    %v3798 = vpack.c.b16 %v2830, %v2826
    %v3799 = vpack.c.b16 %v2831, %v2827
    %v3800 = vpack.c.b16 %v2836, %v2832
    %v3801 = vpack.c.b16 %v2837, %v2833
    %v3802 = vpack.c.b16 %v2838, %v2834
    %v3803 = vpack.c.b16 %v2839, %v2835
    %v3804 = vpack.c.b16 %v2844, %v2840
    %v3805 = vpack.c.b16 %v2845, %v2841
    %v3806 = vpack.c.b16 %v2846, %v2842
    %v3807 = vpack.c.b16 %v2847, %v2843
    %v3808 = vpack.c.b16 %v2852, %v2848
    %v3809 = vpack.c.b16 %v2853, %v2849
    %v3810 = vpack.c.b16 %v2854, %v2850
    %v3811 = vpack.c.b16 %v2855, %v2851
    %v3812 = vpack.c.b16 %v2860, %v2856
    %v3813 = vpack.c.b16 %v2861, %v2857
    %v3814 = vpack.c.b16 %v2862, %v2858
    %v3815 = vpack.c.b16 %v2863, %v2859
    %v3816 = vpack.c.b16 %v2868, %v2864
    %v3817 = vpack.c.b16 %v2869, %v2865
    %v3818 = vpack.c.b16 %v2870, %v2866
    %v3819 = vpack.c.b16 %v2871, %v2867
    %v3820 = vpack.c.b16 %v2876, %v2872
    %v3821 = vpack.c.b16 %v2877, %v2873
    %v3822 = vpack.c.b16 %v2878, %v2874
    %v3823 = vpack.c.b16 %v2879, %v2875
    %v3824 = vpack.c.b16 %v2884, %v2880
    %v3825 = vpack.c.b16 %v2885, %v2881
    %v3826 = vpack.c.b16 %v2886, %v2882
    %v3827 = vpack.c.b16 %v2887, %v2883
    %v3828 = vpack.c.b16 %v2892, %v2888
    %v3829 = vpack.c.b16 %v2893, %v2889
    %v3830 = vpack.c.b16 %v2894, %v2890
    %v3831 = vpack.c.b16 %v2895, %v2891
    %v3832 = vpack.c.b16 %v2900, %v2896
    %v3833 = vpack.c.b16 %v2901, %v2897
    %v3834 = vpack.c.b16 %v2902, %v2898
    %v3835 = vpack.c.b16 %v2903, %v2899
    %v3836 = vpack.c.b16 %v2908, %v2904
    %v3837 = vpack.c.b16 %v2909, %v2905
    %v3838 = vpack.c.b16 %v2910, %v2906
    %v3839 = vpack.c.b16 %v2911, %v2907
    %v3840 = vpack.c.b16 %v2916, %v2912
    %v3841 = vpack.c.b16 %v2917, %v2913
    %v3842 = vpack.c.b16 %v2918, %v2914
    %v3843 = vpack.c.b16 %v2919, %v2915
    %v3844 = vpack.c.b16 %v2924, %v2920
    %v3845 = vpack.c.b16 %v2925, %v2921
    %v3846 = vpack.c.b16 %v2926, %v2922
    %v3847 = vpack.c.b16 %v2927, %v2923
    %v3848 = vpack.c.b16 %v2932, %v2928
    %v3849 = vpack.c.b16 %v2933, %v2929
    %v3850 = vpack.c.b16 %v2934, %v2930
    %v3851 = vpack.c.b16 %v2935, %v2931
    %v3852 = vpack.c.b16 %v2940, %v2936
    %v3853 = vpack.c.b16 %v2941, %v2937
    %v3854 = vpack.c.b16 %v2942, %v2938
    %v3855 = vpack.c.b16 %v2943, %v2939
    %v3856 = vpack.c.b16 %v2948, %v2944
    %v3857 = vpack.c.b16 %v2949, %v2945
    %v3858 = vpack.c.b16 %v2950, %v2946
    %v3859 = vpack.c.b16 %v2951, %v2947
    %v3860 = vpack.c.b16 %v2956, %v2952
    %v3861 = vpack.c.b16 %v2957, %v2953
    %v3862 = vpack.c.b16 %v2958, %v2954
    %v3863 = vpack.c.b16 %v2959, %v2955
    %v3864 = vpack.c.b16 %v2964, %v2960
    %v3865 = vpack.c.b16 %v2965, %v2961
    %v3866 = vpack.c.b16 %v2966, %v2962
    %v3867 = vpack.c.b16 %v2967, %v2963
    %v3868 = vpack.c.b16 %v2972, %v2968
    %v3869 = vpack.c.b16 %v2973, %v2969
    %v3870 = vpack.c.b16 %v2974, %v2970
    %v3871 = vpack.c.b16 %v2975, %v2971
    %v3872 = vpack.c.b16 %v2980, %v2976
    %v3873 = vpack.c.b16 %v2981, %v2977
    %v3874 = vpack.c.b16 %v2982, %v2978
    %v3875 = vpack.c.b16 %v2983, %v2979
    %v3876 = vpack.c.b16 %v2988, %v2984
    %v3877 = vpack.c.b16 %v2989, %v2985
    %v3878 = vpack.c.b16 %v2990, %v2986
    %v3879 = vpack.c.b16 %v2991, %v2987
    %v3880 = vpack.c.b16 %v2996, %v2992
    %v3881 = vpack.c.b16 %v2997, %v2993
    %v3882 = vpack.c.b16 %v2998, %v2994
    %v3883 = vpack.c.b16 %v2999, %v2995
    %v3884 = vpack.c.b16 %v3004, %v3000
    %v3885 = vpack.c.b16 %v3005, %v3001
    %v3886 = vpack.c.b16 %v3006, %v3002
    %v3887 = vpack.c.b16 %v3007, %v3003
    %v3888 = vpack.c.b16 %v3012, %v3008
    %v3889 = vpack.c.b16 %v3013, %v3009
    %v3890 = vpack.c.b16 %v3014, %v3010
    %v3891 = vpack.c.b16 %v3015, %v3011
    %v3892 = vpack.c.b16 %v3020, %v3016
    %v3893 = vpack.c.b16 %v3021, %v3017
    %v3894 = vpack.c.b16 %v3022, %v3018
    %v3895 = vpack.c.b16 %v3023, %v3019
    %v3896 = vpack.c.b16 %v3028, %v3024
    %v3897 = vpack.c.b16 %v3029, %v3025
    %v3898 = vpack.c.b16 %v3030, %v3026
    %v3899 = vpack.c.b16 %v3031, %v3027
    %v3900 = vpack.c.b16 %v3036, %v3032
    %v3901 = vpack.c.b16 %v3037, %v3033
    %v3902 = vpack.c.b16 %v3038, %v3034
    %v3903 = vpack.c.b16 %v3039, %v3035
    %v3904 = vpack.c.b16 %v3044, %v3040
    %v3905 = vpack.c.b16 %v3045, %v3041
    %v3906 = vpack.c.b16 %v3046, %v3042
    %v3907 = vpack.c.b16 %v3047, %v3043
    %v3908 = vpack.c.b16 %v3052, %v3048
    %v3909 = vpack.c.b16 %v3053, %v3049
    %v3910 = vpack.c.b16 %v3054, %v3050
    %v3911 = vpack.c.b16 %v3055, %v3051
    %v3912 = vpack.c.b16 %v3060, %v3056
    %v3913 = vpack.c.b16 %v3061, %v3057
    %v3914 = vpack.c.b16 %v3062, %v3058
    %v3915 = vpack.c.b16 %v3063, %v3059
    %v3916 = vpack.c.b16 %v3068, %v3064
    %v3917 = vpack.c.b16 %v3069, %v3065
    %v3918 = vpack.c.b16 %v3070, %v3066
    %v3919 = vpack.c.b16 %v3071, %v3067
    %v3920 = vpack.c.b16 %v3076, %v3072
    %v3921 = vpack.c.b16 %v3077, %v3073
    %v3922 = vpack.c.b16 %v3078, %v3074
    %v3923 = vpack.c.b16 %v3079, %v3075
    %v3924 = vpack.c.b16 %v3084, %v3080
    %v3925 = vpack.c.b16 %v3085, %v3081
    %v3926 = vpack.c.b16 %v3086, %v3082
    %v3927 = vpack.c.b16 %v3087, %v3083
    %v3928 = vpack.c.b16 %v3092, %v3088
    %v3929 = vpack.c.b16 %v3093, %v3089
    %v3930 = vpack.c.b16 %v3094, %v3090
    %v3931 = vpack.c.b16 %v3095, %v3091
    %v3932 = vpack.c.b16 %v3100, %v3096
    %v3933 = vpack.c.b16 %v3101, %v3097
    %v3934 = vpack.c.b16 %v3102, %v3098
    %v3935 = vpack.c.b16 %v3103, %v3099
    %v3936 = vpack.c.b16 %v3108, %v3104
    %v3937 = vpack.c.b16 %v3109, %v3105
    %v3938 = vpack.c.b16 %v3110, %v3106
    %v3939 = vpack.c.b16 %v3111, %v3107
    %v3940 = vpack.c.b16 %v3116, %v3112
    %v3941 = vpack.c.b16 %v3117, %v3113
    %v3942 = vpack.c.b16 %v3118, %v3114
    %v3943 = vpack.c.b16 %v3119, %v3115
    %v3944 = vpack.c.b16 %v3124, %v3120
    %v3945 = vpack.c.b16 %v3125, %v3121
    %v3946 = vpack.c.b16 %v3126, %v3122
    %v3947 = vpack.c.b16 %v3127, %v3123
    %v3948 = vpack.c.b16 %v3132, %v3128
    %v3949 = vpack.c.b16 %v3133, %v3129
    %v3950 = vpack.c.b16 %v3134, %v3130
    %v3951 = vpack.c.b16 %v3135, %v3131
    %v3952 = vpack.c.b16 %v3140, %v3136
    %v3953 = vpack.c.b16 %v3141, %v3137
    %v3954 = vpack.c.b16 %v3142, %v3138
    %v3955 = vpack.c.b16 %v3143, %v3139
    %v3956 = vpack.c.b16 %v3148, %v3144
    %v3957 = vpack.c.b16 %v3149, %v3145
    %v3958 = vpack.c.b16 %v3150, %v3146
    %v3959 = vpack.c.b16 %v3151, %v3147
    %v3960 = vpack.c.b16 %v3156, %v3152
    %v3961 = vpack.c.b16 %v3157, %v3153
    %v3962 = vpack.c.b16 %v3158, %v3154
    %v3963 = vpack.c.b16 %v3159, %v3155
    %v3964 = vpack.c.b16 %v3164, %v3160
    %v3965 = vpack.c.b16 %v3165, %v3161
    %v3966 = vpack.c.b16 %v3166, %v3162
    %v3967 = vpack.c.b16 %v3167, %v3163
    %v3968 = vpack.c.b16 %v3172, %v3168
    %v3969 = vpack.c.b16 %v3173, %v3169
    %v3970 = vpack.c.b16 %v3174, %v3170
    %v3971 = vpack.c.b16 %v3175, %v3171
    %v3972 = vpack.c.b16 %v3180, %v3176
    %v3973 = vpack.c.b16 %v3181, %v3177
    %v3974 = vpack.c.b16 %v3182, %v3178
    %v3975 = vpack.c.b16 %v3183, %v3179
    %v3976 = vpack.c.b16 %v3188, %v3184
    %v3977 = vpack.c.b16 %v3189, %v3185
    %v3978 = vpack.c.b16 %v3190, %v3186
    %v3979 = vpack.c.b16 %v3191, %v3187
    %v3980 = vpack.c.b16 %v3196, %v3192
    %v3981 = vpack.c.b16 %v3197, %v3193
    %v3982 = vpack.c.b16 %v3198, %v3194
    %v3983 = vpack.c.b16 %v3199, %v3195
    %v3984 = vpack.c.b16 %v3204, %v3200
    %v3985 = vpack.c.b16 %v3205, %v3201
    %v3986 = vpack.c.b16 %v3206, %v3202
    %v3987 = vpack.c.b16 %v3207, %v3203
    %v3988 = vpack.c.b16 %v3212, %v3208
    %v3989 = vpack.c.b16 %v3213, %v3209
    %v3990 = vpack.c.b16 %v3214, %v3210
    %v3991 = vpack.c.b16 %v3215, %v3211
    %v3992 = vpack.c.b16 %v3220, %v3216
    %v3993 = vpack.c.b16 %v3221, %v3217
    %v3994 = vpack.c.b16 %v3222, %v3218
    %v3995 = vpack.c.b16 %v3223, %v3219
    %v3996 = vpack.c.b16 %v3228, %v3224
    %v3997 = vpack.c.b16 %v3229, %v3225
    %v3998 = vpack.c.b16 %v3230, %v3226
    %v3999 = vpack.c.b16 %v3231, %v3227
    %4768 = vmatpush.bf16.msra.mxu0 %v3260
    %4769 = vmatpush.bf16.msra.mxu0 %v3256
    %4770 = vmatpush.bf16.msra.mxu0 %v3252
    %4771 = vmatpush.bf16.msra.mxu0 %v3248
    %4772 = vmatpush.bf16.msra.mxu0 %v3244
    %4773 = vmatpush.bf16.msra.mxu0 %v3240
    %4774 = vmatpush.bf16.msra.mxu0 %v3236
    %4775 = vmatpush.bf16.msra.mxu0 %v3232
    %4776 = vmatmul.bf16.gmra.mxu0 %v876
    %v4777 = vpop.f32.mrf.mxu0
    %v4778 = vadd.f32 %v866, %v4777
    %v4779 = vpop.f32.mrf.mxu0
    %4780 = vdwg.mxu0
    %4781 = vmatpush.bf16.msra.mxu0 %v3292
    %4782 = vmatpush.bf16.msra.mxu0 %v3288
    %4783 = vmatpush.bf16.msra.mxu0 %v3284
    %4784 = vmatpush.bf16.msra.mxu0 %v3280
    %4785 = vmatpush.bf16.msra.mxu0 %v3276
    %4786 = vmatpush.bf16.msra.mxu0 %v3272
    %4787 = vmatpush.bf16.msra.mxu0 %v3268
    %4788 = vmatpush.bf16.msra.mxu0 %v3264
    %4789 = vmatmul.bf16.gmra.mxu0 %v877
    %v4790 = vpop.f32.mrf.mxu0
    %v4791 = vadd.f32 %v4778, %v4790
    %v4792 = vpop.f32.mrf.mxu0
    %4793 = vdwg.mxu0
    %4794 = vmatpush.bf16.msra.mxu0 %v3324
    %4795 = vmatpush.bf16.msra.mxu0 %v3320
    %4796 = vmatpush.bf16.msra.mxu0 %v3316
    %4797 = vmatpush.bf16.msra.mxu0 %v3312
    %4798 = vmatpush.bf16.msra.mxu0 %v3308
    %4799 = vmatpush.bf16.msra.mxu0 %v3304
    %4800 = vmatpush.bf16.msra.mxu0 %v3300
    %4801 = vmatpush.bf16.msra.mxu0 %v3296
    %4802 = vmatmul.bf16.gmra.mxu0 %v878
    %v4803 = vpop.f32.mrf.mxu0
    %v4804 = vadd.f32 %v4791, %v4803
    %v4805 = vpop.f32.mrf.mxu0
    %4806 = vdwg.mxu0
    %4807 = vmatpush.bf16.msra.mxu0 %v3356
    %4808 = vmatpush.bf16.msra.mxu0 %v3352
    %4809 = vmatpush.bf16.msra.mxu0 %v3348
    %4810 = vmatpush.bf16.msra.mxu0 %v3344
    %4811 = vmatpush.bf16.msra.mxu0 %v3340
    %4812 = vmatpush.bf16.msra.mxu0 %v3336
    %4813 = vmatpush.bf16.msra.mxu0 %v3332
    %4814 = vmatpush.bf16.msra.mxu0 %v3328
    %4815 = vmatmul.bf16.gmra.mxu0 %v879
    %v4816 = vpop.f32.mrf.mxu0
    %v4817 = vadd.f32 %v4804, %v4816
    %v4818 = vpop.f32.mrf.mxu0
    %4819 = vdwg.mxu0
    %4820 = vmatpush.bf16.msra.mxu0 %v3388
    %4821 = vmatpush.bf16.msra.mxu0 %v3384
    %4822 = vmatpush.bf16.msra.mxu0 %v3380
    %4823 = vmatpush.bf16.msra.mxu0 %v3376
    %4824 = vmatpush.bf16.msra.mxu0 %v3372
    %4825 = vmatpush.bf16.msra.mxu0 %v3368
    %4826 = vmatpush.bf16.msra.mxu0 %v3364
    %4827 = vmatpush.bf16.msra.mxu0 %v3360
    %4828 = vmatmul.bf16.gmra.mxu0 %v880
    %v4829 = vpop.f32.mrf.mxu0
    %v4830 = vadd.f32 %v4817, %v4829
    %v4831 = vpop.f32.mrf.mxu0
    %4832 = vdwg.mxu0
    %4833 = vmatpush.bf16.msra.mxu0 %v3420
    %4834 = vmatpush.bf16.msra.mxu0 %v3416
    %4835 = vmatpush.bf16.msra.mxu0 %v3412
    %4836 = vmatpush.bf16.msra.mxu0 %v3408
    %4837 = vmatpush.bf16.msra.mxu0 %v3404
    %4838 = vmatpush.bf16.msra.mxu0 %v3400
    %4839 = vmatpush.bf16.msra.mxu0 %v3396
    %4840 = vmatpush.bf16.msra.mxu0 %v3392
    %4841 = vmatmul.bf16.gmra.mxu0 %v881
    %v4842 = vpop.f32.mrf.mxu0
    %v4843 = vadd.f32 %v4830, %v4842
    %v4844 = vpop.f32.mrf.mxu0
    %4845 = vdwg.mxu0
    %4846 = vmatpush.bf16.msra.mxu0 %v3452
    %4847 = vmatpush.bf16.msra.mxu0 %v3448
    %4848 = vmatpush.bf16.msra.mxu0 %v3444
    %4849 = vmatpush.bf16.msra.mxu0 %v3440
    %4850 = vmatpush.bf16.msra.mxu0 %v3436
    %4851 = vmatpush.bf16.msra.mxu0 %v3432
    %4852 = vmatpush.bf16.msra.mxu0 %v3428
    %4853 = vmatpush.bf16.msra.mxu0 %v3424
    %4854 = vmatmul.bf16.gmra.mxu0 %v882
    %v4855 = vpop.f32.mrf.mxu0
    %v4856 = vadd.f32 %v4843, %v4855
    %v4857 = vpop.f32.mrf.mxu0
    %4858 = vdwg.mxu0
    %4859 = vmatpush.bf16.msra.mxu0 %v3484
    %4860 = vmatpush.bf16.msra.mxu0 %v3480
    %4861 = vmatpush.bf16.msra.mxu0 %v3476
    %4862 = vmatpush.bf16.msra.mxu0 %v3472
    %4863 = vmatpush.bf16.msra.mxu0 %v3468
    %4864 = vmatpush.bf16.msra.mxu0 %v3464
    %4865 = vmatpush.bf16.msra.mxu0 %v3460
    %4866 = vmatpush.bf16.msra.mxu0 %v3456
    %4867 = vmatmul.bf16.gmra.mxu0 %v883
    %v4868 = vpop.f32.mrf.mxu0
    %v4869 = vadd.f32 %v4856, %v4868
    %v4870 = vpop.f32.mrf.mxu0
    %4871 = vdwg.mxu0
    %4872 = vmatpush.bf16.msra.mxu0 %v3516
    %4873 = vmatpush.bf16.msra.mxu0 %v3512
    %4874 = vmatpush.bf16.msra.mxu0 %v3508
    %4875 = vmatpush.bf16.msra.mxu0 %v3504
    %4876 = vmatpush.bf16.msra.mxu0 %v3500
    %4877 = vmatpush.bf16.msra.mxu0 %v3496
    %4878 = vmatpush.bf16.msra.mxu0 %v3492
    %4879 = vmatpush.bf16.msra.mxu0 %v3488
    %4880 = vmatmul.bf16.gmra.mxu0 %v886
    %v4881 = vpop.f32.mrf.mxu0
    %v4882 = vadd.f32 %v4869, %v4881
    %v4883 = vpop.f32.mrf.mxu0
    %4884 = vdwg.mxu0
    %4885 = vmatpush.bf16.msra.mxu0 %v3548
    %4886 = vmatpush.bf16.msra.mxu0 %v3544
    %4887 = vmatpush.bf16.msra.mxu0 %v3540
    %4888 = vmatpush.bf16.msra.mxu0 %v3536
    %4889 = vmatpush.bf16.msra.mxu0 %v3532
    %4890 = vmatpush.bf16.msra.mxu0 %v3528
    %4891 = vmatpush.bf16.msra.mxu0 %v3524
    %4892 = vmatpush.bf16.msra.mxu0 %v3520
    %4893 = vmatmul.bf16.gmra.mxu0 %v887
    %v4894 = vpop.f32.mrf.mxu0
    %v4895 = vadd.f32 %v4882, %v4894
    %v4896 = vpop.f32.mrf.mxu0
    %4897 = vdwg.mxu0
    %4898 = vmatpush.bf16.msra.mxu0 %v3580
    %4899 = vmatpush.bf16.msra.mxu0 %v3576
    %4900 = vmatpush.bf16.msra.mxu0 %v3572
    %4901 = vmatpush.bf16.msra.mxu0 %v3568
    %4902 = vmatpush.bf16.msra.mxu0 %v3564
    %4903 = vmatpush.bf16.msra.mxu0 %v3560
    %4904 = vmatpush.bf16.msra.mxu0 %v3556
    %4905 = vmatpush.bf16.msra.mxu0 %v3552
    %4906 = vmatmul.bf16.gmra.mxu0 %v888
    %v4907 = vpop.f32.mrf.mxu0
    %v4908 = vadd.f32 %v4895, %v4907
    %v4909 = vpop.f32.mrf.mxu0
    %4910 = vdwg.mxu0
    %4911 = vmatpush.bf16.msra.mxu0 %v3612
    %4912 = vmatpush.bf16.msra.mxu0 %v3608
    %4913 = vmatpush.bf16.msra.mxu0 %v3604
    %4914 = vmatpush.bf16.msra.mxu0 %v3600
    %4915 = vmatpush.bf16.msra.mxu0 %v3596
    %4916 = vmatpush.bf16.msra.mxu0 %v3592
    %4917 = vmatpush.bf16.msra.mxu0 %v3588
    %4918 = vmatpush.bf16.msra.mxu0 %v3584
    %4919 = vmatmul.bf16.gmra.mxu0 %v889
    %v4920 = vpop.f32.mrf.mxu0
    %v4921 = vadd.f32 %v4908, %v4920
    %v4922 = vpop.f32.mrf.mxu0
    %4923 = vdwg.mxu0
    %4924 = vmatpush.bf16.msra.mxu0 %v3644
    %4925 = vmatpush.bf16.msra.mxu0 %v3640
    %4926 = vmatpush.bf16.msra.mxu0 %v3636
    %4927 = vmatpush.bf16.msra.mxu0 %v3632
    %4928 = vmatpush.bf16.msra.mxu0 %v3628
    %4929 = vmatpush.bf16.msra.mxu0 %v3624
    %4930 = vmatpush.bf16.msra.mxu0 %v3620
    %4931 = vmatpush.bf16.msra.mxu0 %v3616
    %4932 = vmatmul.bf16.gmra.mxu0 %v890
    %v4933 = vpop.f32.mrf.mxu0
    %v4934 = vadd.f32 %v4921, %v4933
    %v4935 = vpop.f32.mrf.mxu0
    %4936 = vdwg.mxu0
    %4937 = vmatpush.bf16.msra.mxu0 %v3676
    %4938 = vmatpush.bf16.msra.mxu0 %v3672
    %4939 = vmatpush.bf16.msra.mxu0 %v3668
    %4940 = vmatpush.bf16.msra.mxu0 %v3664
    %4941 = vmatpush.bf16.msra.mxu0 %v3660
    %4942 = vmatpush.bf16.msra.mxu0 %v3656
    %4943 = vmatpush.bf16.msra.mxu0 %v3652
    %4944 = vmatpush.bf16.msra.mxu0 %v3648
    %4945 = vmatmul.bf16.gmra.mxu0 %v891
    %v4946 = vpop.f32.mrf.mxu0
    %v4947 = vadd.f32 %v4934, %v4946
    %v4948 = vpop.f32.mrf.mxu0
    %4949 = vdwg.mxu0
    %4950 = vmatpush.bf16.msra.mxu0 %v3708
    %4951 = vmatpush.bf16.msra.mxu0 %v3704
    %4952 = vmatpush.bf16.msra.mxu0 %v3700
    %4953 = vmatpush.bf16.msra.mxu0 %v3696
    %4954 = vmatpush.bf16.msra.mxu0 %v3692
    %4955 = vmatpush.bf16.msra.mxu0 %v3688
    %4956 = vmatpush.bf16.msra.mxu0 %v3684
    %4957 = vmatpush.bf16.msra.mxu0 %v3680
    %4958 = vmatmul.bf16.gmra.mxu0 %v892
    %v4959 = vpop.f32.mrf.mxu0
    %v4960 = vadd.f32 %v4947, %v4959
    %v4961 = vpop.f32.mrf.mxu0
    %4962 = vdwg.mxu0
    %4963 = vmatpush.bf16.msra.mxu0 %v3740
    %4964 = vmatpush.bf16.msra.mxu0 %v3736
    %4965 = vmatpush.bf16.msra.mxu0 %v3732
    %4966 = vmatpush.bf16.msra.mxu0 %v3728
    %4967 = vmatpush.bf16.msra.mxu0 %v3724
    %4968 = vmatpush.bf16.msra.mxu0 %v3720
    %4969 = vmatpush.bf16.msra.mxu0 %v3716
    %4970 = vmatpush.bf16.msra.mxu0 %v3712
    %4971 = vmatmul.bf16.gmra.mxu0 %v893
    %v4972 = vpop.f32.mrf.mxu0
    %v4973 = vadd.f32 %v4960, %v4972
    %v4974 = vpop.f32.mrf.mxu0
    %4975 = vdwg.mxu0
    %4976 = vmatpush.bf16.msra.mxu0 %v3772
    %4977 = vmatpush.bf16.msra.mxu0 %v3768
    %4978 = vmatpush.bf16.msra.mxu0 %v3764
    %4979 = vmatpush.bf16.msra.mxu0 %v3760
    %4980 = vmatpush.bf16.msra.mxu0 %v3756
    %4981 = vmatpush.bf16.msra.mxu0 %v3752
    %4982 = vmatpush.bf16.msra.mxu0 %v3748
    %4983 = vmatpush.bf16.msra.mxu0 %v3744
    %4984 = vmatmul.bf16.gmra.mxu0 %v896
    %v4985 = vpop.f32.mrf.mxu0
    %v4986 = vadd.f32 %v4973, %v4985
    %v4987 = vpop.f32.mrf.mxu0
    %4988 = vdwg.mxu0
    %4989 = vmatpush.bf16.msra.mxu0 %v3804
    %4990 = vmatpush.bf16.msra.mxu0 %v3800
    %4991 = vmatpush.bf16.msra.mxu0 %v3796
    %4992 = vmatpush.bf16.msra.mxu0 %v3792
    %4993 = vmatpush.bf16.msra.mxu0 %v3788
    %4994 = vmatpush.bf16.msra.mxu0 %v3784
    %4995 = vmatpush.bf16.msra.mxu0 %v3780
    %4996 = vmatpush.bf16.msra.mxu0 %v3776
    %4997 = vmatmul.bf16.gmra.mxu0 %v897
    %v4998 = vpop.f32.mrf.mxu0
    %v4999 = vadd.f32 %v4986, %v4998
    %v5000 = vpop.f32.mrf.mxu0
    %5001 = vdwg.mxu0
    %5002 = vmatpush.bf16.msra.mxu0 %v3836
    %5003 = vmatpush.bf16.msra.mxu0 %v3832
    %5004 = vmatpush.bf16.msra.mxu0 %v3828
    %5005 = vmatpush.bf16.msra.mxu0 %v3824
    %5006 = vmatpush.bf16.msra.mxu0 %v3820
    %5007 = vmatpush.bf16.msra.mxu0 %v3816
    %5008 = vmatpush.bf16.msra.mxu0 %v3812
    %5009 = vmatpush.bf16.msra.mxu0 %v3808
    %5010 = vmatmul.bf16.gmra.mxu0 %v898
    %v5011 = vpop.f32.mrf.mxu0
    %v5012 = vadd.f32 %v4999, %v5011
    %v5013 = vpop.f32.mrf.mxu0
    %5014 = vdwg.mxu0
    %5015 = vmatpush.bf16.msra.mxu0 %v3868
    %5016 = vmatpush.bf16.msra.mxu0 %v3864
    %5017 = vmatpush.bf16.msra.mxu0 %v3860
    %5018 = vmatpush.bf16.msra.mxu0 %v3856
    %5019 = vmatpush.bf16.msra.mxu0 %v3852
    %5020 = vmatpush.bf16.msra.mxu0 %v3848
    %5021 = vmatpush.bf16.msra.mxu0 %v3844
    %5022 = vmatpush.bf16.msra.mxu0 %v3840
    %5023 = vmatmul.bf16.gmra.mxu0 %v899
    %v5024 = vpop.f32.mrf.mxu0
    %v5025 = vadd.f32 %v5012, %v5024
    %v5026 = vpop.f32.mrf.mxu0
    %5027 = vdwg.mxu0
    %5028 = vmatpush.bf16.msra.mxu0 %v3900
    %5029 = vmatpush.bf16.msra.mxu0 %v3896
    %5030 = vmatpush.bf16.msra.mxu0 %v3892
    %5031 = vmatpush.bf16.msra.mxu0 %v3888
    %5032 = vmatpush.bf16.msra.mxu0 %v3884
    %5033 = vmatpush.bf16.msra.mxu0 %v3880
    %5034 = vmatpush.bf16.msra.mxu0 %v3876
    %5035 = vmatpush.bf16.msra.mxu0 %v3872
    %5036 = vmatmul.bf16.gmra.mxu0 %v900
    %v5037 = vpop.f32.mrf.mxu0
    %v5038 = vadd.f32 %v5025, %v5037
    %v5039 = vpop.f32.mrf.mxu0
    %5040 = vdwg.mxu0
    %5041 = vmatpush.bf16.msra.mxu0 %v3932
    %5042 = vmatpush.bf16.msra.mxu0 %v3928
    %5043 = vmatpush.bf16.msra.mxu0 %v3924
    %5044 = vmatpush.bf16.msra.mxu0 %v3920
    %5045 = vmatpush.bf16.msra.mxu0 %v3916
    %5046 = vmatpush.bf16.msra.mxu0 %v3912
    %5047 = vmatpush.bf16.msra.mxu0 %v3908
    %5048 = vmatpush.bf16.msra.mxu0 %v3904
    %5049 = vmatmul.bf16.gmra.mxu0 %v901
    %v5050 = vpop.f32.mrf.mxu0
    %v5051 = vadd.f32 %v5038, %v5050
    %v5052 = vpop.f32.mrf.mxu0
    %5053 = vdwg.mxu0
    %5054 = vmatpush.bf16.msra.mxu0 %v3964
    %5055 = vmatpush.bf16.msra.mxu0 %v3960
    %5056 = vmatpush.bf16.msra.mxu0 %v3956
    %5057 = vmatpush.bf16.msra.mxu0 %v3952
    %5058 = vmatpush.bf16.msra.mxu0 %v3948
    %5059 = vmatpush.bf16.msra.mxu0 %v3944
    %5060 = vmatpush.bf16.msra.mxu0 %v3940
    %5061 = vmatpush.bf16.msra.mxu0 %v3936
    %5062 = vmatmul.bf16.gmra.mxu0 %v902
    %v5063 = vpop.f32.mrf.mxu0
    %v5064 = vadd.f32 %v5051, %v5063
    %v5065 = vpop.f32.mrf.mxu0
    %5066 = vdwg.mxu0
    %5067 = vmatpush.bf16.msra.mxu0 %v3996
    %5068 = vmatpush.bf16.msra.mxu0 %v3992
    %5069 = vmatpush.bf16.msra.mxu0 %v3988
    %5070 = vmatpush.bf16.msra.mxu0 %v3984
    %5071 = vmatpush.bf16.msra.mxu0 %v3980
    %5072 = vmatpush.bf16.msra.mxu0 %v3976
    %5073 = vmatpush.bf16.msra.mxu0 %v3972
    %5074 = vmatpush.bf16.msra.mxu0 %v3968
    %5075 = vmatmul.bf16.gmra.mxu0 %v903
    %v5076 = vpop.f32.mrf.mxu0
    %v5077 = vadd.f32 %v5064, %v5076
    %v5078 = vpop.f32.mrf.mxu0
    %5079 = vdwg.mxu0
    %5080 = vmatpush.bf16.msra.mxu0 %v3261
    %5081 = vmatpush.bf16.msra.mxu0 %v3257
    %5082 = vmatpush.bf16.msra.mxu0 %v3253
    %5083 = vmatpush.bf16.msra.mxu0 %v3249
    %5084 = vmatpush.bf16.msra.mxu0 %v3245
    %5085 = vmatpush.bf16.msra.mxu0 %v3241
    %5086 = vmatpush.bf16.msra.mxu0 %v3237
    %5087 = vmatpush.bf16.msra.mxu0 %v3233
    %5088 = vmatmul.bf16.gmra.mxu0 %v876
    %v5089 = vpop.f32.mrf.mxu0
    %v5090 = vadd.f32 %v867, %v5089
    %v5091 = vpop.f32.mrf.mxu0
    %5092 = vdwg.mxu0
    %5093 = vmatpush.bf16.msra.mxu0 %v3293
    %5094 = vmatpush.bf16.msra.mxu0 %v3289
    %5095 = vmatpush.bf16.msra.mxu0 %v3285
    %5096 = vmatpush.bf16.msra.mxu0 %v3281
    %5097 = vmatpush.bf16.msra.mxu0 %v3277
    %5098 = vmatpush.bf16.msra.mxu0 %v3273
    %5099 = vmatpush.bf16.msra.mxu0 %v3269
    %5100 = vmatpush.bf16.msra.mxu0 %v3265
    %5101 = vmatmul.bf16.gmra.mxu0 %v877
    %v5102 = vpop.f32.mrf.mxu0
    %v5103 = vadd.f32 %v5090, %v5102
    %v5104 = vpop.f32.mrf.mxu0
    %5105 = vdwg.mxu0
    %5106 = vmatpush.bf16.msra.mxu0 %v3325
    %5107 = vmatpush.bf16.msra.mxu0 %v3321
    %5108 = vmatpush.bf16.msra.mxu0 %v3317
    %5109 = vmatpush.bf16.msra.mxu0 %v3313
    %5110 = vmatpush.bf16.msra.mxu0 %v3309
    %5111 = vmatpush.bf16.msra.mxu0 %v3305
    %5112 = vmatpush.bf16.msra.mxu0 %v3301
    %5113 = vmatpush.bf16.msra.mxu0 %v3297
    %5114 = vmatmul.bf16.gmra.mxu0 %v878
    %v5115 = vpop.f32.mrf.mxu0
    %v5116 = vadd.f32 %v5103, %v5115
    %v5117 = vpop.f32.mrf.mxu0
    %5118 = vdwg.mxu0
    %5119 = vmatpush.bf16.msra.mxu0 %v3357
    %5120 = vmatpush.bf16.msra.mxu0 %v3353
    %5121 = vmatpush.bf16.msra.mxu0 %v3349
    %5122 = vmatpush.bf16.msra.mxu0 %v3345
    %5123 = vmatpush.bf16.msra.mxu0 %v3341
    %5124 = vmatpush.bf16.msra.mxu0 %v3337
    %5125 = vmatpush.bf16.msra.mxu0 %v3333
    %5126 = vmatpush.bf16.msra.mxu0 %v3329
    %5127 = vmatmul.bf16.gmra.mxu0 %v879
    %v5128 = vpop.f32.mrf.mxu0
    %v5129 = vadd.f32 %v5116, %v5128
    %v5130 = vpop.f32.mrf.mxu0
    %5131 = vdwg.mxu0
    %5132 = vmatpush.bf16.msra.mxu0 %v3389
    %5133 = vmatpush.bf16.msra.mxu0 %v3385
    %5134 = vmatpush.bf16.msra.mxu0 %v3381
    %5135 = vmatpush.bf16.msra.mxu0 %v3377
    %5136 = vmatpush.bf16.msra.mxu0 %v3373
    %5137 = vmatpush.bf16.msra.mxu0 %v3369
    %5138 = vmatpush.bf16.msra.mxu0 %v3365
    %5139 = vmatpush.bf16.msra.mxu0 %v3361
    %5140 = vmatmul.bf16.gmra.mxu0 %v880
    %v5141 = vpop.f32.mrf.mxu0
    %v5142 = vadd.f32 %v5129, %v5141
    %v5143 = vpop.f32.mrf.mxu0
    %5144 = vdwg.mxu0
    %5145 = vmatpush.bf16.msra.mxu0 %v3421
    %5146 = vmatpush.bf16.msra.mxu0 %v3417
    %5147 = vmatpush.bf16.msra.mxu0 %v3413
    %5148 = vmatpush.bf16.msra.mxu0 %v3409
    %5149 = vmatpush.bf16.msra.mxu0 %v3405
    %5150 = vmatpush.bf16.msra.mxu0 %v3401
    %5151 = vmatpush.bf16.msra.mxu0 %v3397
    %5152 = vmatpush.bf16.msra.mxu0 %v3393
    %5153 = vmatmul.bf16.gmra.mxu0 %v881
    %v5154 = vpop.f32.mrf.mxu0
    %v5155 = vadd.f32 %v5142, %v5154
    %v5156 = vpop.f32.mrf.mxu0
    %5157 = vdwg.mxu0
    %5158 = vmatpush.bf16.msra.mxu0 %v3453
    %5159 = vmatpush.bf16.msra.mxu0 %v3449
    %5160 = vmatpush.bf16.msra.mxu0 %v3445
    %5161 = vmatpush.bf16.msra.mxu0 %v3441
    %5162 = vmatpush.bf16.msra.mxu0 %v3437
    %5163 = vmatpush.bf16.msra.mxu0 %v3433
    %5164 = vmatpush.bf16.msra.mxu0 %v3429
    %5165 = vmatpush.bf16.msra.mxu0 %v3425
    %5166 = vmatmul.bf16.gmra.mxu0 %v882
    %v5167 = vpop.f32.mrf.mxu0
    %v5168 = vadd.f32 %v5155, %v5167
    %v5169 = vpop.f32.mrf.mxu0
    %5170 = vdwg.mxu0
    %5171 = vmatpush.bf16.msra.mxu0 %v3485
    %5172 = vmatpush.bf16.msra.mxu0 %v3481
    %5173 = vmatpush.bf16.msra.mxu0 %v3477
    %5174 = vmatpush.bf16.msra.mxu0 %v3473
    %5175 = vmatpush.bf16.msra.mxu0 %v3469
    %5176 = vmatpush.bf16.msra.mxu0 %v3465
    %5177 = vmatpush.bf16.msra.mxu0 %v3461
    %5178 = vmatpush.bf16.msra.mxu0 %v3457
    %5179 = vmatmul.bf16.gmra.mxu0 %v883
    %v5180 = vpop.f32.mrf.mxu0
    %v5181 = vadd.f32 %v5168, %v5180
    %v5182 = vpop.f32.mrf.mxu0
    %5183 = vdwg.mxu0
    %5184 = vmatpush.bf16.msra.mxu0 %v3517
    %5185 = vmatpush.bf16.msra.mxu0 %v3513
    %5186 = vmatpush.bf16.msra.mxu0 %v3509
    %5187 = vmatpush.bf16.msra.mxu0 %v3505
    %5188 = vmatpush.bf16.msra.mxu0 %v3501
    %5189 = vmatpush.bf16.msra.mxu0 %v3497
    %5190 = vmatpush.bf16.msra.mxu0 %v3493
    %5191 = vmatpush.bf16.msra.mxu0 %v3489
    %5192 = vmatmul.bf16.gmra.mxu0 %v886
    %v5193 = vpop.f32.mrf.mxu0
    %v5194 = vadd.f32 %v5181, %v5193
    %v5195 = vpop.f32.mrf.mxu0
    %5196 = vdwg.mxu0
    %5197 = vmatpush.bf16.msra.mxu0 %v3549
    %5198 = vmatpush.bf16.msra.mxu0 %v3545
    %5199 = vmatpush.bf16.msra.mxu0 %v3541
    %5200 = vmatpush.bf16.msra.mxu0 %v3537
    %5201 = vmatpush.bf16.msra.mxu0 %v3533
    %5202 = vmatpush.bf16.msra.mxu0 %v3529
    %5203 = vmatpush.bf16.msra.mxu0 %v3525
    %5204 = vmatpush.bf16.msra.mxu0 %v3521
    %5205 = vmatmul.bf16.gmra.mxu0 %v887
    %v5206 = vpop.f32.mrf.mxu0
    %v5207 = vadd.f32 %v5194, %v5206
    %v5208 = vpop.f32.mrf.mxu0
    %5209 = vdwg.mxu0
    %5210 = vmatpush.bf16.msra.mxu0 %v3581
    %5211 = vmatpush.bf16.msra.mxu0 %v3577
    %5212 = vmatpush.bf16.msra.mxu0 %v3573
    %5213 = vmatpush.bf16.msra.mxu0 %v3569
    %5214 = vmatpush.bf16.msra.mxu0 %v3565
    %5215 = vmatpush.bf16.msra.mxu0 %v3561
    %5216 = vmatpush.bf16.msra.mxu0 %v3557
    %5217 = vmatpush.bf16.msra.mxu0 %v3553
    %5218 = vmatmul.bf16.gmra.mxu0 %v888
    %v5219 = vpop.f32.mrf.mxu0
    %v5220 = vadd.f32 %v5207, %v5219
    %v5221 = vpop.f32.mrf.mxu0
    %5222 = vdwg.mxu0
    %5223 = vmatpush.bf16.msra.mxu0 %v3613
    %5224 = vmatpush.bf16.msra.mxu0 %v3609
    %5225 = vmatpush.bf16.msra.mxu0 %v3605
    %5226 = vmatpush.bf16.msra.mxu0 %v3601
    %5227 = vmatpush.bf16.msra.mxu0 %v3597
    %5228 = vmatpush.bf16.msra.mxu0 %v3593
    %5229 = vmatpush.bf16.msra.mxu0 %v3589
    %5230 = vmatpush.bf16.msra.mxu0 %v3585
    %5231 = vmatmul.bf16.gmra.mxu0 %v889
    %v5232 = vpop.f32.mrf.mxu0
    %v5233 = vadd.f32 %v5220, %v5232
    %v5234 = vpop.f32.mrf.mxu0
    %5235 = vdwg.mxu0
    %5236 = vmatpush.bf16.msra.mxu0 %v3645
    %5237 = vmatpush.bf16.msra.mxu0 %v3641
    %5238 = vmatpush.bf16.msra.mxu0 %v3637
    %5239 = vmatpush.bf16.msra.mxu0 %v3633
    %5240 = vmatpush.bf16.msra.mxu0 %v3629
    %5241 = vmatpush.bf16.msra.mxu0 %v3625
    %5242 = vmatpush.bf16.msra.mxu0 %v3621
    %5243 = vmatpush.bf16.msra.mxu0 %v3617
    %5244 = vmatmul.bf16.gmra.mxu0 %v890
    %v5245 = vpop.f32.mrf.mxu0
    %v5246 = vadd.f32 %v5233, %v5245
    %v5247 = vpop.f32.mrf.mxu0
    %5248 = vdwg.mxu0
    %5249 = vmatpush.bf16.msra.mxu0 %v3677
    %5250 = vmatpush.bf16.msra.mxu0 %v3673
    %5251 = vmatpush.bf16.msra.mxu0 %v3669
    %5252 = vmatpush.bf16.msra.mxu0 %v3665
    %5253 = vmatpush.bf16.msra.mxu0 %v3661
    %5254 = vmatpush.bf16.msra.mxu0 %v3657
    %5255 = vmatpush.bf16.msra.mxu0 %v3653
    %5256 = vmatpush.bf16.msra.mxu0 %v3649
    %5257 = vmatmul.bf16.gmra.mxu0 %v891
    %v5258 = vpop.f32.mrf.mxu0
    %v5259 = vadd.f32 %v5246, %v5258
    %v5260 = vpop.f32.mrf.mxu0
    %5261 = vdwg.mxu0
    %5262 = vmatpush.bf16.msra.mxu0 %v3709
    %5263 = vmatpush.bf16.msra.mxu0 %v3705
    %5264 = vmatpush.bf16.msra.mxu0 %v3701
    %5265 = vmatpush.bf16.msra.mxu0 %v3697
    %5266 = vmatpush.bf16.msra.mxu0 %v3693
    %5267 = vmatpush.bf16.msra.mxu0 %v3689
    %5268 = vmatpush.bf16.msra.mxu0 %v3685
    %5269 = vmatpush.bf16.msra.mxu0 %v3681
    %5270 = vmatmul.bf16.gmra.mxu0 %v892
    %v5271 = vpop.f32.mrf.mxu0
    %v5272 = vadd.f32 %v5259, %v5271
    %v5273 = vpop.f32.mrf.mxu0
    %5274 = vdwg.mxu0
    %5275 = vmatpush.bf16.msra.mxu0 %v3741
    %5276 = vmatpush.bf16.msra.mxu0 %v3737
    %5277 = vmatpush.bf16.msra.mxu0 %v3733
    %5278 = vmatpush.bf16.msra.mxu0 %v3729
    %5279 = vmatpush.bf16.msra.mxu0 %v3725
    %5280 = vmatpush.bf16.msra.mxu0 %v3721
    %5281 = vmatpush.bf16.msra.mxu0 %v3717
    %5282 = vmatpush.bf16.msra.mxu0 %v3713
    %5283 = vmatmul.bf16.gmra.mxu0 %v893
    %v5284 = vpop.f32.mrf.mxu0
    %v5285 = vadd.f32 %v5272, %v5284
    %v5286 = vpop.f32.mrf.mxu0
    %5287 = vdwg.mxu0
    %5288 = vmatpush.bf16.msra.mxu0 %v3773
    %5289 = vmatpush.bf16.msra.mxu0 %v3769
    %5290 = vmatpush.bf16.msra.mxu0 %v3765
    %5291 = vmatpush.bf16.msra.mxu0 %v3761
    %5292 = vmatpush.bf16.msra.mxu0 %v3757
    %5293 = vmatpush.bf16.msra.mxu0 %v3753
    %5294 = vmatpush.bf16.msra.mxu0 %v3749
    %5295 = vmatpush.bf16.msra.mxu0 %v3745
    %5296 = vmatmul.bf16.gmra.mxu0 %v896
    %v5297 = vpop.f32.mrf.mxu0
    %v5298 = vadd.f32 %v5285, %v5297
    %v5299 = vpop.f32.mrf.mxu0
    %5300 = vdwg.mxu0
    %5301 = vmatpush.bf16.msra.mxu0 %v3805
    %5302 = vmatpush.bf16.msra.mxu0 %v3801
    %5303 = vmatpush.bf16.msra.mxu0 %v3797
    %5304 = vmatpush.bf16.msra.mxu0 %v3793
    %5305 = vmatpush.bf16.msra.mxu0 %v3789
    %5306 = vmatpush.bf16.msra.mxu0 %v3785
    %5307 = vmatpush.bf16.msra.mxu0 %v3781
    %5308 = vmatpush.bf16.msra.mxu0 %v3777
    %5309 = vmatmul.bf16.gmra.mxu0 %v897
    %v5310 = vpop.f32.mrf.mxu0
    %v5311 = vadd.f32 %v5298, %v5310
    %v5312 = vpop.f32.mrf.mxu0
    %5313 = vdwg.mxu0
    %5314 = vmatpush.bf16.msra.mxu0 %v3837
    %5315 = vmatpush.bf16.msra.mxu0 %v3833
    %5316 = vmatpush.bf16.msra.mxu0 %v3829
    %5317 = vmatpush.bf16.msra.mxu0 %v3825
    %5318 = vmatpush.bf16.msra.mxu0 %v3821
    %5319 = vmatpush.bf16.msra.mxu0 %v3817
    %5320 = vmatpush.bf16.msra.mxu0 %v3813
    %5321 = vmatpush.bf16.msra.mxu0 %v3809
    %5322 = vmatmul.bf16.gmra.mxu0 %v898
    %v5323 = vpop.f32.mrf.mxu0
    %v5324 = vadd.f32 %v5311, %v5323
    %v5325 = vpop.f32.mrf.mxu0
    %5326 = vdwg.mxu0
    %5327 = vmatpush.bf16.msra.mxu0 %v3869
    %5328 = vmatpush.bf16.msra.mxu0 %v3865
    %5329 = vmatpush.bf16.msra.mxu0 %v3861
    %5330 = vmatpush.bf16.msra.mxu0 %v3857
    %5331 = vmatpush.bf16.msra.mxu0 %v3853
    %5332 = vmatpush.bf16.msra.mxu0 %v3849
    %5333 = vmatpush.bf16.msra.mxu0 %v3845
    %5334 = vmatpush.bf16.msra.mxu0 %v3841
    %5335 = vmatmul.bf16.gmra.mxu0 %v899
    %v5336 = vpop.f32.mrf.mxu0
    %v5337 = vadd.f32 %v5324, %v5336
    %v5338 = vpop.f32.mrf.mxu0
    %5339 = vdwg.mxu0
    %5340 = vmatpush.bf16.msra.mxu0 %v3901
    %5341 = vmatpush.bf16.msra.mxu0 %v3897
    %5342 = vmatpush.bf16.msra.mxu0 %v3893
    %5343 = vmatpush.bf16.msra.mxu0 %v3889
    %5344 = vmatpush.bf16.msra.mxu0 %v3885
    %5345 = vmatpush.bf16.msra.mxu0 %v3881
    %5346 = vmatpush.bf16.msra.mxu0 %v3877
    %5347 = vmatpush.bf16.msra.mxu0 %v3873
    %5348 = vmatmul.bf16.gmra.mxu0 %v900
    %v5349 = vpop.f32.mrf.mxu0
    %v5350 = vadd.f32 %v5337, %v5349
    %v5351 = vpop.f32.mrf.mxu0
    %5352 = vdwg.mxu0
    %5353 = vmatpush.bf16.msra.mxu0 %v3933
    %5354 = vmatpush.bf16.msra.mxu0 %v3929
    %5355 = vmatpush.bf16.msra.mxu0 %v3925
    %5356 = vmatpush.bf16.msra.mxu0 %v3921
    %5357 = vmatpush.bf16.msra.mxu0 %v3917
    %5358 = vmatpush.bf16.msra.mxu0 %v3913
    %5359 = vmatpush.bf16.msra.mxu0 %v3909
    %5360 = vmatpush.bf16.msra.mxu0 %v3905
    %5361 = vmatmul.bf16.gmra.mxu0 %v901
    %v5362 = vpop.f32.mrf.mxu0
    %v5363 = vadd.f32 %v5350, %v5362
    %v5364 = vpop.f32.mrf.mxu0
    %5365 = vdwg.mxu0
    %5366 = vmatpush.bf16.msra.mxu0 %v3965
    %5367 = vmatpush.bf16.msra.mxu0 %v3961
    %5368 = vmatpush.bf16.msra.mxu0 %v3957
    %5369 = vmatpush.bf16.msra.mxu0 %v3953
    %5370 = vmatpush.bf16.msra.mxu0 %v3949
    %5371 = vmatpush.bf16.msra.mxu0 %v3945
    %5372 = vmatpush.bf16.msra.mxu0 %v3941
    %5373 = vmatpush.bf16.msra.mxu0 %v3937
    %5374 = vmatmul.bf16.gmra.mxu0 %v902
    %v5375 = vpop.f32.mrf.mxu0
    %v5376 = vadd.f32 %v5363, %v5375
    %v5377 = vpop.f32.mrf.mxu0
    %5378 = vdwg.mxu0
    %5379 = vmatpush.bf16.msra.mxu0 %v3997
    %5380 = vmatpush.bf16.msra.mxu0 %v3993
    %5381 = vmatpush.bf16.msra.mxu0 %v3989
    %5382 = vmatpush.bf16.msra.mxu0 %v3985
    %5383 = vmatpush.bf16.msra.mxu0 %v3981
    %5384 = vmatpush.bf16.msra.mxu0 %v3977
    %5385 = vmatpush.bf16.msra.mxu0 %v3973
    %5386 = vmatpush.bf16.msra.mxu0 %v3969
    %5387 = vmatmul.bf16.gmra.mxu0 %v903
    %v5388 = vpop.f32.mrf.mxu0
    %v5389 = vadd.f32 %v5376, %v5388
    %v5390 = vpop.f32.mrf.mxu0
    %5391 = vdwg.mxu0
    %5392 = vmatpush.bf16.msra.mxu0 %v3262
    %5393 = vmatpush.bf16.msra.mxu0 %v3258
    %5394 = vmatpush.bf16.msra.mxu0 %v3254
    %5395 = vmatpush.bf16.msra.mxu0 %v3250
    %5396 = vmatpush.bf16.msra.mxu0 %v3246
    %5397 = vmatpush.bf16.msra.mxu0 %v3242
    %5398 = vmatpush.bf16.msra.mxu0 %v3238
    %5399 = vmatpush.bf16.msra.mxu0 %v3234
    %5400 = vmatmul.bf16.gmra.mxu0 %v876
    %v5401 = vpop.f32.mrf.mxu0
    %v5402 = vadd.f32 %v868, %v5401
    %v5403 = vpop.f32.mrf.mxu0
    %5404 = vdwg.mxu0
    %5405 = vmatpush.bf16.msra.mxu0 %v3294
    %5406 = vmatpush.bf16.msra.mxu0 %v3290
    %5407 = vmatpush.bf16.msra.mxu0 %v3286
    %5408 = vmatpush.bf16.msra.mxu0 %v3282
    %5409 = vmatpush.bf16.msra.mxu0 %v3278
    %5410 = vmatpush.bf16.msra.mxu0 %v3274
    %5411 = vmatpush.bf16.msra.mxu0 %v3270
    %5412 = vmatpush.bf16.msra.mxu0 %v3266
    %5413 = vmatmul.bf16.gmra.mxu0 %v877
    %v5414 = vpop.f32.mrf.mxu0
    %v5415 = vadd.f32 %v5402, %v5414
    %v5416 = vpop.f32.mrf.mxu0
    %5417 = vdwg.mxu0
    %5418 = vmatpush.bf16.msra.mxu0 %v3326
    %5419 = vmatpush.bf16.msra.mxu0 %v3322
    %5420 = vmatpush.bf16.msra.mxu0 %v3318
    %5421 = vmatpush.bf16.msra.mxu0 %v3314
    %5422 = vmatpush.bf16.msra.mxu0 %v3310
    %5423 = vmatpush.bf16.msra.mxu0 %v3306
    %5424 = vmatpush.bf16.msra.mxu0 %v3302
    %5425 = vmatpush.bf16.msra.mxu0 %v3298
    %5426 = vmatmul.bf16.gmra.mxu0 %v878
    %v5427 = vpop.f32.mrf.mxu0
    %v5428 = vadd.f32 %v5415, %v5427
    %v5429 = vpop.f32.mrf.mxu0
    %5430 = vdwg.mxu0
    %5431 = vmatpush.bf16.msra.mxu0 %v3358
    %5432 = vmatpush.bf16.msra.mxu0 %v3354
    %5433 = vmatpush.bf16.msra.mxu0 %v3350
    %5434 = vmatpush.bf16.msra.mxu0 %v3346
    %5435 = vmatpush.bf16.msra.mxu0 %v3342
    %5436 = vmatpush.bf16.msra.mxu0 %v3338
    %5437 = vmatpush.bf16.msra.mxu0 %v3334
    %5438 = vmatpush.bf16.msra.mxu0 %v3330
    %5439 = vmatmul.bf16.gmra.mxu0 %v879
    %v5440 = vpop.f32.mrf.mxu0
    %v5441 = vadd.f32 %v5428, %v5440
    %v5442 = vpop.f32.mrf.mxu0
    %5443 = vdwg.mxu0
    %5444 = vmatpush.bf16.msra.mxu0 %v3390
    %5445 = vmatpush.bf16.msra.mxu0 %v3386
    %5446 = vmatpush.bf16.msra.mxu0 %v3382
    %5447 = vmatpush.bf16.msra.mxu0 %v3378
    %5448 = vmatpush.bf16.msra.mxu0 %v3374
    %5449 = vmatpush.bf16.msra.mxu0 %v3370
    %5450 = vmatpush.bf16.msra.mxu0 %v3366
    %5451 = vmatpush.bf16.msra.mxu0 %v3362
    %5452 = vmatmul.bf16.gmra.mxu0 %v880
    %v5453 = vpop.f32.mrf.mxu0
    %v5454 = vadd.f32 %v5441, %v5453
    %v5455 = vpop.f32.mrf.mxu0
    %5456 = vdwg.mxu0
    %5457 = vmatpush.bf16.msra.mxu0 %v3422
    %5458 = vmatpush.bf16.msra.mxu0 %v3418
    %5459 = vmatpush.bf16.msra.mxu0 %v3414
    %5460 = vmatpush.bf16.msra.mxu0 %v3410
    %5461 = vmatpush.bf16.msra.mxu0 %v3406
    %5462 = vmatpush.bf16.msra.mxu0 %v3402
    %5463 = vmatpush.bf16.msra.mxu0 %v3398
    %5464 = vmatpush.bf16.msra.mxu0 %v3394
    %5465 = vmatmul.bf16.gmra.mxu0 %v881
    %v5466 = vpop.f32.mrf.mxu0
    %v5467 = vadd.f32 %v5454, %v5466
    %v5468 = vpop.f32.mrf.mxu0
    %5469 = vdwg.mxu0
    %5470 = vmatpush.bf16.msra.mxu0 %v3454
    %5471 = vmatpush.bf16.msra.mxu0 %v3450
    %5472 = vmatpush.bf16.msra.mxu0 %v3446
    %5473 = vmatpush.bf16.msra.mxu0 %v3442
    %5474 = vmatpush.bf16.msra.mxu0 %v3438
    %5475 = vmatpush.bf16.msra.mxu0 %v3434
    %5476 = vmatpush.bf16.msra.mxu0 %v3430
    %5477 = vmatpush.bf16.msra.mxu0 %v3426
    %5478 = vmatmul.bf16.gmra.mxu0 %v882
    %v5479 = vpop.f32.mrf.mxu0
    %v5480 = vadd.f32 %v5467, %v5479
    %v5481 = vpop.f32.mrf.mxu0
    %5482 = vdwg.mxu0
    %5483 = vmatpush.bf16.msra.mxu0 %v3486
    %5484 = vmatpush.bf16.msra.mxu0 %v3482
    %5485 = vmatpush.bf16.msra.mxu0 %v3478
    %5486 = vmatpush.bf16.msra.mxu0 %v3474
    %5487 = vmatpush.bf16.msra.mxu0 %v3470
    %5488 = vmatpush.bf16.msra.mxu0 %v3466
    %5489 = vmatpush.bf16.msra.mxu0 %v3462
    %5490 = vmatpush.bf16.msra.mxu0 %v3458
    %5491 = vmatmul.bf16.gmra.mxu0 %v883
    %v5492 = vpop.f32.mrf.mxu0
    %v5493 = vadd.f32 %v5480, %v5492
    %v5494 = vpop.f32.mrf.mxu0
    %5495 = vdwg.mxu0
    %5496 = vmatpush.bf16.msra.mxu0 %v3518
    %5497 = vmatpush.bf16.msra.mxu0 %v3514
    %5498 = vmatpush.bf16.msra.mxu0 %v3510
    %5499 = vmatpush.bf16.msra.mxu0 %v3506
    %5500 = vmatpush.bf16.msra.mxu0 %v3502
    %5501 = vmatpush.bf16.msra.mxu0 %v3498
    %5502 = vmatpush.bf16.msra.mxu0 %v3494
    %5503 = vmatpush.bf16.msra.mxu0 %v3490
    %5504 = vmatmul.bf16.gmra.mxu0 %v886
    %v5505 = vpop.f32.mrf.mxu0
    %v5506 = vadd.f32 %v5493, %v5505
    %v5507 = vpop.f32.mrf.mxu0
    %5508 = vdwg.mxu0
    %5509 = vmatpush.bf16.msra.mxu0 %v3550
    %5510 = vmatpush.bf16.msra.mxu0 %v3546
    %5511 = vmatpush.bf16.msra.mxu0 %v3542
    %5512 = vmatpush.bf16.msra.mxu0 %v3538
    %5513 = vmatpush.bf16.msra.mxu0 %v3534
    %5514 = vmatpush.bf16.msra.mxu0 %v3530
    %5515 = vmatpush.bf16.msra.mxu0 %v3526
    %5516 = vmatpush.bf16.msra.mxu0 %v3522
    %5517 = vmatmul.bf16.gmra.mxu0 %v887
    %v5518 = vpop.f32.mrf.mxu0
    %v5519 = vadd.f32 %v5506, %v5518
    %v5520 = vpop.f32.mrf.mxu0
    %5521 = vdwg.mxu0
    %5522 = vmatpush.bf16.msra.mxu0 %v3582
    %5523 = vmatpush.bf16.msra.mxu0 %v3578
    %5524 = vmatpush.bf16.msra.mxu0 %v3574
    %5525 = vmatpush.bf16.msra.mxu0 %v3570
    %5526 = vmatpush.bf16.msra.mxu0 %v3566
    %5527 = vmatpush.bf16.msra.mxu0 %v3562
    %5528 = vmatpush.bf16.msra.mxu0 %v3558
    %5529 = vmatpush.bf16.msra.mxu0 %v3554
    %5530 = vmatmul.bf16.gmra.mxu0 %v888
    %v5531 = vpop.f32.mrf.mxu0
    %v5532 = vadd.f32 %v5519, %v5531
    %v5533 = vpop.f32.mrf.mxu0
    %5534 = vdwg.mxu0
    %5535 = vmatpush.bf16.msra.mxu0 %v3614
    %5536 = vmatpush.bf16.msra.mxu0 %v3610
    %5537 = vmatpush.bf16.msra.mxu0 %v3606
    %5538 = vmatpush.bf16.msra.mxu0 %v3602
    %5539 = vmatpush.bf16.msra.mxu0 %v3598
    %5540 = vmatpush.bf16.msra.mxu0 %v3594
    %5541 = vmatpush.bf16.msra.mxu0 %v3590
    %5542 = vmatpush.bf16.msra.mxu0 %v3586
    %5543 = vmatmul.bf16.gmra.mxu0 %v889
    %v5544 = vpop.f32.mrf.mxu0
    %v5545 = vadd.f32 %v5532, %v5544
    %v5546 = vpop.f32.mrf.mxu0
    %5547 = vdwg.mxu0
    %5548 = vmatpush.bf16.msra.mxu0 %v3646
    %5549 = vmatpush.bf16.msra.mxu0 %v3642
    %5550 = vmatpush.bf16.msra.mxu0 %v3638
    %5551 = vmatpush.bf16.msra.mxu0 %v3634
    %5552 = vmatpush.bf16.msra.mxu0 %v3630
    %5553 = vmatpush.bf16.msra.mxu0 %v3626
    %5554 = vmatpush.bf16.msra.mxu0 %v3622
    %5555 = vmatpush.bf16.msra.mxu0 %v3618
    %5556 = vmatmul.bf16.gmra.mxu0 %v890
    %v5557 = vpop.f32.mrf.mxu0
    %v5558 = vadd.f32 %v5545, %v5557
    %v5559 = vpop.f32.mrf.mxu0
    %5560 = vdwg.mxu0
    %5561 = vmatpush.bf16.msra.mxu0 %v3678
    %5562 = vmatpush.bf16.msra.mxu0 %v3674
    %5563 = vmatpush.bf16.msra.mxu0 %v3670
    %5564 = vmatpush.bf16.msra.mxu0 %v3666
    %5565 = vmatpush.bf16.msra.mxu0 %v3662
    %5566 = vmatpush.bf16.msra.mxu0 %v3658
    %5567 = vmatpush.bf16.msra.mxu0 %v3654
    %5568 = vmatpush.bf16.msra.mxu0 %v3650
    %5569 = vmatmul.bf16.gmra.mxu0 %v891
    %v5570 = vpop.f32.mrf.mxu0
    %v5571 = vadd.f32 %v5558, %v5570
    %v5572 = vpop.f32.mrf.mxu0
    %5573 = vdwg.mxu0
    %5574 = vmatpush.bf16.msra.mxu0 %v3710
    %5575 = vmatpush.bf16.msra.mxu0 %v3706
    %5576 = vmatpush.bf16.msra.mxu0 %v3702
    %5577 = vmatpush.bf16.msra.mxu0 %v3698
    %5578 = vmatpush.bf16.msra.mxu0 %v3694
    %5579 = vmatpush.bf16.msra.mxu0 %v3690
    %5580 = vmatpush.bf16.msra.mxu0 %v3686
    %5581 = vmatpush.bf16.msra.mxu0 %v3682
    %5582 = vmatmul.bf16.gmra.mxu0 %v892
    %v5583 = vpop.f32.mrf.mxu0
    %v5584 = vadd.f32 %v5571, %v5583
    %v5585 = vpop.f32.mrf.mxu0
    %5586 = vdwg.mxu0
    %5587 = vmatpush.bf16.msra.mxu0 %v3742
    %5588 = vmatpush.bf16.msra.mxu0 %v3738
    %5589 = vmatpush.bf16.msra.mxu0 %v3734
    %5590 = vmatpush.bf16.msra.mxu0 %v3730
    %5591 = vmatpush.bf16.msra.mxu0 %v3726
    %5592 = vmatpush.bf16.msra.mxu0 %v3722
    %5593 = vmatpush.bf16.msra.mxu0 %v3718
    %5594 = vmatpush.bf16.msra.mxu0 %v3714
    %5595 = vmatmul.bf16.gmra.mxu0 %v893
    %v5596 = vpop.f32.mrf.mxu0
    %v5597 = vadd.f32 %v5584, %v5596
    %v5598 = vpop.f32.mrf.mxu0
    %5599 = vdwg.mxu0
    %5600 = vmatpush.bf16.msra.mxu0 %v3774
    %5601 = vmatpush.bf16.msra.mxu0 %v3770
    %5602 = vmatpush.bf16.msra.mxu0 %v3766
    %5603 = vmatpush.bf16.msra.mxu0 %v3762
    %5604 = vmatpush.bf16.msra.mxu0 %v3758
    %5605 = vmatpush.bf16.msra.mxu0 %v3754
    %5606 = vmatpush.bf16.msra.mxu0 %v3750
    %5607 = vmatpush.bf16.msra.mxu0 %v3746
    %5608 = vmatmul.bf16.gmra.mxu0 %v896
    %v5609 = vpop.f32.mrf.mxu0
    %v5610 = vadd.f32 %v5597, %v5609
    %v5611 = vpop.f32.mrf.mxu0
    %5612 = vdwg.mxu0
    %5613 = vmatpush.bf16.msra.mxu0 %v3806
    %5614 = vmatpush.bf16.msra.mxu0 %v3802
    %5615 = vmatpush.bf16.msra.mxu0 %v3798
    %5616 = vmatpush.bf16.msra.mxu0 %v3794
    %5617 = vmatpush.bf16.msra.mxu0 %v3790
    %5618 = vmatpush.bf16.msra.mxu0 %v3786
    %5619 = vmatpush.bf16.msra.mxu0 %v3782
    %5620 = vmatpush.bf16.msra.mxu0 %v3778
    %5621 = vmatmul.bf16.gmra.mxu0 %v897
    %v5622 = vpop.f32.mrf.mxu0
    %v5623 = vadd.f32 %v5610, %v5622
    %v5624 = vpop.f32.mrf.mxu0
    %5625 = vdwg.mxu0
    %5626 = vmatpush.bf16.msra.mxu0 %v3838
    %5627 = vmatpush.bf16.msra.mxu0 %v3834
    %5628 = vmatpush.bf16.msra.mxu0 %v3830
    %5629 = vmatpush.bf16.msra.mxu0 %v3826
    %5630 = vmatpush.bf16.msra.mxu0 %v3822
    %5631 = vmatpush.bf16.msra.mxu0 %v3818
    %5632 = vmatpush.bf16.msra.mxu0 %v3814
    %5633 = vmatpush.bf16.msra.mxu0 %v3810
    %5634 = vmatmul.bf16.gmra.mxu0 %v898
    %v5635 = vpop.f32.mrf.mxu0
    %v5636 = vadd.f32 %v5623, %v5635
    %v5637 = vpop.f32.mrf.mxu0
    %5638 = vdwg.mxu0
    %5639 = vmatpush.bf16.msra.mxu0 %v3870
    %5640 = vmatpush.bf16.msra.mxu0 %v3866
    %5641 = vmatpush.bf16.msra.mxu0 %v3862
    %5642 = vmatpush.bf16.msra.mxu0 %v3858
    %5643 = vmatpush.bf16.msra.mxu0 %v3854
    %5644 = vmatpush.bf16.msra.mxu0 %v3850
    %5645 = vmatpush.bf16.msra.mxu0 %v3846
    %5646 = vmatpush.bf16.msra.mxu0 %v3842
    %5647 = vmatmul.bf16.gmra.mxu0 %v899
    %v5648 = vpop.f32.mrf.mxu0
    %v5649 = vadd.f32 %v5636, %v5648
    %v5650 = vpop.f32.mrf.mxu0
    %5651 = vdwg.mxu0
    %5652 = vmatpush.bf16.msra.mxu0 %v3902
    %5653 = vmatpush.bf16.msra.mxu0 %v3898
    %5654 = vmatpush.bf16.msra.mxu0 %v3894
    %5655 = vmatpush.bf16.msra.mxu0 %v3890
    %5656 = vmatpush.bf16.msra.mxu0 %v3886
    %5657 = vmatpush.bf16.msra.mxu0 %v3882
    %5658 = vmatpush.bf16.msra.mxu0 %v3878
    %5659 = vmatpush.bf16.msra.mxu0 %v3874
    %5660 = vmatmul.bf16.gmra.mxu0 %v900
    %v5661 = vpop.f32.mrf.mxu0
    %v5662 = vadd.f32 %v5649, %v5661
    %v5663 = vpop.f32.mrf.mxu0
    %5664 = vdwg.mxu0
    %5665 = vmatpush.bf16.msra.mxu0 %v3934
    %5666 = vmatpush.bf16.msra.mxu0 %v3930
    %5667 = vmatpush.bf16.msra.mxu0 %v3926
    %5668 = vmatpush.bf16.msra.mxu0 %v3922
    %5669 = vmatpush.bf16.msra.mxu0 %v3918
    %5670 = vmatpush.bf16.msra.mxu0 %v3914
    %5671 = vmatpush.bf16.msra.mxu0 %v3910
    %5672 = vmatpush.bf16.msra.mxu0 %v3906
    %5673 = vmatmul.bf16.gmra.mxu0 %v901
    %v5674 = vpop.f32.mrf.mxu0
    %v5675 = vadd.f32 %v5662, %v5674
    %v5676 = vpop.f32.mrf.mxu0
    %5677 = vdwg.mxu0
    %5678 = vmatpush.bf16.msra.mxu0 %v3966
    %5679 = vmatpush.bf16.msra.mxu0 %v3962
    %5680 = vmatpush.bf16.msra.mxu0 %v3958
    %5681 = vmatpush.bf16.msra.mxu0 %v3954
    %5682 = vmatpush.bf16.msra.mxu0 %v3950
    %5683 = vmatpush.bf16.msra.mxu0 %v3946
    %5684 = vmatpush.bf16.msra.mxu0 %v3942
    %5685 = vmatpush.bf16.msra.mxu0 %v3938
    %5686 = vmatmul.bf16.gmra.mxu0 %v902
    %v5687 = vpop.f32.mrf.mxu0
    %v5688 = vadd.f32 %v5675, %v5687
    %v5689 = vpop.f32.mrf.mxu0
    %5690 = vdwg.mxu0
    %5691 = vmatpush.bf16.msra.mxu0 %v3998
    %5692 = vmatpush.bf16.msra.mxu0 %v3994
    %5693 = vmatpush.bf16.msra.mxu0 %v3990
    %5694 = vmatpush.bf16.msra.mxu0 %v3986
    %5695 = vmatpush.bf16.msra.mxu0 %v3982
    %5696 = vmatpush.bf16.msra.mxu0 %v3978
    %5697 = vmatpush.bf16.msra.mxu0 %v3974
    %5698 = vmatpush.bf16.msra.mxu0 %v3970
    %5699 = vmatmul.bf16.gmra.mxu0 %v903
    %v5700 = vpop.f32.mrf.mxu0
    %v5701 = vadd.f32 %v5688, %v5700
    %v5702 = vpop.f32.mrf.mxu0
    %5703 = vdwg.mxu0
    %5704 = vmatpush.bf16.msra.mxu0 %v3263
    %5705 = vmatpush.bf16.msra.mxu0 %v3259
    %5706 = vmatpush.bf16.msra.mxu0 %v3255
    %5707 = vmatpush.bf16.msra.mxu0 %v3251
    %5708 = vmatpush.bf16.msra.mxu0 %v3247
    %5709 = vmatpush.bf16.msra.mxu0 %v3243
    %5710 = vmatpush.bf16.msra.mxu0 %v3239
    %5711 = vmatpush.bf16.msra.mxu0 %v3235
    %5712 = vmatmul.bf16.gmra.mxu0 %v876
    %v5713 = vpop.f32.mrf.mxu0
    %v5714 = vadd.f32 %v869, %v5713
    %v5715 = vpop.f32.mrf.mxu0
    %5716 = vdwg.mxu0
    %5717 = vmatpush.bf16.msra.mxu0 %v3295
    %5718 = vmatpush.bf16.msra.mxu0 %v3291
    %5719 = vmatpush.bf16.msra.mxu0 %v3287
    %5720 = vmatpush.bf16.msra.mxu0 %v3283
    %5721 = vmatpush.bf16.msra.mxu0 %v3279
    %5722 = vmatpush.bf16.msra.mxu0 %v3275
    %5723 = vmatpush.bf16.msra.mxu0 %v3271
    %5724 = vmatpush.bf16.msra.mxu0 %v3267
    %5725 = vmatmul.bf16.gmra.mxu0 %v877
    %v5726 = vpop.f32.mrf.mxu0
    %v5727 = vadd.f32 %v5714, %v5726
    %v5728 = vpop.f32.mrf.mxu0
    %5729 = vdwg.mxu0
    %5730 = vmatpush.bf16.msra.mxu0 %v3327
    %5731 = vmatpush.bf16.msra.mxu0 %v3323
    %5732 = vmatpush.bf16.msra.mxu0 %v3319
    %5733 = vmatpush.bf16.msra.mxu0 %v3315
    %5734 = vmatpush.bf16.msra.mxu0 %v3311
    %5735 = vmatpush.bf16.msra.mxu0 %v3307
    %5736 = vmatpush.bf16.msra.mxu0 %v3303
    %5737 = vmatpush.bf16.msra.mxu0 %v3299
    %5738 = vmatmul.bf16.gmra.mxu0 %v878
    %v5739 = vpop.f32.mrf.mxu0
    %v5740 = vadd.f32 %v5727, %v5739
    %v5741 = vpop.f32.mrf.mxu0
    %5742 = vdwg.mxu0
    %5743 = vmatpush.bf16.msra.mxu0 %v3359
    %5744 = vmatpush.bf16.msra.mxu0 %v3355
    %5745 = vmatpush.bf16.msra.mxu0 %v3351
    %5746 = vmatpush.bf16.msra.mxu0 %v3347
    %5747 = vmatpush.bf16.msra.mxu0 %v3343
    %5748 = vmatpush.bf16.msra.mxu0 %v3339
    %5749 = vmatpush.bf16.msra.mxu0 %v3335
    %5750 = vmatpush.bf16.msra.mxu0 %v3331
    %5751 = vmatmul.bf16.gmra.mxu0 %v879
    %v5752 = vpop.f32.mrf.mxu0
    %v5753 = vadd.f32 %v5740, %v5752
    %v5754 = vpop.f32.mrf.mxu0
    %5755 = vdwg.mxu0
    %5756 = vmatpush.bf16.msra.mxu0 %v3391
    %5757 = vmatpush.bf16.msra.mxu0 %v3387
    %5758 = vmatpush.bf16.msra.mxu0 %v3383
    %5759 = vmatpush.bf16.msra.mxu0 %v3379
    %5760 = vmatpush.bf16.msra.mxu0 %v3375
    %5761 = vmatpush.bf16.msra.mxu0 %v3371
    %5762 = vmatpush.bf16.msra.mxu0 %v3367
    %5763 = vmatpush.bf16.msra.mxu0 %v3363
    %5764 = vmatmul.bf16.gmra.mxu0 %v880
    %v5765 = vpop.f32.mrf.mxu0
    %v5766 = vadd.f32 %v5753, %v5765
    %v5767 = vpop.f32.mrf.mxu0
    %5768 = vdwg.mxu0
    %5769 = vmatpush.bf16.msra.mxu0 %v3423
    %5770 = vmatpush.bf16.msra.mxu0 %v3419
    %5771 = vmatpush.bf16.msra.mxu0 %v3415
    %5772 = vmatpush.bf16.msra.mxu0 %v3411
    %5773 = vmatpush.bf16.msra.mxu0 %v3407
    %5774 = vmatpush.bf16.msra.mxu0 %v3403
    %5775 = vmatpush.bf16.msra.mxu0 %v3399
    %5776 = vmatpush.bf16.msra.mxu0 %v3395
    %5777 = vmatmul.bf16.gmra.mxu0 %v881
    %v5778 = vpop.f32.mrf.mxu0
    %v5779 = vadd.f32 %v5766, %v5778
    %v5780 = vpop.f32.mrf.mxu0
    %5781 = vdwg.mxu0
    %5782 = vmatpush.bf16.msra.mxu0 %v3455
    %5783 = vmatpush.bf16.msra.mxu0 %v3451
    %5784 = vmatpush.bf16.msra.mxu0 %v3447
    %5785 = vmatpush.bf16.msra.mxu0 %v3443
    %5786 = vmatpush.bf16.msra.mxu0 %v3439
    %5787 = vmatpush.bf16.msra.mxu0 %v3435
    %5788 = vmatpush.bf16.msra.mxu0 %v3431
    %5789 = vmatpush.bf16.msra.mxu0 %v3427
    %5790 = vmatmul.bf16.gmra.mxu0 %v882
    %v5791 = vpop.f32.mrf.mxu0
    %v5792 = vadd.f32 %v5779, %v5791
    %v5793 = vpop.f32.mrf.mxu0
    %5794 = vdwg.mxu0
    %5795 = vmatpush.bf16.msra.mxu0 %v3487
    %5796 = vmatpush.bf16.msra.mxu0 %v3483
    %5797 = vmatpush.bf16.msra.mxu0 %v3479
    %5798 = vmatpush.bf16.msra.mxu0 %v3475
    %5799 = vmatpush.bf16.msra.mxu0 %v3471
    %5800 = vmatpush.bf16.msra.mxu0 %v3467
    %5801 = vmatpush.bf16.msra.mxu0 %v3463
    %5802 = vmatpush.bf16.msra.mxu0 %v3459
    %5803 = vmatmul.bf16.gmra.mxu0 %v883
    %v5804 = vpop.f32.mrf.mxu0
    %v5805 = vadd.f32 %v5792, %v5804
    %v5806 = vpop.f32.mrf.mxu0
    %5807 = vdwg.mxu0
    %5808 = vmatpush.bf16.msra.mxu0 %v3519
    %5809 = vmatpush.bf16.msra.mxu0 %v3515
    %5810 = vmatpush.bf16.msra.mxu0 %v3511
    %5811 = vmatpush.bf16.msra.mxu0 %v3507
    %5812 = vmatpush.bf16.msra.mxu0 %v3503
    %5813 = vmatpush.bf16.msra.mxu0 %v3499
    %5814 = vmatpush.bf16.msra.mxu0 %v3495
    %5815 = vmatpush.bf16.msra.mxu0 %v3491
    %5816 = vmatmul.bf16.gmra.mxu0 %v886
    %v5817 = vpop.f32.mrf.mxu0
    %v5818 = vadd.f32 %v5805, %v5817
    %v5819 = vpop.f32.mrf.mxu0
    %5820 = vdwg.mxu0
    %5821 = vmatpush.bf16.msra.mxu0 %v3551
    %5822 = vmatpush.bf16.msra.mxu0 %v3547
    %5823 = vmatpush.bf16.msra.mxu0 %v3543
    %5824 = vmatpush.bf16.msra.mxu0 %v3539
    %5825 = vmatpush.bf16.msra.mxu0 %v3535
    %5826 = vmatpush.bf16.msra.mxu0 %v3531
    %5827 = vmatpush.bf16.msra.mxu0 %v3527
    %5828 = vmatpush.bf16.msra.mxu0 %v3523
    %5829 = vmatmul.bf16.gmra.mxu0 %v887
    %v5830 = vpop.f32.mrf.mxu0
    %v5831 = vadd.f32 %v5818, %v5830
    %v5832 = vpop.f32.mrf.mxu0
    %5833 = vdwg.mxu0
    %5834 = vmatpush.bf16.msra.mxu0 %v3583
    %5835 = vmatpush.bf16.msra.mxu0 %v3579
    %5836 = vmatpush.bf16.msra.mxu0 %v3575
    %5837 = vmatpush.bf16.msra.mxu0 %v3571
    %5838 = vmatpush.bf16.msra.mxu0 %v3567
    %5839 = vmatpush.bf16.msra.mxu0 %v3563
    %5840 = vmatpush.bf16.msra.mxu0 %v3559
    %5841 = vmatpush.bf16.msra.mxu0 %v3555
    %5842 = vmatmul.bf16.gmra.mxu0 %v888
    %v5843 = vpop.f32.mrf.mxu0
    %v5844 = vadd.f32 %v5831, %v5843
    %v5845 = vpop.f32.mrf.mxu0
    %5846 = vdwg.mxu0
    %5847 = vmatpush.bf16.msra.mxu0 %v3615
    %5848 = vmatpush.bf16.msra.mxu0 %v3611
    %5849 = vmatpush.bf16.msra.mxu0 %v3607
    %5850 = vmatpush.bf16.msra.mxu0 %v3603
    %5851 = vmatpush.bf16.msra.mxu0 %v3599
    %5852 = vmatpush.bf16.msra.mxu0 %v3595
    %5853 = vmatpush.bf16.msra.mxu0 %v3591
    %5854 = vmatpush.bf16.msra.mxu0 %v3587
    %5855 = vmatmul.bf16.gmra.mxu0 %v889
    %v5856 = vpop.f32.mrf.mxu0
    %v5857 = vadd.f32 %v5844, %v5856
    %v5858 = vpop.f32.mrf.mxu0
    %5859 = vdwg.mxu0
    %5860 = vmatpush.bf16.msra.mxu0 %v3647
    %5861 = vmatpush.bf16.msra.mxu0 %v3643
    %5862 = vmatpush.bf16.msra.mxu0 %v3639
    %5863 = vmatpush.bf16.msra.mxu0 %v3635
    %5864 = vmatpush.bf16.msra.mxu0 %v3631
    %5865 = vmatpush.bf16.msra.mxu0 %v3627
    %5866 = vmatpush.bf16.msra.mxu0 %v3623
    %5867 = vmatpush.bf16.msra.mxu0 %v3619
    %5868 = vmatmul.bf16.gmra.mxu0 %v890
    %v5869 = vpop.f32.mrf.mxu0
    %v5870 = vadd.f32 %v5857, %v5869
    %v5871 = vpop.f32.mrf.mxu0
    %5872 = vdwg.mxu0
    %5873 = vmatpush.bf16.msra.mxu0 %v3679
    %5874 = vmatpush.bf16.msra.mxu0 %v3675
    %5875 = vmatpush.bf16.msra.mxu0 %v3671
    %5876 = vmatpush.bf16.msra.mxu0 %v3667
    %5877 = vmatpush.bf16.msra.mxu0 %v3663
    %5878 = vmatpush.bf16.msra.mxu0 %v3659
    %5879 = vmatpush.bf16.msra.mxu0 %v3655
    %5880 = vmatpush.bf16.msra.mxu0 %v3651
    %5881 = vmatmul.bf16.gmra.mxu0 %v891
    %v5882 = vpop.f32.mrf.mxu0
    %v5883 = vadd.f32 %v5870, %v5882
    %v5884 = vpop.f32.mrf.mxu0
    %5885 = vdwg.mxu0
    %5886 = vmatpush.bf16.msra.mxu0 %v3711
    %5887 = vmatpush.bf16.msra.mxu0 %v3707
    %5888 = vmatpush.bf16.msra.mxu0 %v3703
    %5889 = vmatpush.bf16.msra.mxu0 %v3699
    %5890 = vmatpush.bf16.msra.mxu0 %v3695
    %5891 = vmatpush.bf16.msra.mxu0 %v3691
    %5892 = vmatpush.bf16.msra.mxu0 %v3687
    %5893 = vmatpush.bf16.msra.mxu0 %v3683
    %5894 = vmatmul.bf16.gmra.mxu0 %v892
    %v5895 = vpop.f32.mrf.mxu0
    %v5896 = vadd.f32 %v5883, %v5895
    %v5897 = vpop.f32.mrf.mxu0
    %5898 = vdwg.mxu0
    %5899 = vmatpush.bf16.msra.mxu0 %v3743
    %5900 = vmatpush.bf16.msra.mxu0 %v3739
    %5901 = vmatpush.bf16.msra.mxu0 %v3735
    %5902 = vmatpush.bf16.msra.mxu0 %v3731
    %5903 = vmatpush.bf16.msra.mxu0 %v3727
    %5904 = vmatpush.bf16.msra.mxu0 %v3723
    %5905 = vmatpush.bf16.msra.mxu0 %v3719
    %5906 = vmatpush.bf16.msra.mxu0 %v3715
    %5907 = vmatmul.bf16.gmra.mxu0 %v893
    %v5908 = vpop.f32.mrf.mxu0
    %v5909 = vadd.f32 %v5896, %v5908
    %v5910 = vpop.f32.mrf.mxu0
    %5911 = vdwg.mxu0
    %5912 = vmatpush.bf16.msra.mxu0 %v3775
    %5913 = vmatpush.bf16.msra.mxu0 %v3771
    %5914 = vmatpush.bf16.msra.mxu0 %v3767
    %5915 = vmatpush.bf16.msra.mxu0 %v3763
    %5916 = vmatpush.bf16.msra.mxu0 %v3759
    %5917 = vmatpush.bf16.msra.mxu0 %v3755
    %5918 = vmatpush.bf16.msra.mxu0 %v3751
    %5919 = vmatpush.bf16.msra.mxu0 %v3747
    %5920 = vmatmul.bf16.gmra.mxu0 %v896
    %v5921 = vpop.f32.mrf.mxu0
    %v5922 = vadd.f32 %v5909, %v5921
    %v5923 = vpop.f32.mrf.mxu0
    %5924 = vdwg.mxu0
    %5925 = vmatpush.bf16.msra.mxu0 %v3807
    %5926 = vmatpush.bf16.msra.mxu0 %v3803
    %5927 = vmatpush.bf16.msra.mxu0 %v3799
    %5928 = vmatpush.bf16.msra.mxu0 %v3795
    %5929 = vmatpush.bf16.msra.mxu0 %v3791
    %5930 = vmatpush.bf16.msra.mxu0 %v3787
    %5931 = vmatpush.bf16.msra.mxu0 %v3783
    %5932 = vmatpush.bf16.msra.mxu0 %v3779
    %5933 = vmatmul.bf16.gmra.mxu0 %v897
    %v5934 = vpop.f32.mrf.mxu0
    %v5935 = vadd.f32 %v5922, %v5934
    %v5936 = vpop.f32.mrf.mxu0
    %5937 = vdwg.mxu0
    %5938 = vmatpush.bf16.msra.mxu0 %v3839
    %5939 = vmatpush.bf16.msra.mxu0 %v3835
    %5940 = vmatpush.bf16.msra.mxu0 %v3831
    %5941 = vmatpush.bf16.msra.mxu0 %v3827
    %5942 = vmatpush.bf16.msra.mxu0 %v3823
    %5943 = vmatpush.bf16.msra.mxu0 %v3819
    %5944 = vmatpush.bf16.msra.mxu0 %v3815
    %5945 = vmatpush.bf16.msra.mxu0 %v3811
    %5946 = vmatmul.bf16.gmra.mxu0 %v898
    %v5947 = vpop.f32.mrf.mxu0
    %v5948 = vadd.f32 %v5935, %v5947
    %v5949 = vpop.f32.mrf.mxu0
    %5950 = vdwg.mxu0
    %5951 = vmatpush.bf16.msra.mxu0 %v3871
    %5952 = vmatpush.bf16.msra.mxu0 %v3867
    %5953 = vmatpush.bf16.msra.mxu0 %v3863
    %5954 = vmatpush.bf16.msra.mxu0 %v3859
    %5955 = vmatpush.bf16.msra.mxu0 %v3855
    %5956 = vmatpush.bf16.msra.mxu0 %v3851
    %5957 = vmatpush.bf16.msra.mxu0 %v3847
    %5958 = vmatpush.bf16.msra.mxu0 %v3843
    %5959 = vmatmul.bf16.gmra.mxu0 %v899
    %v5960 = vpop.f32.mrf.mxu0
    %v5961 = vadd.f32 %v5948, %v5960
    %v5962 = vpop.f32.mrf.mxu0
    %5963 = vdwg.mxu0
    %5964 = vmatpush.bf16.msra.mxu0 %v3903
    %5965 = vmatpush.bf16.msra.mxu0 %v3899
    %5966 = vmatpush.bf16.msra.mxu0 %v3895
    %5967 = vmatpush.bf16.msra.mxu0 %v3891
    %5968 = vmatpush.bf16.msra.mxu0 %v3887
    %5969 = vmatpush.bf16.msra.mxu0 %v3883
    %5970 = vmatpush.bf16.msra.mxu0 %v3879
    %5971 = vmatpush.bf16.msra.mxu0 %v3875
    %5972 = vmatmul.bf16.gmra.mxu0 %v900
    %v5973 = vpop.f32.mrf.mxu0
    %v5974 = vadd.f32 %v5961, %v5973
    %v5975 = vpop.f32.mrf.mxu0
    %5976 = vdwg.mxu0
    %5977 = vmatpush.bf16.msra.mxu0 %v3935
    %5978 = vmatpush.bf16.msra.mxu0 %v3931
    %5979 = vmatpush.bf16.msra.mxu0 %v3927
    %5980 = vmatpush.bf16.msra.mxu0 %v3923
    %5981 = vmatpush.bf16.msra.mxu0 %v3919
    %5982 = vmatpush.bf16.msra.mxu0 %v3915
    %5983 = vmatpush.bf16.msra.mxu0 %v3911
    %5984 = vmatpush.bf16.msra.mxu0 %v3907
    %5985 = vmatmul.bf16.gmra.mxu0 %v901
    %v5986 = vpop.f32.mrf.mxu0
    %v5987 = vadd.f32 %v5974, %v5986
    %v5988 = vpop.f32.mrf.mxu0
    %5989 = vdwg.mxu0
    %5990 = vmatpush.bf16.msra.mxu0 %v3967
    %5991 = vmatpush.bf16.msra.mxu0 %v3963
    %5992 = vmatpush.bf16.msra.mxu0 %v3959
    %5993 = vmatpush.bf16.msra.mxu0 %v3955
    %5994 = vmatpush.bf16.msra.mxu0 %v3951
    %5995 = vmatpush.bf16.msra.mxu0 %v3947
    %5996 = vmatpush.bf16.msra.mxu0 %v3943
    %5997 = vmatpush.bf16.msra.mxu0 %v3939
    %5998 = vmatmul.bf16.gmra.mxu0 %v902
    %v5999 = vpop.f32.mrf.mxu0
    %v6000 = vadd.f32 %v5987, %v5999
    %v6001 = vpop.f32.mrf.mxu0
    %6002 = vdwg.mxu0
    %6003 = vmatpush.bf16.msra.mxu0 %v3999
    %6004 = vmatpush.bf16.msra.mxu0 %v3995
    %6005 = vmatpush.bf16.msra.mxu0 %v3991
    %6006 = vmatpush.bf16.msra.mxu0 %v3987
    %6007 = vmatpush.bf16.msra.mxu0 %v3983
    %6008 = vmatpush.bf16.msra.mxu0 %v3979
    %6009 = vmatpush.bf16.msra.mxu0 %v3975
    %6010 = vmatpush.bf16.msra.mxu0 %v3971
    %6011 = vmatmul.bf16.gmra.mxu0 %v903
    %v6012 = vpop.f32.mrf.mxu0
    %v6013 = vadd.f32 %v6000, %v6012
    %v6014 = vpop.f32.mrf.mxu0
    %6015 = vdwg.mxu0
    %v6016 = vmax.f32 %v5077, 0.0
    %v6017 = vmax.f32 %v5389, 0.0
    %v6018 = vmax.f32 %v5701, 0.0
    %v6019 = vmax.f32 %v6013, 0.0
    %v6020 = vpack.c.bf16 %v6016, %v6016
    %v6021 = vpack.c.bf16 %v6017, %v6017
    %v6022 = vpack.c.bf16 %v6018, %v6018
    %v6023 = vpack.c.bf16 %v6019, %v6019
    %v6024 = vld [vmem:[#allocation8] sm:$0xf]
    %v6025 = vld [vmem:[#allocation8 + $0x4] sm:$0xf]
    %v6026 = vld [vmem:[#allocation8 + $0x8] sm:$0xf]
    %v6027 = vld [vmem:[#allocation8 + $0xc] sm:$0xf]
    %v6028 = vld [vmem:[#allocation8 + $0x10] sm:$0xf]
    %v6029 = vld [vmem:[#allocation8 + $0x14] sm:$0xf]
    %v6030 = vld [vmem:[#allocation8 + $0x18] sm:$0xf]
    %v6031 = vld [vmem:[#allocation8 + $0x1c] sm:$0xf]
    %v6032 = vld [vmem:[#allocation8 + $0x20] sm:$0xf]
    %v6033 = vld [vmem:[#allocation8 + $0x24] sm:$0xf]
    %v6034 = vld [vmem:[#allocation8 + $0x28] sm:$0xf]
    %v6035 = vld [vmem:[#allocation8 + $0x2c] sm:$0xf]
    %v6036 = vld [vmem:[#allocation8 + $0x30] sm:$0xf]
    %v6037 = vld [vmem:[#allocation8 + $0x34] sm:$0xf]
    %v6038 = vld [vmem:[#allocation8 + $0x38] sm:$0xf]
    %v6039 = vld [vmem:[#allocation8 + $0x3c] sm:$0xf]
    %v6040 = vld [vmem:[#allocation8 + $0x40] sm:$0xf]
    %v6041 = vld [vmem:[#allocation8 + $0x44] sm:$0xf]
    %v6042 = vld [vmem:[#allocation8 + $0x48] sm:$0xf]
    %v6043 = vld [vmem:[#allocation8 + $0x4c] sm:$0xf]
    %v6044 = vld [vmem:[#allocation8 + $0x50] sm:$0xf]
    %v6045 = vld [vmem:[#allocation8 + $0x54] sm:$0xf]
    %v6046 = vld [vmem:[#allocation8 + $0x58] sm:$0xf]
    %v6047 = vld [vmem:[#allocation8 + $0x5c] sm:$0xf]
    %v6048 = vld [vmem:[#allocation8 + $0x60] sm:$0xf]
    %v6049 = vld [vmem:[#allocation8 + $0x64] sm:$0xf]
    %v6050 = vld [vmem:[#allocation8 + $0x68] sm:$0xf]
    %v6051 = vld [vmem:[#allocation8 + $0x6c] sm:$0xf]
    %v6052 = vld [vmem:[#allocation8 + $0x70] sm:$0xf]
    %v6053 = vld [vmem:[#allocation8 + $0x74] sm:$0xf]
    %v6054 = vld [vmem:[#allocation8 + $0x78] sm:$0xf]
    %v6055 = vld [vmem:[#allocation8 + $0x7c] sm:$0xf]
    %v6056 = vld [vmem:[#allocation8 + $0x80] sm:$0xf]
    %v6057 = vld [vmem:[#allocation8 + $0x84] sm:$0xf]
    %v6058 = vld [vmem:[#allocation8 + $0x88] sm:$0xf]
    %v6059 = vld [vmem:[#allocation8 + $0x8c] sm:$0xf]
    %v6060 = vld [vmem:[#allocation8 + $0x90] sm:$0xf]
    %v6061 = vld [vmem:[#allocation8 + $0x94] sm:$0xf]
    %v6062 = vld [vmem:[#allocation8 + $0x98] sm:$0xf]
    %v6063 = vld [vmem:[#allocation8 + $0x9c] sm:$0xf]
    %v6064 = vld [vmem:[#allocation8 + $0xa0] sm:$0xf]
    %v6065 = vld [vmem:[#allocation8 + $0xa4] sm:$0xf]
    %v6066 = vld [vmem:[#allocation8 + $0xa8] sm:$0xf]
    %v6067 = vld [vmem:[#allocation8 + $0xac] sm:$0xf]
    %v6068 = vld [vmem:[#allocation8 + $0xb0] sm:$0xf]
    %v6069 = vld [vmem:[#allocation8 + $0xb4] sm:$0xf]
    %v6070 = vld [vmem:[#allocation8 + $0xb8] sm:$0xf]
    %v6071 = vld [vmem:[#allocation8 + $0xbc] sm:$0xf]
    %v6072 = vld [vmem:[#allocation8 + $0xc0] sm:$0xf]
    %v6073 = vld [vmem:[#allocation8 + $0xc4] sm:$0xf]
    %v6074 = vld [vmem:[#allocation8 + $0xc8] sm:$0xf]
    %v6075 = vld [vmem:[#allocation8 + $0xcc] sm:$0xf]
    %v6076 = vld [vmem:[#allocation8 + $0xd0] sm:$0xf]
    %v6077 = vld [vmem:[#allocation8 + $0xd4] sm:$0xf]
    %v6078 = vld [vmem:[#allocation8 + $0xd8] sm:$0xf]
    %v6079 = vld [vmem:[#allocation8 + $0xdc] sm:$0xf]
    %v6080 = vld [vmem:[#allocation8 + $0xe0] sm:$0xf]
    %v6081 = vld [vmem:[#allocation8 + $0xe4] sm:$0xf]
    %v6082 = vld [vmem:[#allocation8 + $0xe8] sm:$0xf]
    %v6083 = vld [vmem:[#allocation8 + $0xec] sm:$0xf]
    %v6084 = vld [vmem:[#allocation8 + $0xf0] sm:$0xf]
    %v6085 = vld [vmem:[#allocation8 + $0xf4] sm:$0xf]
    %v6086 = vld [vmem:[#allocation8 + $0xf8] sm:$0xf]
    %v6087 = vld [vmem:[#allocation8 + $0xfc] sm:$0xf]
    %v6088 = vld [vmem:[#allocation10] sm:$0x1]
    %v6090 = vperm.slane %v6088, 0
    %v6156 = vunpack.c.l.b16 %v6024
    %v6157 = vunpack.c.l.b16 %v6025
    %v6158 = vunpack.c.l.b16 %v6026
    %v6159 = vunpack.c.l.b16 %v6027
    %v6160 = vunpack.c.l.b16 %v6028
    %v6161 = vunpack.c.l.b16 %v6029
    %v6162 = vunpack.c.l.b16 %v6030
    %v6163 = vunpack.c.l.b16 %v6031
    %v6164 = vunpack.c.l.b16 %v6032
    %v6165 = vunpack.c.l.b16 %v6033
    %v6166 = vunpack.c.l.b16 %v6034
    %v6167 = vunpack.c.l.b16 %v6035
    %v6168 = vunpack.c.l.b16 %v6036
    %v6169 = vunpack.c.l.b16 %v6037
    %v6170 = vunpack.c.l.b16 %v6038
    %v6171 = vunpack.c.l.b16 %v6039
    %v6172 = vunpack.c.l.b16 %v6040
    %v6173 = vunpack.c.l.b16 %v6041
    %v6174 = vunpack.c.l.b16 %v6042
    %v6175 = vunpack.c.l.b16 %v6043
    %v6176 = vunpack.c.l.b16 %v6044
    %v6177 = vunpack.c.l.b16 %v6045
    %v6178 = vunpack.c.l.b16 %v6046
    %v6179 = vunpack.c.l.b16 %v6047
    %v6180 = vunpack.c.l.b16 %v6048
    %v6181 = vunpack.c.l.b16 %v6049
    %v6182 = vunpack.c.l.b16 %v6050
    %v6183 = vunpack.c.l.b16 %v6051
    %v6184 = vunpack.c.l.b16 %v6052
    %v6185 = vunpack.c.l.b16 %v6053
    %v6186 = vunpack.c.l.b16 %v6054
    %v6187 = vunpack.c.l.b16 %v6055
    %v6188 = vunpack.c.l.b16 %v6056
    %v6189 = vunpack.c.l.b16 %v6057
    %v6190 = vunpack.c.l.b16 %v6058
    %v6191 = vunpack.c.l.b16 %v6059
    %v6192 = vunpack.c.l.b16 %v6060
    %v6193 = vunpack.c.l.b16 %v6061
    %v6194 = vunpack.c.l.b16 %v6062
    %v6195 = vunpack.c.l.b16 %v6063
    %v6196 = vunpack.c.l.b16 %v6064
    %v6197 = vunpack.c.l.b16 %v6065
    %v6198 = vunpack.c.l.b16 %v6066
    %v6199 = vunpack.c.l.b16 %v6067
    %v6200 = vunpack.c.l.b16 %v6068
    %v6201 = vunpack.c.l.b16 %v6069
    %v6202 = vunpack.c.l.b16 %v6070
    %v6203 = vunpack.c.l.b16 %v6071
    %v6204 = vunpack.c.l.b16 %v6072
    %v6205 = vunpack.c.l.b16 %v6073
    %v6206 = vunpack.c.l.b16 %v6074
    %v6207 = vunpack.c.l.b16 %v6075
    %v6208 = vunpack.c.l.b16 %v6076
    %v6209 = vunpack.c.l.b16 %v6077
    %v6210 = vunpack.c.l.b16 %v6078
    %v6211 = vunpack.c.l.b16 %v6079
    %v6212 = vunpack.c.l.b16 %v6080
    %v6213 = vunpack.c.l.b16 %v6081
    %v6214 = vunpack.c.l.b16 %v6082
    %v6215 = vunpack.c.l.b16 %v6083
    %v6216 = vunpack.c.l.b16 %v6084
    %v6217 = vunpack.c.l.b16 %v6085
    %v6218 = vunpack.c.l.b16 %v6086
    %v6219 = vunpack.c.l.b16 %v6087
    %v6220 = vpack.c.b16 %v6157, %v6156
    %v6221 = vpack.c.b16 %v6159, %v6158
    %v6222 = vpack.c.b16 %v6161, %v6160
    %v6223 = vpack.c.b16 %v6163, %v6162
    %v6224 = vpack.c.b16 %v6165, %v6164
    %v6225 = vpack.c.b16 %v6167, %v6166
    %v6226 = vpack.c.b16 %v6169, %v6168
    %v6227 = vpack.c.b16 %v6171, %v6170
    %v6228 = vpack.c.b16 %v6173, %v6172
    %v6229 = vpack.c.b16 %v6175, %v6174
    %v6230 = vpack.c.b16 %v6177, %v6176
    %v6231 = vpack.c.b16 %v6179, %v6178
    %v6232 = vpack.c.b16 %v6181, %v6180
    %v6233 = vpack.c.b16 %v6183, %v6182
    %v6234 = vpack.c.b16 %v6185, %v6184
    %v6235 = vpack.c.b16 %v6187, %v6186
    %v6236 = vpack.c.b16 %v6189, %v6188
    %v6237 = vpack.c.b16 %v6191, %v6190
    %v6238 = vpack.c.b16 %v6193, %v6192
    %v6239 = vpack.c.b16 %v6195, %v6194
    %v6240 = vpack.c.b16 %v6197, %v6196
    %v6241 = vpack.c.b16 %v6199, %v6198
    %v6242 = vpack.c.b16 %v6201, %v6200
    %v6243 = vpack.c.b16 %v6203, %v6202
    %v6244 = vpack.c.b16 %v6205, %v6204
    %v6245 = vpack.c.b16 %v6207, %v6206
    %v6246 = vpack.c.b16 %v6209, %v6208
    %v6247 = vpack.c.b16 %v6211, %v6210
    %v6248 = vpack.c.b16 %v6213, %v6212
    %v6249 = vpack.c.b16 %v6215, %v6214
    %v6250 = vpack.c.b16 %v6217, %v6216
    %v6251 = vpack.c.b16 %v6219, %v6218
    %6284 = vmatpush.bf16.msra.mxu0 %v6227
    %6285 = vmatpush.bf16.msra.mxu0 %v6226
    %6286 = vmatpush.bf16.msra.mxu0 %v6225
    %6287 = vmatpush.bf16.msra.mxu0 %v6224
    %6288 = vmatpush.bf16.msra.mxu0 %v6223
    %6289 = vmatpush.bf16.msra.mxu0 %v6222
    %6290 = vmatpush.bf16.msra.mxu0 %v6221
    %6291 = vmatpush.bf16.msra.mxu0 %v6220
    %6292 = vmatmul.bf16.gmra.mxu0 %v6020
    %v6293 = vpop.f32.mrf.mxu0
    %v6294 = vadd.f32 %v6090, %v6293
    %v6295 = vpop.f32.mrf.mxu0
    %6296 = vdwg.mxu0
    %6297 = vmatpush.bf16.msra.mxu0 %v6235
    %6298 = vmatpush.bf16.msra.mxu0 %v6234
    %6299 = vmatpush.bf16.msra.mxu0 %v6233
    %6300 = vmatpush.bf16.msra.mxu0 %v6232
    %6301 = vmatpush.bf16.msra.mxu0 %v6231
    %6302 = vmatpush.bf16.msra.mxu0 %v6230
    %6303 = vmatpush.bf16.msra.mxu0 %v6229
    %6304 = vmatpush.bf16.msra.mxu0 %v6228
    %6305 = vmatmul.bf16.gmra.mxu0 %v6021
    %v6306 = vpop.f32.mrf.mxu0
    %v6307 = vadd.f32 %v6294, %v6306
    %v6308 = vpop.f32.mrf.mxu0
    %6309 = vdwg.mxu0
    %6310 = vmatpush.bf16.msra.mxu0 %v6243
    %6311 = vmatpush.bf16.msra.mxu0 %v6242
    %6312 = vmatpush.bf16.msra.mxu0 %v6241
    %6313 = vmatpush.bf16.msra.mxu0 %v6240
    %6314 = vmatpush.bf16.msra.mxu0 %v6239
    %6315 = vmatpush.bf16.msra.mxu0 %v6238
    %6316 = vmatpush.bf16.msra.mxu0 %v6237
    %6317 = vmatpush.bf16.msra.mxu0 %v6236
    %6318 = vmatmul.bf16.gmra.mxu0 %v6022
    %v6319 = vpop.f32.mrf.mxu0
    %v6320 = vadd.f32 %v6307, %v6319
    %v6321 = vpop.f32.mrf.mxu0
    %6322 = vdwg.mxu0
    %6323 = vmatpush.bf16.msra.mxu0 %v6251
    %6324 = vmatpush.bf16.msra.mxu0 %v6250
    %6325 = vmatpush.bf16.msra.mxu0 %v6249
    %6326 = vmatpush.bf16.msra.mxu0 %v6248
    %6327 = vmatpush.bf16.msra.mxu0 %v6247
    %6328 = vmatpush.bf16.msra.mxu0 %v6246
    %6329 = vmatpush.bf16.msra.mxu0 %v6245
    %6330 = vmatpush.bf16.msra.mxu0 %v6244
    %6331 = vmatmul.bf16.gmra.mxu0 %v6023
    %v6332 = vpop.f32.mrf.mxu0
    %v6333 = vadd.f32 %v6320, %v6332
    %v6334 = vpop.f32.mrf.mxu0
    %6335 = vdwg.mxu0
    %6336 = vst [vmem:[#allocation11] sm:$0x3] %v6333
    // Predicated region
    $region42: #{tpu_custom_call.1} parent=1 // pred_check
      _
    $region43: #{tpu_custom_call.1} parent=1 // pred_check_branch
      %6338 = sbr.rel (0) target = $region45
    $region44: #{tpu_custom_call.1} parent=1 // pred_region
      %6340 = vsyncadd [#allocation4], 0
      %s6342 = sshll.u32 [#allocation11], 4
      %s6343 = int_to_ptr.vmem [resolvable:$true] %s6342
      %s6344 = sshll.u32 %s5, 4
      %s6345 = int_to_ptr.hbm [resolvable:$true] %s6344
      %6347 = dma.vmem_to_hbm [thread:$0]  %s6343, 32, %s6345, [#allocation4]
    $region45: #{tpu_custom_call.1} parent=1 // pred_fallthru
      _
    // Predicated region
    $region46: #{tpu_custom_call.1} parent=1 // pred_check
      _
    $region47: #{tpu_custom_call.1} parent=1 // pred_check_branch
      %6349 = sbr.rel (0) target = $region49
    $region48: #{tpu_custom_call.1} parent=1 // pred_region
      %6351 = dma.done [#allocation4], 32
    $region49: #{tpu_custom_call.1} parent=1 // pred_fallthru
      _
    %6352 = vsyncpa [#allocation3], 1
    %6353 = vsyncpa [#allocation6], 1
    %6354 = vsyncpa [#allocation9], 1
    %6355 = vsyncpa [#allocation4], 1

</llo_original>
